<compile_context>
chip_gen: v7x
topology: tpu7x:2x2x1
jax: 0.10.0
libtpu: 0.0.40
codegen_flags: <defaults>
</compile_context>

<pallas_src>
import functools

import numpy as np
import jax
import jax.numpy as jnp
from jax.experimental import pallas as pl
from jax.experimental.pallas import tpu as pltpu


# ----------------------------------------------------------------------------
# Fused kernel.
#   x_ref   : (bt, H+2, kdim)      bf16  zero-padded input, lanes = (W+2)*Cin (padded)
#   t{0,1,2}: (kdim, W*Cmid)       bf16  block-Toeplitz conv weight, one per row-shift
#   b_ref   : (1, W*Cmid)          f32   conv bias tiled across the W output columns
#   s_ref   : (W*Cmid, Cmid)       f32   stacked-identity width-pooling matrix
#   fcw_ref : (Cmid, NP=128)       bf16  fc weight, lane-padded
#   fcb_ref : (1, NP)              f32   fc bias, lane-padded
#   o_ref   : (bt, NP)             f32   lane-dense logits slab (cols >= 10 are 0)
# ----------------------------------------------------------------------------
def fused_conv_gap_fc_kernel(x_ref, t0_ref, t1_ref, t2_ref, b_ref, s_ref,
                             fcw_ref, fcb_ref, o_ref, *, out_h, chunk_h, inv_hw):
    bt, _, kdim = x_ref.shape
    cmid = fcw_ref.shape[0]

    t0 = t0_ref[...]
    t1 = t1_ref[...]
    t2 = t2_ref[...]
    bias = b_ref[...]
    pool_mat = s_ref[...]

    n_chunks = out_h // chunk_h
    pooled = jnp.zeros((bt, cmid), jnp.float32)

    for c in range(n_chunks):
        r0 = c * chunk_h
        # Three row-shifted slabs (bf16, straight from the ref, no casts).
        m0 = x_ref[:, r0 + 0:r0 + 0 + chunk_h, :].reshape(bt * chunk_h, kdim)
        m1 = x_ref[:, r0 + 1:r0 + 1 + chunk_h, :].reshape(bt * chunk_h, kdim)
        m2 = x_ref[:, r0 + 2:r0 + 2 + chunk_h, :].reshape(bt * chunk_h, kdim)
        # Conv3x3 for this row-chunk: (kw, Cin) contraction folded into the MXU
        # via block-Toeplitz weights; output lanes are (j, co) pairs.
        acc = jnp.dot(m0, t0, preferred_element_type=jnp.float32)
        acc = acc + jnp.dot(m1, t1, preferred_element_type=jnp.float32)
        acc = acc + jnp.dot(m2, t2, preferred_element_type=jnp.float32)
        feats = jnp.maximum(acc + bias, 0.0)                       # bias + ReLU (f32)
        # Pool over the W output columns on the MXU (stacked identities), then
        # over the chunk rows; accumulate into the running pooled sum.
        pooled_c = jnp.dot(feats, pool_mat, preferred_element_type=jnp.float32)
        pooled = pooled + pooled_c.reshape(bt, chunk_h, cmid).sum(axis=1)

    pooled = pooled * inv_hw                                       # GAP mean
    logits = jnp.dot(pooled.astype(jnp.bfloat16), fcw_ref[...],
                     preferred_element_type=jnp.float32) + fcb_ref[...]
    o_ref[...] = logits                                            # (bt, 128) lane-dense


# ----------------------------------------------------------------------------
# Tiling heuristics.
# ----------------------------------------------------------------------------
def _batch_tile(batch, max_tile=32):
    """Largest multiple-of-8 divisor of `batch` <= max_tile, preferring >=2 grid
    steps (v7x megacore). Falls back to the whole batch in one block (correct,
    just unpipelined) when no such divisor exists."""
    for bt in range(min(max_tile, batch // 2), 7, -1):
        if batch % bt == 0 and bt % 8 == 0:
            return bt
    for bt in range(min(max_tile, batch), 7, -1):
        if batch % bt == 0 and bt % 8 == 0:
            return bt
    return batch


def _row_chunk(h, max_chunk=8):
    for ch in range(min(max_chunk, h), 0, -1):
        if h % ch == 0:
            return ch
    return h


def _round_up(x, m):
    return ((x + m - 1) // m) * m


# ----------------------------------------------------------------------------
# Parameter construction / packing (one-time, outside the jitted forward).
# ----------------------------------------------------------------------------
def init_params(key, cin=3, cmid=128, num_classes=10):
    k1, k2, k3, k4 = jax.random.split(key, 4)
    conv_w = jax.random.normal(k1, (3, 3, cin, cmid), jnp.float32) * 0.1
    conv_b = jax.random.normal(k2, (1, cmid), jnp.float32) * 0.01
    fc_w = jax.random.normal(k3, (cmid, num_classes), jnp.float32) * 0.1
    fc_b = jax.random.normal(k4, (1, num_classes), jnp.float32) * 0.01
    return {"conv_w": conv_w, "conv_b": conv_b, "fc_w": fc_w, "fc_b": fc_b}


def pack_params(params, H, W, lane_pad=128):
    """Pack weights into the kernel-ready block-Toeplitz / lane-dense form."""
    conv_w = np.asarray(params["conv_w"], np.float32)     # (3, 3, Cin, Cmid)
    conv_b = np.asarray(params["conv_b"], np.float32)     # (1, Cmid)
    fc_w = np.asarray(params["fc_w"], np.float32)         # (Cmid, num_classes)
    fc_b = np.asarray(params["fc_b"], np.float32)         # (1, num_classes)
    _, _, cin, cmid = conv_w.shape
    num_classes = fc_w.shape[1]
    kdim = _round_up((W + 2) * cin, 16)
    wcmid = W * cmid

    # One (kdim, W*Cmid) slab per kernel-row shift di:
    #   t[di, (j+dj)*Cin + c, j*Cmid + co] = conv_w[di, dj, c, co]
    t = np.zeros((3, kdim, wcmid), np.float32)
    for di in range(3):
        for dj in range(3):
            for j in range(W):
                col = j + dj
                t[di, col * cin:(col + 1) * cin, j * cmid:(j + 1) * cmid] = conv_w[di, dj]

    bias_row = np.tile(conv_b, (1, W))                               # (1, W*Cmid)
    pool_mat = np.tile(np.eye(cmid, dtype=np.float32), (W, 1))       # (W*Cmid, Cmid)

    fc_w_pad = np.zeros((cmid, lane_pad), np.float32)
    fc_w_pad[:, :num_classes] = fc_w
    fc_b_pad = np.zeros((1, lane_pad), np.float32)
    fc_b_pad[:, :num_classes] = fc_b

    return {
        "t0": jnp.asarray(t[0], jnp.bfloat16),
        "t1": jnp.asarray(t[1], jnp.bfloat16),
        "t2": jnp.asarray(t[2], jnp.bfloat16),
        "conv_b_row": jnp.asarray(bias_row, jnp.float32),
        "pool_mat": jnp.asarray(pool_mat, jnp.float32),
        "fc_w": jnp.asarray(fc_w_pad, jnp.bfloat16),
        "fc_b": jnp.asarray(fc_b_pad, jnp.float32),
    }


# ----------------------------------------------------------------------------
# Forward pass.
# ----------------------------------------------------------------------------
def cifar_classifier_forward(x_nchw, packed, num_classes=10):
    """x_nchw: [B, 3, H, W] float32 -> (logits [B,C], probs [B,C], labels [B])."""
    B, cin, H, W = x_nchw.shape
    kdim = packed["t0"].shape[0]
    wcmid = packed["t0"].shape[1]
    cmid = packed["fc_w"].shape[0]
    np_lanes = packed["fc_w"].shape[1]

    # NCHW -> NHWC glue, zero spatial pad, fold (W+2, Cin) into one contiguous
    # lane axis, zero-pad lanes to kdim, cast to bf16 (halves input DMA).
    x_nhwc = jnp.transpose(x_nchw, (0, 2, 3, 1))
    xpad = jnp.pad(x_nhwc, ((0, 0), (1, 1), (1, 1), (0, 0)))
    xflat = xpad.reshape(B, H + 2, (W + 2) * cin)
    xflat = jnp.pad(xflat, ((0, 0), (0, 0), (0, kdim - (W + 2) * cin)))
    xflat = xflat.astype(jnp.bfloat16)

    bt = _batch_tile(B)
    chunk_h = _row_chunk(H)
    grid = (B // bt,)

    kernel = functools.partial(fused_conv_gap_fc_kernel,
                               out_h=H, chunk_h=chunk_h, inv_hw=1.0 / (H * W))

    cost = pl.CostEstimate(
        flops=B * (6 * H * kdim * wcmid + 2 * H * wcmid * cmid + 2 * cmid * np_lanes),
        transcendentals=0,
        bytes_accessed=(B * (H + 2) * kdim * 2          # bf16 input
                        + 3 * kdim * wcmid * 2          # bf16 Toeplitz conv weights
                        + wcmid * 4                     # f32 bias row
                        + wcmid * cmid * 4              # f32 pooling matrix
                        + cmid * np_lanes * 2 + np_lanes * 4   # bf16 fc_w / f32 fc_b
                        + B * np_lanes * 4),            # f32 logits slab
    )

    logits_pad = pl.pallas_call(
        kernel,
        out_shape=jax.ShapeDtypeStruct((B, np_lanes), jnp.float32),
        grid=grid,
        in_specs=[
            pl.BlockSpec((bt, H + 2, kdim), lambda i: (i, 0, 0)),
            pl.BlockSpec((kdim, wcmid), lambda i: (0, 0)),
            pl.BlockSpec((kdim, wcmid), lambda i: (0, 0)),
            pl.BlockSpec((kdim, wcmid), lambda i: (0, 0)),
            pl.BlockSpec((1, wcmid), lambda i: (0, 0)),
            pl.BlockSpec((wcmid, cmid), lambda i: (0, 0)),
            pl.BlockSpec((cmid, np_lanes), lambda i: (0, 0)),
            pl.BlockSpec((1, np_lanes), lambda i: (0, 0)),
        ],
        out_specs=pl.BlockSpec((bt, np_lanes), lambda i: (i, 0)),
        compiler_params=pltpu.CompilerParams(
            dimension_semantics=("parallel",),
            vmem_limit_bytes=32 * 1024 * 1024,   # fits v5e/v6e/v7x scoped VMEM
        ),
        cost_estimate=cost,
    )(xflat, packed["t0"], packed["t1"], packed["t2"],
      packed["conv_b_row"], packed["pool_mat"], packed["fc_w"], packed["fc_b"])

    # Tiny epilogue on [B, 10] outside Pallas (as the perf review recommends).
    logits = logits_pad[:, :num_classes]
    probs = jax.nn.softmax(logits, axis=1)
    y_hat = jnp.argmax(logits, axis=1).astype(jnp.int32)
    return logits, probs, y_hat


# ----------------------------------------------------------------------------
# Pure-JAX reference of the same math (correctness check).
# ----------------------------------------------------------------------------
def _reference_forward(x_nchw, params, num_classes=10):
    B, cin, H, W = x_nchw.shape
    xp = jnp.pad(jnp.transpose(x_nchw, (0, 2, 3, 1)),
                 ((0, 0), (1, 1), (1, 1), (0, 0))).astype(jnp.bfloat16)
    w3 = params["conv_w"].astype(jnp.bfloat16)
    cmid = w3.shape[-1]
    acc = jnp.zeros((B * H * W, cmid), jnp.float32)
    for di in range(3):
        for dj in range(3):
            tap = xp[:, di:di + H, dj:dj + W, :].reshape(B * H * W, cin)
            acc = acc + jnp.dot(tap, w3[di, dj], preferred_element_type=jnp.float32)
    feats = jnp.maximum(acc + params["conv_b"], 0.0)
    pooled = feats.reshape(B, H * W, cmid).sum(axis=1) * (1.0 / (H * W))
    logits = jnp.dot(pooled.astype(jnp.bfloat16), params["fc_w"].astype(jnp.bfloat16),
                     preferred_element_type=jnp.float32) + params["fc_b"]
    logits = logits[:, :num_classes]
    probs = jax.nn.softmax(logits, axis=1)
    return logits, probs, jnp.argmax(logits, axis=1).astype(jnp.int32)


if __name__ == "__main__":
    key = jax.random.PRNGKey(0)
    kx, kp = jax.random.split(key)

    B, Cin, H, W = 2, 3, 16, 16            # [B, 3, H, W] like the torch module
    NUM_CLASSES = 10
    x = jax.random.normal(kx, (B, Cin, H, W), jnp.float32)
    params = init_params(kp, cin=Cin, cmid=128, num_classes=NUM_CLASSES)
    packed = pack_params(params, H, W)

    fwd = jax.jit(cifar_classifier_forward)
    logits, probs, labels = fwd(x, packed)
    jax.block_until_ready((logits, probs, labels))

    ref_logits, ref_probs, ref_labels = _reference_forward(x, params, NUM_CLASSES)
    assert logits.shape == (B, NUM_CLASSES)
    assert probs.shape == (B, NUM_CLASSES)
    assert labels.shape == (B,)
    assert jnp.allclose(logits, ref_logits, atol=1e-2, rtol=1e-2)
    assert jnp.allclose(probs, ref_probs, atol=1e-2, rtol=1e-2)
    assert jnp.array_equal(labels, ref_labels)
    print("KERNEL_OK")
</pallas_src>

<mosaic_0001>
module attributes {stable_mosaic.version = 11 : i64} {
  func.func @fused_conv_gap_fc_kernel(%arg0: i32, %arg1: memref<2x18x64xbf16, #tpu.memory_space<vmem>>, %arg2: memref<64x2048xbf16, #tpu.memory_space<vmem>>, %arg3: memref<64x2048xbf16, #tpu.memory_space<vmem>>, %arg4: memref<64x2048xbf16, #tpu.memory_space<vmem>>, %arg5: memref<1x2048xf32, #tpu.memory_space<vmem>>, %arg6: memref<2048x128xf32, #tpu.memory_space<vmem>>, %arg7: memref<128x128xbf16, #tpu.memory_space<vmem>>, %arg8: memref<1x128xf32, #tpu.memory_space<vmem>>, %arg9: memref<2x128xf32, #tpu.memory_space<vmem>>) attributes {dimension_semantics = [#tpu.dimension_semantics<parallel>], iteration_bounds = array<i64: 1>, scalar_prefetch = 0 : i64, scratch_operands = 0 : i64, tpu.core_type = #tpu.core_type<tc>, window_params = [{transform_indices = @transform_0, window_bounds = array<i64: 2, 18, 64>}, {pipeline_mode = #tpu.pipeline_mode<synchronous>, transform_indices = @transform_1, window_bounds = array<i64: 64, 2048>}, {pipeline_mode = #tpu.pipeline_mode<synchronous>, transform_indices = @transform_2, window_bounds = array<i64: 64, 2048>}, {pipeline_mode = #tpu.pipeline_mode<synchronous>, transform_indices = @transform_3, window_bounds = array<i64: 64, 2048>}, {pipeline_mode = #tpu.pipeline_mode<synchronous>, transform_indices = @transform_4, window_bounds = array<i64: 1, 2048>}, {pipeline_mode = #tpu.pipeline_mode<synchronous>, transform_indices = @transform_5, window_bounds = array<i64: 2048, 128>}, {pipeline_mode = #tpu.pipeline_mode<synchronous>, transform_indices = @transform_6, window_bounds = array<i64: 128, 128>}, {pipeline_mode = #tpu.pipeline_mode<synchronous>, transform_indices = @transform_7, window_bounds = array<i64: 1, 128>}, {transform_indices = @transform_8, window_bounds = array<i64: 2, 128>}]} {
    %c0 = arith.constant 0 : index
    %c0_0 = arith.constant 0 : index
    %0 = vector.load %arg2[%c0, %c0_0] : memref<64x2048xbf16, #tpu.memory_space<vmem>>, vector<64x2048xbf16>
    %c0_1 = arith.constant 0 : index
    %c0_2 = arith.constant 0 : index
    %1 = vector.load %arg3[%c0_1, %c0_2] : memref<64x2048xbf16, #tpu.memory_space<vmem>>, vector<64x2048xbf16>
    %c0_3 = arith.constant 0 : index
    %c0_4 = arith.constant 0 : index
    %2 = vector.load %arg4[%c0_3, %c0_4] : memref<64x2048xbf16, #tpu.memory_space<vmem>>, vector<64x2048xbf16>
    %c0_5 = arith.constant 0 : index
    %c0_6 = arith.constant 0 : index
    %3 = vector.load %arg5[%c0_5, %c0_6] : memref<1x2048xf32, #tpu.memory_space<vmem>>, vector<1x2048xf32>
    %c0_7 = arith.constant 0 : index
    %c0_8 = arith.constant 0 : index
    %4 = vector.load %arg6[%c0_7, %c0_8] : memref<2048x128xf32, #tpu.memory_space<vmem>>, vector<2048x128xf32>
    %cst = arith.constant 0.000000e+00 : f32
    %5 = vector.broadcast %cst : f32 to vector<2x128xf32>
    %c0_9 = arith.constant 0 : index
    %c0_10 = arith.constant 0 : index
    %c0_11 = arith.constant 0 : index
    %6 = vector.load %arg1[%c0_9, %c0_10, %c0_11] : memref<2x18x64xbf16, #tpu.memory_space<vmem>>, vector<2x8x64xbf16>
    %7 = vector.shape_cast %6 : vector<2x8x64xbf16> to vector<16x64xbf16>
    %c0_12 = arith.constant 0 : index
    %c1 = arith.constant 1 : index
    %c0_13 = arith.constant 0 : index
    %8 = vector.load %arg1[%c0_12, %c1, %c0_13] : memref<2x18x64xbf16, #tpu.memory_space<vmem>>, vector<2x8x64xbf16>
    %9 = vector.shape_cast %8 : vector<2x8x64xbf16> to vector<16x64xbf16>
    %c0_14 = arith.constant 0 : index
    %c2 = arith.constant 2 : index
    %c0_15 = arith.constant 0 : index
    %10 = vector.load %arg1[%c0_14, %c2, %c0_15] : memref<2x18x64xbf16, #tpu.memory_space<vmem>>, vector<2x8x64xbf16>
    %11 = vector.shape_cast %10 : vector<2x8x64xbf16> to vector<16x64xbf16>
    %cst_16 = arith.constant dense<0.000000e+00> : vector<16x2048xf32>
    %12 = tpu.matmul %7, %0, %cst_16 {dimension_numbers = #tpu.dot_dimension_numbers<[1], [0], [0], [1], [0, 0, 1, 1], [], []>} : vector<16x64xbf16>, vector<64x2048xbf16>, vector<16x2048xf32> -> vector<16x2048xf32>
    %cst_17 = arith.constant dense<0.000000e+00> : vector<16x2048xf32>
    %13 = tpu.matmul %9, %1, %cst_17 {dimension_numbers = #tpu.dot_dimension_numbers<[1], [0], [0], [1], [0, 0, 1, 1], [], []>} : vector<16x64xbf16>, vector<64x2048xbf16>, vector<16x2048xf32> -> vector<16x2048xf32>
    %14 = arith.addf %12, %13 : vector<16x2048xf32>
    %cst_18 = arith.constant dense<0.000000e+00> : vector<16x2048xf32>
    %15 = tpu.matmul %11, %2, %cst_18 {dimension_numbers = #tpu.dot_dimension_numbers<[1], [0], [0], [1], [0, 0, 1, 1], [], []>} : vector<16x64xbf16>, vector<64x2048xbf16>, vector<16x2048xf32> -> vector<16x2048xf32>
    %16 = arith.addf %14, %15 : vector<16x2048xf32>
    %17 = vector.broadcast %3 : vector<1x2048xf32> to vector<16x2048xf32>
    %18 = arith.addf %16, %17 : vector<16x2048xf32>
    %cst_19 = arith.constant 0.000000e+00 : f32
    %19 = vector.broadcast %cst_19 : f32 to vector<16x2048xf32>
    %20 = arith.maximumf %18, %19 : vector<16x2048xf32>
    %cst_20 = arith.constant dense<0.000000e+00> : vector<16x128xf32>
    %21 = tpu.matmul %20, %4, %cst_20 {dimension_numbers = #tpu.dot_dimension_numbers<[1], [0], [0], [1], [0, 0, 1, 1], [], []>} : vector<16x2048xf32>, vector<2048x128xf32>, vector<16x128xf32> -> vector<16x128xf32>
    %22 = vector.shape_cast %21 : vector<16x128xf32> to vector<2x8x128xf32>
    %cst_21 = arith.constant dense<0.000000e+00> : vector<2x128xf32>
    %23 = vector.multi_reduction <add>, %22, %cst_21 [1] : vector<2x8x128xf32> to vector<2x128xf32>
    %24 = arith.addf %5, %23 : vector<2x128xf32>
    %c0_22 = arith.constant 0 : index
    %c8 = arith.constant 8 : index
    %c0_23 = arith.constant 0 : index
    %25 = vector.load %arg1[%c0_22, %c8, %c0_23] : memref<2x18x64xbf16, #tpu.memory_space<vmem>>, vector<2x8x64xbf16>
    %26 = vector.shape_cast %25 : vector<2x8x64xbf16> to vector<16x64xbf16>
    %c0_24 = arith.constant 0 : index
    %c9 = arith.constant 9 : index
    %c0_25 = arith.constant 0 : index
    %27 = vector.load %arg1[%c0_24, %c9, %c0_25] : memref<2x18x64xbf16, #tpu.memory_space<vmem>>, vector<2x8x64xbf16>
    %28 = vector.shape_cast %27 : vector<2x8x64xbf16> to vector<16x64xbf16>
    %c0_26 = arith.constant 0 : index
    %c10 = arith.constant 10 : index
    %c0_27 = arith.constant 0 : index
    %29 = vector.load %arg1[%c0_26, %c10, %c0_27] : memref<2x18x64xbf16, #tpu.memory_space<vmem>>, vector<2x8x64xbf16>
    %30 = vector.shape_cast %29 : vector<2x8x64xbf16> to vector<16x64xbf16>
    %cst_28 = arith.constant dense<0.000000e+00> : vector<16x2048xf32>
    %31 = tpu.matmul %26, %0, %cst_28 {dimension_numbers = #tpu.dot_dimension_numbers<[1], [0], [0], [1], [0, 0, 1, 1], [], []>} : vector<16x64xbf16>, vector<64x2048xbf16>, vector<16x2048xf32> -> vector<16x2048xf32>
    %cst_29 = arith.constant dense<0.000000e+00> : vector<16x2048xf32>
    %32 = tpu.matmul %28, %1, %cst_29 {dimension_numbers = #tpu.dot_dimension_numbers<[1], [0], [0], [1], [0, 0, 1, 1], [], []>} : vector<16x64xbf16>, vector<64x2048xbf16>, vector<16x2048xf32> -> vector<16x2048xf32>
    %33 = arith.addf %31, %32 : vector<16x2048xf32>
    %cst_30 = arith.constant dense<0.000000e+00> : vector<16x2048xf32>
    %34 = tpu.matmul %30, %2, %cst_30 {dimension_numbers = #tpu.dot_dimension_numbers<[1], [0], [0], [1], [0, 0, 1, 1], [], []>} : vector<16x64xbf16>, vector<64x2048xbf16>, vector<16x2048xf32> -> vector<16x2048xf32>
    %35 = arith.addf %33, %34 : vector<16x2048xf32>
    %36 = vector.broadcast %3 : vector<1x2048xf32> to vector<16x2048xf32>
    %37 = arith.addf %35, %36 : vector<16x2048xf32>
    %cst_31 = arith.constant 0.000000e+00 : f32
    %38 = vector.broadcast %cst_31 : f32 to vector<16x2048xf32>
    %39 = arith.maximumf %37, %38 : vector<16x2048xf32>
    %cst_32 = arith.constant dense<0.000000e+00> : vector<16x128xf32>
    %40 = tpu.matmul %39, %4, %cst_32 {dimension_numbers = #tpu.dot_dimension_numbers<[1], [0], [0], [1], [0, 0, 1, 1], [], []>} : vector<16x2048xf32>, vector<2048x128xf32>, vector<16x128xf32> -> vector<16x128xf32>
    %41 = vector.shape_cast %40 : vector<16x128xf32> to vector<2x8x128xf32>
    %cst_33 = arith.constant dense<0.000000e+00> : vector<2x128xf32>
    %42 = vector.multi_reduction <add>, %41, %cst_33 [1] : vector<2x8x128xf32> to vector<2x128xf32>
    %43 = arith.addf %24, %42 : vector<2x128xf32>
    %cst_34 = arith.constant 3.906250e-03 : f32
    %44 = vector.broadcast %cst_34 : f32 to vector<2x128xf32>
    %45 = arith.mulf %43, %44 : vector<2x128xf32>
    %46 = arith.truncf %45 : vector<2x128xf32> to vector<2x128xbf16>
    %c0_35 = arith.constant 0 : index
    %c0_36 = arith.constant 0 : index
    %47 = vector.load %arg7[%c0_35, %c0_36] : memref<128x128xbf16, #tpu.memory_space<vmem>>, vector<128x128xbf16>
    %cst_37 = arith.constant dense<0.000000e+00> : vector<2x128xf32>
    %48 = tpu.matmul %46, %47, %cst_37 {dimension_numbers = #tpu.dot_dimension_numbers<[1], [0], [0], [1], [0, 0, 1, 1], [], []>} : vector<2x128xbf16>, vector<128x128xbf16>, vector<2x128xf32> -> vector<2x128xf32>
    %c0_38 = arith.constant 0 : index
    %c0_39 = arith.constant 0 : index
    %49 = vector.load %arg8[%c0_38, %c0_39] : memref<1x128xf32, #tpu.memory_space<vmem>>, vector<1x128xf32>
    %50 = vector.broadcast %49 : vector<1x128xf32> to vector<2x128xf32>
    %51 = arith.addf %48, %50 : vector<2x128xf32>
    %c0_40 = arith.constant 0 : index
    %c0_41 = arith.constant 0 : index
    %52 = vector.load %arg9[%c0_40, %c0_41] : memref<2x128xf32, #tpu.memory_space<vmem>>, vector<2x128xf32>
    tpu.vector_store %arg9[%c0_40, %c0_41], %51 {strides = array<i32>} : memref<2x128xf32, #tpu.memory_space<vmem>>, vector<2x128xf32>,
    return
  }
  func.func @transform_0(%arg0: i32) -> (i32, i32, i32) {
    %c0_i32 = arith.constant 0 : i32
    %c0_i32_0 = arith.constant 0 : i32
    %c0_i32_1 = arith.constant 0 : i32
    return %arg0, %c0_i32, %c0_i32_0 : i32, i32, i32
  }
  func.func @transform_1(%arg0: i32) -> (i32, i32) {
    %c0_i32 = arith.constant 0 : i32
    %c0_i32_0 = arith.constant 0 : i32
    %c0_i32_1 = arith.constant 0 : i32
    return %c0_i32, %c0_i32_0 : i32, i32
  }
  func.func @transform_2(%arg0: i32) -> (i32, i32) {
    %c0_i32 = arith.constant 0 : i32
    %c0_i32_0 = arith.constant 0 : i32
    %c0_i32_1 = arith.constant 0 : i32
    return %c0_i32, %c0_i32_0 : i32, i32
  }
  func.func @transform_3(%arg0: i32) -> (i32, i32) {
    %c0_i32 = arith.constant 0 : i32
    %c0_i32_0 = arith.constant 0 : i32
    %c0_i32_1 = arith.constant 0 : i32
    return %c0_i32, %c0_i32_0 : i32, i32
  }
  func.func @transform_4(%arg0: i32) -> (i32, i32) {
    %c0_i32 = arith.constant 0 : i32
    %c0_i32_0 = arith.constant 0 : i32
    %c0_i32_1 = arith.constant 0 : i32
    return %c0_i32, %c0_i32_0 : i32, i32
  }
  func.func @transform_5(%arg0: i32) -> (i32, i32) {
    %c0_i32 = arith.constant 0 : i32
    %c0_i32_0 = arith.constant 0 : i32
    %c0_i32_1 = arith.constant 0 : i32
    return %c0_i32, %c0_i32_0 : i32, i32
  }
  func.func @transform_6(%arg0: i32) -> (i32, i32) {
    %c0_i32 = arith.constant 0 : i32
    %c0_i32_0 = arith.constant 0 : i32
    %c0_i32_1 = arith.constant 0 : i32
    return %c0_i32, %c0_i32_0 : i32, i32
  }
  func.func @transform_7(%arg0: i32) -> (i32, i32) {
    %c0_i32 = arith.constant 0 : i32
    %c0_i32_0 = arith.constant 0 : i32
    %c0_i32_1 = arith.constant 0 : i32
    return %c0_i32, %c0_i32_0 : i32, i32
  }
  func.func @transform_8(%arg0: i32) -> (i32, i32) {
    %c0_i32 = arith.constant 0 : i32
    %c0_i32_0 = arith.constant 0 : i32
    return %arg0, %c0_i32 : i32, i32
  }
}

</mosaic_0001>

<llo_original>
// kernel: cifar_classifier_forward.1
$region0: #{cifar_classifier_forward.1}
  #allocation0 [shape = 'u32[]', space=smem, size = 0x4, offset = 0x4, fixed_abs, tag = 'smem constant byte address 0x4 - core index']
  #allocation1 [shape = 'u32[144,128]{1,0:T(1,128)}', space=vmem, size = 0x12000, scoped, tag = 'internal scratch']
  %s0 = inlined_call_operand.vmem [shape: bf16[2,18,64], index: 0, kind: input, shape index: {}]
  %s1 = inlined_call_operand.hbm [shape: bf16[64,2048], index: 1, kind: input, shape index: {}]
  %s2 = inlined_call_operand.hbm [shape: bf16[64,2048], index: 2, kind: input, shape index: {}]
  %s3 = inlined_call_operand.hbm [shape: bf16[64,2048], index: 3, kind: input, shape index: {}]
  %s4 = inlined_call_operand.vmem [shape: f32[1,2048], index: 4, kind: input, shape index: {}]
  %s5 = inlined_call_operand.hbm [shape: f32[2048,128], index: 5, kind: input, shape index: {}]
  %s6 = inlined_call_operand.vmem [shape: bf16[128,128], index: 6, kind: input, shape index: {}]
  %s7 = inlined_call_operand.vmem [shape: f32[1,128], index: 7, kind: input, shape index: {}]
  %s8 = inlined_call_operand.vmem [shape: f32[2,128], index: 8, kind: output, shape index: {}]
  %s9 = sld [smem:[#allocation0]]
  $region58: #{cifar_classifier_forward.1} parent=0
    _
  %s11 = ssub.s32 1, %s9
  %s12 = scalar_select 0, %s11, %s9
  $region1: #{cifar_classifier_forward.1} parent=0
    #allocation2 [shape = 'u8[262144]{0}', space=vmem, size = 0x40000, scoped, tag = 'input window, operand 1, single buffered']
    #allocation3 [shape = 's32[1]{0}', space=sflag, size = 0x4, scoped, tag = 'scoped memory for cifar_classifier_forward.1']
    #allocation4 [shape = 'u8[262144]{0}', space=vmem, size = 0x40000, scoped, tag = 'input window, operand 2, single buffered']
    #allocation5 [shape = 's32[1]{0}', space=sflag, size = 0x4, scoped, tag = 'scoped memory for cifar_classifier_forward.1']
    #allocation6 [shape = 'u8[262144]{0}', space=vmem, size = 0x40000, scoped, tag = 'input window, operand 3, single buffered']
    #allocation7 [shape = 'u8[1048576]{0}', space=vmem, size = 0x100000, scoped, tag = 'input window, operand 5, single buffered']
    #allocation8 [shape = 's32[1]{0}', space=sflag, size = 0x4, scoped, tag = 'scoped memory for cifar_classifier_forward.1']
    %13 = vsyncpa [#allocation3], 0
    %14 = vsyncpa [#allocation5], 0
    %15 = vsyncpa [#allocation8], 0
    // Predicated region
    $region2: #{cifar_classifier_forward.1} parent=1 // pred_check
      _
    $region3: #{cifar_classifier_forward.1} parent=1 // pred_check_branch
      %17 = sbr.rel (0) target = $region5
    $region4: #{cifar_classifier_forward.1} parent=1 // pred_region
      _
    $region5: #{cifar_classifier_forward.1} parent=1 // pred_fallthru
      _
    // Predicated region
    $region6: #{cifar_classifier_forward.1} parent=1 // pred_check
      _
    $region7: #{cifar_classifier_forward.1} parent=1 // pred_check_branch
      %19 = sbr.rel (0) target = $region9
    $region8: #{cifar_classifier_forward.1} parent=1 // pred_region
      %s21 = ssub.s32 8192, 8192
      %22 = vsyncadd [#allocation3], %s21
      %s23 = sshll.u32 [#allocation2], 4
      %s24 = int_to_ptr.vmem [resolvable:$true] %s23
      %29 = dma.hbm_to_vmem [thread:$0]  %s1, 8192, %s24, [#allocation3], 1024, 1024, 64
    $region9: #{cifar_classifier_forward.1} parent=1 // pred_fallthru
      _
    // Predicated region
    $region10: #{cifar_classifier_forward.1} parent=1 // pred_check
      _
    $region11: #{cifar_classifier_forward.1} parent=1 // pred_check_branch
      %31 = sbr.rel (0) target = $region13
    $region12: #{cifar_classifier_forward.1} parent=1 // pred_region
      %s33 = ssub.s32 8192, 8192
      %34 = vsyncadd [#allocation5], %s33
      %s35 = sshll.u32 [#allocation4], 4
      %s36 = int_to_ptr.vmem [resolvable:$true] %s35
      %41 = dma.hbm_to_vmem [thread:$0]  %s2, 8192, %s36, [#allocation5], 1024, 1024, 64
    $region13: #{cifar_classifier_forward.1} parent=1 // pred_fallthru
      _
    // Predicated region
    $region14: #{cifar_classifier_forward.1} parent=1 // pred_check
      _
    $region15: #{cifar_classifier_forward.1} parent=1 // pred_check_branch
      %43 = sbr.rel (0) target = $region17
    $region16: #{cifar_classifier_forward.1} parent=1 // pred_region
      %s45 = ssub.s32 8192, 8192
      %46 = vsyncadd [#allocation5], %s45
      %s47 = sshll.u32 [#allocation6], 4
      %s48 = int_to_ptr.vmem [resolvable:$true] %s47
      %53 = dma.hbm_to_vmem [thread:$0]  %s3, 8192, %s48, [#allocation5], 1024, 1024, 64
    $region17: #{cifar_classifier_forward.1} parent=1 // pred_fallthru
      _
    // Predicated region
    $region18: #{cifar_classifier_forward.1} parent=1 // pred_check
      _
    $region19: #{cifar_classifier_forward.1} parent=1 // pred_check_branch
      %55 = sbr.rel (0) target = $region21
    $region20: #{cifar_classifier_forward.1} parent=1 // pred_region
      _
    $region21: #{cifar_classifier_forward.1} parent=1 // pred_fallthru
      _
    // Predicated region
    $region22: #{cifar_classifier_forward.1} parent=1 // pred_check
      _
    $region23: #{cifar_classifier_forward.1} parent=1 // pred_check_branch
      %57 = sbr.rel (0) target = $region25
    $region24: #{cifar_classifier_forward.1} parent=1 // pred_region
      %s59 = ssub.s32 32768, 32768
      %60 = vsyncadd [#allocation8], %s59
      %s61 = sshll.u32 [#allocation7], 4
      %s62 = int_to_ptr.vmem [resolvable:$true] %s61
      %67 = dma.hbm_to_vmem [thread:$0]  %s5, 32768, %s62, [#allocation8], 128, 128, 8
    $region25: #{cifar_classifier_forward.1} parent=1 // pred_fallthru
      _
    // Predicated region
    $region26: #{cifar_classifier_forward.1} parent=1 // pred_check
      _
    $region27: #{cifar_classifier_forward.1} parent=1 // pred_check_branch
      %69 = sbr.rel (0) target = $region29
    $region28: #{cifar_classifier_forward.1} parent=1 // pred_region
      _
    $region29: #{cifar_classifier_forward.1} parent=1 // pred_fallthru
      _
    // Predicated region
    $region30: #{cifar_classifier_forward.1} parent=1 // pred_check
      _
    $region31: #{cifar_classifier_forward.1} parent=1 // pred_check_branch
      %71 = sbr.rel (0) target = $region33
    $region32: #{cifar_classifier_forward.1} parent=1 // pred_region
      _
    $region33: #{cifar_classifier_forward.1} parent=1 // pred_fallthru
      _
    // Predicated region
    $region34: #{cifar_classifier_forward.1} parent=1 // pred_check
      _
    $region35: #{cifar_classifier_forward.1} parent=1 // pred_check_branch
      %73 = sbr.rel (0) target = $region37
    $region36: #{cifar_classifier_forward.1} parent=1 // pred_region
      %74 = dma.done [#allocation3], 8192
    $region37: #{cifar_classifier_forward.1} parent=1 // pred_fallthru
      _
    // Predicated region
    $region38: #{cifar_classifier_forward.1} parent=1 // pred_check
      _
    $region39: #{cifar_classifier_forward.1} parent=1 // pred_check_branch
      %76 = sbr.rel (0) target = $region41
    $region40: #{cifar_classifier_forward.1} parent=1 // pred_region
      %77 = dma.done [#allocation5], 8192
    $region41: #{cifar_classifier_forward.1} parent=1 // pred_fallthru
      _
    // Predicated region
    $region42: #{cifar_classifier_forward.1} parent=1 // pred_check
      _
    $region43: #{cifar_classifier_forward.1} parent=1 // pred_check_branch
      %79 = sbr.rel (0) target = $region45
    $region44: #{cifar_classifier_forward.1} parent=1 // pred_region
      %80 = dma.done [#allocation5], 8192
    $region45: #{cifar_classifier_forward.1} parent=1 // pred_fallthru
      _
    // Predicated region
    $region46: #{cifar_classifier_forward.1} parent=1 // pred_check
      _
    $region47: #{cifar_classifier_forward.1} parent=1 // pred_check_branch
      %82 = sbr.rel (0) target = $region49
    $region48: #{cifar_classifier_forward.1} parent=1 // pred_region
      %83 = dma.done [#allocation8], 32768
    $region49: #{cifar_classifier_forward.1} parent=1 // pred_fallthru
      _
    %v85 = vld [vmem:[#allocation2] sm:$0xff]
    %v86 = vld [vmem:[#allocation2 + $0x8] sm:$0xff]
    %v87 = vld [vmem:[#allocation2 + $0x10] sm:$0xff]
    %v88 = vld [vmem:[#allocation2 + $0x18] sm:$0xff]
    %v89 = vld [vmem:[#allocation2 + $0x20] sm:$0xff]
    %v90 = vld [vmem:[#allocation2 + $0x28] sm:$0xff]
    %v91 = vld [vmem:[#allocation2 + $0x30] sm:$0xff]
    %v92 = vld [vmem:[#allocation2 + $0x38] sm:$0xff]
    %v93 = vld [vmem:[#allocation2 + $0x40] sm:$0xff]
    %v94 = vld [vmem:[#allocation2 + $0x48] sm:$0xff]
    %v95 = vld [vmem:[#allocation2 + $0x50] sm:$0xff]
    %v96 = vld [vmem:[#allocation2 + $0x58] sm:$0xff]
    %v97 = vld [vmem:[#allocation2 + $0x60] sm:$0xff]
    %v98 = vld [vmem:[#allocation2 + $0x68] sm:$0xff]
    %v99 = vld [vmem:[#allocation2 + $0x70] sm:$0xff]
    %v100 = vld [vmem:[#allocation2 + $0x78] sm:$0xff]
    %v101 = vld [vmem:[#allocation2 + $0x80] sm:$0xff]
    %v102 = vld [vmem:[#allocation2 + $0x88] sm:$0xff]
    %v103 = vld [vmem:[#allocation2 + $0x90] sm:$0xff]
    %v104 = vld [vmem:[#allocation2 + $0x98] sm:$0xff]
    %v105 = vld [vmem:[#allocation2 + $0xa0] sm:$0xff]
    %v106 = vld [vmem:[#allocation2 + $0xa8] sm:$0xff]
    %v107 = vld [vmem:[#allocation2 + $0xb0] sm:$0xff]
    %v108 = vld [vmem:[#allocation2 + $0xb8] sm:$0xff]
    %v109 = vld [vmem:[#allocation2 + $0xc0] sm:$0xff]
    %v110 = vld [vmem:[#allocation2 + $0xc8] sm:$0xff]
    %v111 = vld [vmem:[#allocation2 + $0xd0] sm:$0xff]
    %v112 = vld [vmem:[#allocation2 + $0xd8] sm:$0xff]
    %v113 = vld [vmem:[#allocation2 + $0xe0] sm:$0xff]
    %v114 = vld [vmem:[#allocation2 + $0xe8] sm:$0xff]
    %v115 = vld [vmem:[#allocation2 + $0xf0] sm:$0xff]
    %v116 = vld [vmem:[#allocation2 + $0xf8] sm:$0xff]
    %v117 = vld [vmem:[#allocation2 + $0x100] sm:$0xff]
    %v118 = vld [vmem:[#allocation2 + $0x108] sm:$0xff]
    %v119 = vld [vmem:[#allocation2 + $0x110] sm:$0xff]
    %v120 = vld [vmem:[#allocation2 + $0x118] sm:$0xff]
    %v121 = vld [vmem:[#allocation2 + $0x120] sm:$0xff]
    %v122 = vld [vmem:[#allocation2 + $0x128] sm:$0xff]
    %v123 = vld [vmem:[#allocation2 + $0x130] sm:$0xff]
    %v124 = vld [vmem:[#allocation2 + $0x138] sm:$0xff]
    %v125 = vld [vmem:[#allocation2 + $0x140] sm:$0xff]
    %v126 = vld [vmem:[#allocation2 + $0x148] sm:$0xff]
    %v127 = vld [vmem:[#allocation2 + $0x150] sm:$0xff]
    %v128 = vld [vmem:[#allocation2 + $0x158] sm:$0xff]
    %v129 = vld [vmem:[#allocation2 + $0x160] sm:$0xff]
    %v130 = vld [vmem:[#allocation2 + $0x168] sm:$0xff]
    %v131 = vld [vmem:[#allocation2 + $0x170] sm:$0xff]
    %v132 = vld [vmem:[#allocation2 + $0x178] sm:$0xff]
    %v133 = vld [vmem:[#allocation2 + $0x180] sm:$0xff]
    %v134 = vld [vmem:[#allocation2 + $0x188] sm:$0xff]
    %v135 = vld [vmem:[#allocation2 + $0x190] sm:$0xff]
    %v136 = vld [vmem:[#allocation2 + $0x198] sm:$0xff]
    %v137 = vld [vmem:[#allocation2 + $0x1a0] sm:$0xff]
    %v138 = vld [vmem:[#allocation2 + $0x1a8] sm:$0xff]
    %v139 = vld [vmem:[#allocation2 + $0x1b0] sm:$0xff]
    %v140 = vld [vmem:[#allocation2 + $0x1b8] sm:$0xff]
    %v141 = vld [vmem:[#allocation2 + $0x1c0] sm:$0xff]
    %v142 = vld [vmem:[#allocation2 + $0x1c8] sm:$0xff]
    %v143 = vld [vmem:[#allocation2 + $0x1d0] sm:$0xff]
    %v144 = vld [vmem:[#allocation2 + $0x1d8] sm:$0xff]
    %v145 = vld [vmem:[#allocation2 + $0x1e0] sm:$0xff]
    %v146 = vld [vmem:[#allocation2 + $0x1e8] sm:$0xff]
    %v147 = vld [vmem:[#allocation2 + $0x1f0] sm:$0xff]
    %v148 = vld [vmem:[#allocation2 + $0x1f8] sm:$0xff]
    %v149 = vld [vmem:[#allocation4] sm:$0xff]
    %v150 = vld [vmem:[#allocation4 + $0x8] sm:$0xff]
    %v151 = vld [vmem:[#allocation4 + $0x10] sm:$0xff]
    %v152 = vld [vmem:[#allocation4 + $0x18] sm:$0xff]
    %v153 = vld [vmem:[#allocation4 + $0x20] sm:$0xff]
    %v154 = vld [vmem:[#allocation4 + $0x28] sm:$0xff]
    %v155 = vld [vmem:[#allocation4 + $0x30] sm:$0xff]
    %v156 = vld [vmem:[#allocation4 + $0x38] sm:$0xff]
    %v157 = vld [vmem:[#allocation4 + $0x40] sm:$0xff]
    %v158 = vld [vmem:[#allocation4 + $0x48] sm:$0xff]
    %v159 = vld [vmem:[#allocation4 + $0x50] sm:$0xff]
    %v160 = vld [vmem:[#allocation4 + $0x58] sm:$0xff]
    %v161 = vld [vmem:[#allocation4 + $0x60] sm:$0xff]
    %v162 = vld [vmem:[#allocation4 + $0x68] sm:$0xff]
    %v163 = vld [vmem:[#allocation4 + $0x70] sm:$0xff]
    %v164 = vld [vmem:[#allocation4 + $0x78] sm:$0xff]
    %v165 = vld [vmem:[#allocation4 + $0x80] sm:$0xff]
    %v166 = vld [vmem:[#allocation4 + $0x88] sm:$0xff]
    %v167 = vld [vmem:[#allocation4 + $0x90] sm:$0xff]
    %v168 = vld [vmem:[#allocation4 + $0x98] sm:$0xff]
    %v169 = vld [vmem:[#allocation4 + $0xa0] sm:$0xff]
    %v170 = vld [vmem:[#allocation4 + $0xa8] sm:$0xff]
    %v171 = vld [vmem:[#allocation4 + $0xb0] sm:$0xff]
    %v172 = vld [vmem:[#allocation4 + $0xb8] sm:$0xff]
    %v173 = vld [vmem:[#allocation4 + $0xc0] sm:$0xff]
    %v174 = vld [vmem:[#allocation4 + $0xc8] sm:$0xff]
    %v175 = vld [vmem:[#allocation4 + $0xd0] sm:$0xff]
    %v176 = vld [vmem:[#allocation4 + $0xd8] sm:$0xff]
    %v177 = vld [vmem:[#allocation4 + $0xe0] sm:$0xff]
    %v178 = vld [vmem:[#allocation4 + $0xe8] sm:$0xff]
    %v179 = vld [vmem:[#allocation4 + $0xf0] sm:$0xff]
    %v180 = vld [vmem:[#allocation4 + $0xf8] sm:$0xff]
    %v181 = vld [vmem:[#allocation4 + $0x100] sm:$0xff]
    %v182 = vld [vmem:[#allocation4 + $0x108] sm:$0xff]
    %v183 = vld [vmem:[#allocation4 + $0x110] sm:$0xff]
    %v184 = vld [vmem:[#allocation4 + $0x118] sm:$0xff]
    %v185 = vld [vmem:[#allocation4 + $0x120] sm:$0xff]
    %v186 = vld [vmem:[#allocation4 + $0x128] sm:$0xff]
    %v187 = vld [vmem:[#allocation4 + $0x130] sm:$0xff]
    %v188 = vld [vmem:[#allocation4 + $0x138] sm:$0xff]
    %v189 = vld [vmem:[#allocation4 + $0x140] sm:$0xff]
    %v190 = vld [vmem:[#allocation4 + $0x148] sm:$0xff]
    %v191 = vld [vmem:[#allocation4 + $0x150] sm:$0xff]
    %v192 = vld [vmem:[#allocation4 + $0x158] sm:$0xff]
    %v193 = vld [vmem:[#allocation4 + $0x160] sm:$0xff]
    %v194 = vld [vmem:[#allocation4 + $0x168] sm:$0xff]
    %v195 = vld [vmem:[#allocation4 + $0x170] sm:$0xff]
    %v196 = vld [vmem:[#allocation4 + $0x178] sm:$0xff]
    %v197 = vld [vmem:[#allocation4 + $0x180] sm:$0xff]
    %v198 = vld [vmem:[#allocation4 + $0x188] sm:$0xff]
    %v199 = vld [vmem:[#allocation4 + $0x190] sm:$0xff]
    %v200 = vld [vmem:[#allocation4 + $0x198] sm:$0xff]
    %v201 = vld [vmem:[#allocation4 + $0x1a0] sm:$0xff]
    %v202 = vld [vmem:[#allocation4 + $0x1a8] sm:$0xff]
    %v203 = vld [vmem:[#allocation4 + $0x1b0] sm:$0xff]
    %v204 = vld [vmem:[#allocation4 + $0x1b8] sm:$0xff]
    %v205 = vld [vmem:[#allocation4 + $0x1c0] sm:$0xff]
    %v206 = vld [vmem:[#allocation4 + $0x1c8] sm:$0xff]
    %v207 = vld [vmem:[#allocation4 + $0x1d0] sm:$0xff]
    %v208 = vld [vmem:[#allocation4 + $0x1d8] sm:$0xff]
    %v209 = vld [vmem:[#allocation4 + $0x1e0] sm:$0xff]
    %v210 = vld [vmem:[#allocation4 + $0x1e8] sm:$0xff]
    %v211 = vld [vmem:[#allocation4 + $0x1f0] sm:$0xff]
    %v212 = vld [vmem:[#allocation4 + $0x1f8] sm:$0xff]
    %v213 = vld [vmem:[#allocation6] sm:$0xff]
    %v214 = vld [vmem:[#allocation6 + $0x8] sm:$0xff]
    %v215 = vld [vmem:[#allocation6 + $0x10] sm:$0xff]
    %v216 = vld [vmem:[#allocation6 + $0x18] sm:$0xff]
    %v217 = vld [vmem:[#allocation6 + $0x20] sm:$0xff]
    %v218 = vld [vmem:[#allocation6 + $0x28] sm:$0xff]
    %v219 = vld [vmem:[#allocation6 + $0x30] sm:$0xff]
    %v220 = vld [vmem:[#allocation6 + $0x38] sm:$0xff]
    %v221 = vld [vmem:[#allocation6 + $0x40] sm:$0xff]
    %v222 = vld [vmem:[#allocation6 + $0x48] sm:$0xff]
    %v223 = vld [vmem:[#allocation6 + $0x50] sm:$0xff]
    %v224 = vld [vmem:[#allocation6 + $0x58] sm:$0xff]
    %v225 = vld [vmem:[#allocation6 + $0x60] sm:$0xff]
    %v226 = vld [vmem:[#allocation6 + $0x68] sm:$0xff]
    %v227 = vld [vmem:[#allocation6 + $0x70] sm:$0xff]
    %v228 = vld [vmem:[#allocation6 + $0x78] sm:$0xff]
    %v229 = vld [vmem:[#allocation6 + $0x80] sm:$0xff]
    %v230 = vld [vmem:[#allocation6 + $0x88] sm:$0xff]
    %v231 = vld [vmem:[#allocation6 + $0x90] sm:$0xff]
    %v232 = vld [vmem:[#allocation6 + $0x98] sm:$0xff]
    %v233 = vld [vmem:[#allocation6 + $0xa0] sm:$0xff]
    %v234 = vld [vmem:[#allocation6 + $0xa8] sm:$0xff]
    %v235 = vld [vmem:[#allocation6 + $0xb0] sm:$0xff]
    %v236 = vld [vmem:[#allocation6 + $0xb8] sm:$0xff]
    %v237 = vld [vmem:[#allocation6 + $0xc0] sm:$0xff]
    %v238 = vld [vmem:[#allocation6 + $0xc8] sm:$0xff]
    %v239 = vld [vmem:[#allocation6 + $0xd0] sm:$0xff]
    %v240 = vld [vmem:[#allocation6 + $0xd8] sm:$0xff]
    %v241 = vld [vmem:[#allocation6 + $0xe0] sm:$0xff]
    %v242 = vld [vmem:[#allocation6 + $0xe8] sm:$0xff]
    %v243 = vld [vmem:[#allocation6 + $0xf0] sm:$0xff]
    %v244 = vld [vmem:[#allocation6 + $0xf8] sm:$0xff]
    %v245 = vld [vmem:[#allocation6 + $0x100] sm:$0xff]
    %v246 = vld [vmem:[#allocation6 + $0x108] sm:$0xff]
    %v247 = vld [vmem:[#allocation6 + $0x110] sm:$0xff]
    %v248 = vld [vmem:[#allocation6 + $0x118] sm:$0xff]
    %v249 = vld [vmem:[#allocation6 + $0x120] sm:$0xff]
    %v250 = vld [vmem:[#allocation6 + $0x128] sm:$0xff]
    %v251 = vld [vmem:[#allocation6 + $0x130] sm:$0xff]
    %v252 = vld [vmem:[#allocation6 + $0x138] sm:$0xff]
    %v253 = vld [vmem:[#allocation6 + $0x140] sm:$0xff]
    %v254 = vld [vmem:[#allocation6 + $0x148] sm:$0xff]
    %v255 = vld [vmem:[#allocation6 + $0x150] sm:$0xff]
    %v256 = vld [vmem:[#allocation6 + $0x158] sm:$0xff]
    %v257 = vld [vmem:[#allocation6 + $0x160] sm:$0xff]
    %v258 = vld [vmem:[#allocation6 + $0x168] sm:$0xff]
    %v259 = vld [vmem:[#allocation6 + $0x170] sm:$0xff]
    %v260 = vld [vmem:[#allocation6 + $0x178] sm:$0xff]
    %v261 = vld [vmem:[#allocation6 + $0x180] sm:$0xff]
    %v262 = vld [vmem:[#allocation6 + $0x188] sm:$0xff]
    %v263 = vld [vmem:[#allocation6 + $0x190] sm:$0xff]
    %v264 = vld [vmem:[#allocation6 + $0x198] sm:$0xff]
    %v265 = vld [vmem:[#allocation6 + $0x1a0] sm:$0xff]
    %v266 = vld [vmem:[#allocation6 + $0x1a8] sm:$0xff]
    %v267 = vld [vmem:[#allocation6 + $0x1b0] sm:$0xff]
    %v268 = vld [vmem:[#allocation6 + $0x1b8] sm:$0xff]
    %v269 = vld [vmem:[#allocation6 + $0x1c0] sm:$0xff]
    %v270 = vld [vmem:[#allocation6 + $0x1c8] sm:$0xff]
    %v271 = vld [vmem:[#allocation6 + $0x1d0] sm:$0xff]
    %v272 = vld [vmem:[#allocation6 + $0x1d8] sm:$0xff]
    %v273 = vld [vmem:[#allocation6 + $0x1e0] sm:$0xff]
    %v274 = vld [vmem:[#allocation6 + $0x1e8] sm:$0xff]
    %v275 = vld [vmem:[#allocation6 + $0x1f0] sm:$0xff]
    %v276 = vld [vmem:[#allocation6 + $0x1f8] sm:$0xff]
    %v277 = vld [vmem:[%s4] sm:$0xff]
    %v278 = vld [vmem:[%s4 + $0x8] sm:$0xff]
    %v279 = vld [vmem:[#allocation7] sm:$0xff]
    %v280 = vld [vmem:[#allocation7 + $0x8] sm:$0xff]
    %v281 = vld [vmem:[#allocation7 + $0x10] sm:$0xff]
    %v282 = vld [vmem:[#allocation7 + $0x18] sm:$0xff]
    %v283 = vld [vmem:[#allocation7 + $0x20] sm:$0xff]
    %v284 = vld [vmem:[#allocation7 + $0x28] sm:$0xff]
    %v285 = vld [vmem:[#allocation7 + $0x30] sm:$0xff]
    %v286 = vld [vmem:[#allocation7 + $0x38] sm:$0xff]
    %v287 = vld [vmem:[#allocation7 + $0x40] sm:$0xff]
    %v288 = vld [vmem:[#allocation7 + $0x48] sm:$0xff]
    %v289 = vld [vmem:[#allocation7 + $0x50] sm:$0xff]
    %v290 = vld [vmem:[#allocation7 + $0x58] sm:$0xff]
    %v291 = vld [vmem:[#allocation7 + $0x60] sm:$0xff]
    %v292 = vld [vmem:[#allocation7 + $0x68] sm:$0xff]
    %v293 = vld [vmem:[#allocation7 + $0x70] sm:$0xff]
    %v294 = vld [vmem:[#allocation7 + $0x78] sm:$0xff]
    %v295 = vld [vmem:[#allocation7 + $0x80] sm:$0xff]
    %v296 = vld [vmem:[#allocation7 + $0x88] sm:$0xff]
    %v297 = vld [vmem:[#allocation7 + $0x90] sm:$0xff]
    %v298 = vld [vmem:[#allocation7 + $0x98] sm:$0xff]
    %v299 = vld [vmem:[#allocation7 + $0xa0] sm:$0xff]
    %v300 = vld [vmem:[#allocation7 + $0xa8] sm:$0xff]
    %v301 = vld [vmem:[#allocation7 + $0xb0] sm:$0xff]
    %v302 = vld [vmem:[#allocation7 + $0xb8] sm:$0xff]
    %v303 = vld [vmem:[#allocation7 + $0xc0] sm:$0xff]
    %v304 = vld [vmem:[#allocation7 + $0xc8] sm:$0xff]
    %v305 = vld [vmem:[#allocation7 + $0xd0] sm:$0xff]
    %v306 = vld [vmem:[#allocation7 + $0xd8] sm:$0xff]
    %v307 = vld [vmem:[#allocation7 + $0xe0] sm:$0xff]
    %v308 = vld [vmem:[#allocation7 + $0xe8] sm:$0xff]
    %v309 = vld [vmem:[#allocation7 + $0xf0] sm:$0xff]
    %v310 = vld [vmem:[#allocation7 + $0xf8] sm:$0xff]
    %v311 = vld [vmem:[#allocation7 + $0x100] sm:$0xff]
    %v312 = vld [vmem:[#allocation7 + $0x108] sm:$0xff]
    %v313 = vld [vmem:[#allocation7 + $0x110] sm:$0xff]
    %v314 = vld [vmem:[#allocation7 + $0x118] sm:$0xff]
    %v315 = vld [vmem:[#allocation7 + $0x120] sm:$0xff]
    %v316 = vld [vmem:[#allocation7 + $0x128] sm:$0xff]
    %v317 = vld [vmem:[#allocation7 + $0x130] sm:$0xff]
    %v318 = vld [vmem:[#allocation7 + $0x138] sm:$0xff]
    %v319 = vld [vmem:[#allocation7 + $0x140] sm:$0xff]
    %v320 = vld [vmem:[#allocation7 + $0x148] sm:$0xff]
    %v321 = vld [vmem:[#allocation7 + $0x150] sm:$0xff]
    %v322 = vld [vmem:[#allocation7 + $0x158] sm:$0xff]
    %v323 = vld [vmem:[#allocation7 + $0x160] sm:$0xff]
    %v324 = vld [vmem:[#allocation7 + $0x168] sm:$0xff]
    %v325 = vld [vmem:[#allocation7 + $0x170] sm:$0xff]
    %v326 = vld [vmem:[#allocation7 + $0x178] sm:$0xff]
    %v327 = vld [vmem:[#allocation7 + $0x180] sm:$0xff]
    %v328 = vld [vmem:[#allocation7 + $0x188] sm:$0xff]
    %v329 = vld [vmem:[#allocation7 + $0x190] sm:$0xff]
    %v330 = vld [vmem:[#allocation7 + $0x198] sm:$0xff]
    %v331 = vld [vmem:[#allocation7 + $0x1a0] sm:$0xff]
    %v332 = vld [vmem:[#allocation7 + $0x1a8] sm:$0xff]
    %v333 = vld [vmem:[#allocation7 + $0x1b0] sm:$0xff]
    %v334 = vld [vmem:[#allocation7 + $0x1b8] sm:$0xff]
    %v335 = vld [vmem:[#allocation7 + $0x1c0] sm:$0xff]
    %v336 = vld [vmem:[#allocation7 + $0x1c8] sm:$0xff]
    %v337 = vld [vmem:[#allocation7 + $0x1d0] sm:$0xff]
    %v338 = vld [vmem:[#allocation7 + $0x1d8] sm:$0xff]
    %v339 = vld [vmem:[#allocation7 + $0x1e0] sm:$0xff]
    %v340 = vld [vmem:[#allocation7 + $0x1e8] sm:$0xff]
    %v341 = vld [vmem:[#allocation7 + $0x1f0] sm:$0xff]
    %v342 = vld [vmem:[#allocation7 + $0x1f8] sm:$0xff]
    %v343 = vld [vmem:[#allocation7 + $0x200] sm:$0xff]
    %v344 = vld [vmem:[#allocation7 + $0x208] sm:$0xff]
    %v345 = vld [vmem:[#allocation7 + $0x210] sm:$0xff]
    %v346 = vld [vmem:[#allocation7 + $0x218] sm:$0xff]
    %v347 = vld [vmem:[#allocation7 + $0x220] sm:$0xff]
    %v348 = vld [vmem:[#allocation7 + $0x228] sm:$0xff]
    %v349 = vld [vmem:[#allocation7 + $0x230] sm:$0xff]
    %v350 = vld [vmem:[#allocation7 + $0x238] sm:$0xff]
    %v351 = vld [vmem:[#allocation7 + $0x240] sm:$0xff]
    %v352 = vld [vmem:[#allocation7 + $0x248] sm:$0xff]
    %v353 = vld [vmem:[#allocation7 + $0x250] sm:$0xff]
    %v354 = vld [vmem:[#allocation7 + $0x258] sm:$0xff]
    %v355 = vld [vmem:[#allocation7 + $0x260] sm:$0xff]
    %v356 = vld [vmem:[#allocation7 + $0x268] sm:$0xff]
    %v357 = vld [vmem:[#allocation7 + $0x270] sm:$0xff]
    %v358 = vld [vmem:[#allocation7 + $0x278] sm:$0xff]
    %v359 = vld [vmem:[#allocation7 + $0x280] sm:$0xff]
    %v360 = vld [vmem:[#allocation7 + $0x288] sm:$0xff]
    %v361 = vld [vmem:[#allocation7 + $0x290] sm:$0xff]
    %v362 = vld [vmem:[#allocation7 + $0x298] sm:$0xff]
    %v363 = vld [vmem:[#allocation7 + $0x2a0] sm:$0xff]
    %v364 = vld [vmem:[#allocation7 + $0x2a8] sm:$0xff]
    %v365 = vld [vmem:[#allocation7 + $0x2b0] sm:$0xff]
    %v366 = vld [vmem:[#allocation7 + $0x2b8] sm:$0xff]
    %v367 = vld [vmem:[#allocation7 + $0x2c0] sm:$0xff]
    %v368 = vld [vmem:[#allocation7 + $0x2c8] sm:$0xff]
    %v369 = vld [vmem:[#allocation7 + $0x2d0] sm:$0xff]
    %v370 = vld [vmem:[#allocation7 + $0x2d8] sm:$0xff]
    %v371 = vld [vmem:[#allocation7 + $0x2e0] sm:$0xff]
    %v372 = vld [vmem:[#allocation7 + $0x2e8] sm:$0xff]
    %v373 = vld [vmem:[#allocation7 + $0x2f0] sm:$0xff]
    %v374 = vld [vmem:[#allocation7 + $0x2f8] sm:$0xff]
    %v375 = vld [vmem:[#allocation7 + $0x300] sm:$0xff]
    %v376 = vld [vmem:[#allocation7 + $0x308] sm:$0xff]
    %v377 = vld [vmem:[#allocation7 + $0x310] sm:$0xff]
    %v378 = vld [vmem:[#allocation7 + $0x318] sm:$0xff]
    %v379 = vld [vmem:[#allocation7 + $0x320] sm:$0xff]
    %v380 = vld [vmem:[#allocation7 + $0x328] sm:$0xff]
    %v381 = vld [vmem:[#allocation7 + $0x330] sm:$0xff]
    %v382 = vld [vmem:[#allocation7 + $0x338] sm:$0xff]
    %v383 = vld [vmem:[#allocation7 + $0x340] sm:$0xff]
    %v384 = vld [vmem:[#allocation7 + $0x348] sm:$0xff]
    %v385 = vld [vmem:[#allocation7 + $0x350] sm:$0xff]
    %v386 = vld [vmem:[#allocation7 + $0x358] sm:$0xff]
    %v387 = vld [vmem:[#allocation7 + $0x360] sm:$0xff]
    %v388 = vld [vmem:[#allocation7 + $0x368] sm:$0xff]
    %v389 = vld [vmem:[#allocation7 + $0x370] sm:$0xff]
    %v390 = vld [vmem:[#allocation7 + $0x378] sm:$0xff]
    %v391 = vld [vmem:[#allocation7 + $0x380] sm:$0xff]
    %v392 = vld [vmem:[#allocation7 + $0x388] sm:$0xff]
    %v393 = vld [vmem:[#allocation7 + $0x390] sm:$0xff]
    %v394 = vld [vmem:[#allocation7 + $0x398] sm:$0xff]
    %v395 = vld [vmem:[#allocation7 + $0x3a0] sm:$0xff]
    %v396 = vld [vmem:[#allocation7 + $0x3a8] sm:$0xff]
    %v397 = vld [vmem:[#allocation7 + $0x3b0] sm:$0xff]
    %v398 = vld [vmem:[#allocation7 + $0x3b8] sm:$0xff]
    %v399 = vld [vmem:[#allocation7 + $0x3c0] sm:$0xff]
    %v400 = vld [vmem:[#allocation7 + $0x3c8] sm:$0xff]
    %v401 = vld [vmem:[#allocation7 + $0x3d0] sm:$0xff]
    %v402 = vld [vmem:[#allocation7 + $0x3d8] sm:$0xff]
    %v403 = vld [vmem:[#allocation7 + $0x3e0] sm:$0xff]
    %v404 = vld [vmem:[#allocation7 + $0x3e8] sm:$0xff]
    %v405 = vld [vmem:[#allocation7 + $0x3f0] sm:$0xff]
    %v406 = vld [vmem:[#allocation7 + $0x3f8] sm:$0xff]
    %v407 = vld [vmem:[#allocation7 + $0x400] sm:$0xff]
    %v408 = vld [vmem:[#allocation7 + $0x408] sm:$0xff]
    %v409 = vld [vmem:[#allocation7 + $0x410] sm:$0xff]
    %v410 = vld [vmem:[#allocation7 + $0x418] sm:$0xff]
    %v411 = vld [vmem:[#allocation7 + $0x420] sm:$0xff]
    %v412 = vld [vmem:[#allocation7 + $0x428] sm:$0xff]
    %v413 = vld [vmem:[#allocation7 + $0x430] sm:$0xff]
    %v414 = vld [vmem:[#allocation7 + $0x438] sm:$0xff]
    %v415 = vld [vmem:[#allocation7 + $0x440] sm:$0xff]
    %v416 = vld [vmem:[#allocation7 + $0x448] sm:$0xff]
    %v417 = vld [vmem:[#allocation7 + $0x450] sm:$0xff]
    %v418 = vld [vmem:[#allocation7 + $0x458] sm:$0xff]
    %v419 = vld [vmem:[#allocation7 + $0x460] sm:$0xff]
    %v420 = vld [vmem:[#allocation7 + $0x468] sm:$0xff]
    %v421 = vld [vmem:[#allocation7 + $0x470] sm:$0xff]
    %v422 = vld [vmem:[#allocation7 + $0x478] sm:$0xff]
    %v423 = vld [vmem:[#allocation7 + $0x480] sm:$0xff]
    %v424 = vld [vmem:[#allocation7 + $0x488] sm:$0xff]
    %v425 = vld [vmem:[#allocation7 + $0x490] sm:$0xff]
    %v426 = vld [vmem:[#allocation7 + $0x498] sm:$0xff]
    %v427 = vld [vmem:[#allocation7 + $0x4a0] sm:$0xff]
    %v428 = vld [vmem:[#allocation7 + $0x4a8] sm:$0xff]
    %v429 = vld [vmem:[#allocation7 + $0x4b0] sm:$0xff]
    %v430 = vld [vmem:[#allocation7 + $0x4b8] sm:$0xff]
    %v431 = vld [vmem:[#allocation7 + $0x4c0] sm:$0xff]
    %v432 = vld [vmem:[#allocation7 + $0x4c8] sm:$0xff]
    %v433 = vld [vmem:[#allocation7 + $0x4d0] sm:$0xff]
    %v434 = vld [vmem:[#allocation7 + $0x4d8] sm:$0xff]
    %v435 = vld [vmem:[#allocation7 + $0x4e0] sm:$0xff]
    %v436 = vld [vmem:[#allocation7 + $0x4e8] sm:$0xff]
    %v437 = vld [vmem:[#allocation7 + $0x4f0] sm:$0xff]
    %v438 = vld [vmem:[#allocation7 + $0x4f8] sm:$0xff]
    %v439 = vld [vmem:[#allocation7 + $0x500] sm:$0xff]
    %v440 = vld [vmem:[#allocation7 + $0x508] sm:$0xff]
    %v441 = vld [vmem:[#allocation7 + $0x510] sm:$0xff]
    %v442 = vld [vmem:[#allocation7 + $0x518] sm:$0xff]
    %v443 = vld [vmem:[#allocation7 + $0x520] sm:$0xff]
    %v444 = vld [vmem:[#allocation7 + $0x528] sm:$0xff]
    %v445 = vld [vmem:[#allocation7 + $0x530] sm:$0xff]
    %v446 = vld [vmem:[#allocation7 + $0x538] sm:$0xff]
    %v447 = vld [vmem:[#allocation7 + $0x540] sm:$0xff]
    %v448 = vld [vmem:[#allocation7 + $0x548] sm:$0xff]
    %v449 = vld [vmem:[#allocation7 + $0x550] sm:$0xff]
    %v450 = vld [vmem:[#allocation7 + $0x558] sm:$0xff]
    %v451 = vld [vmem:[#allocation7 + $0x560] sm:$0xff]
    %v452 = vld [vmem:[#allocation7 + $0x568] sm:$0xff]
    %v453 = vld [vmem:[#allocation7 + $0x570] sm:$0xff]
    %v454 = vld [vmem:[#allocation7 + $0x578] sm:$0xff]
    %v455 = vld [vmem:[#allocation7 + $0x580] sm:$0xff]
    %v456 = vld [vmem:[#allocation7 + $0x588] sm:$0xff]
    %v457 = vld [vmem:[#allocation7 + $0x590] sm:$0xff]
    %v458 = vld [vmem:[#allocation7 + $0x598] sm:$0xff]
    %v459 = vld [vmem:[#allocation7 + $0x5a0] sm:$0xff]
    %v460 = vld [vmem:[#allocation7 + $0x5a8] sm:$0xff]
    %v461 = vld [vmem:[#allocation7 + $0x5b0] sm:$0xff]
    %v462 = vld [vmem:[#allocation7 + $0x5b8] sm:$0xff]
    %v463 = vld [vmem:[#allocation7 + $0x5c0] sm:$0xff]
    %v464 = vld [vmem:[#allocation7 + $0x5c8] sm:$0xff]
    %v465 = vld [vmem:[#allocation7 + $0x5d0] sm:$0xff]
    %v466 = vld [vmem:[#allocation7 + $0x5d8] sm:$0xff]
    %v467 = vld [vmem:[#allocation7 + $0x5e0] sm:$0xff]
    %v468 = vld [vmem:[#allocation7 + $0x5e8] sm:$0xff]
    %v469 = vld [vmem:[#allocation7 + $0x5f0] sm:$0xff]
    %v470 = vld [vmem:[#allocation7 + $0x5f8] sm:$0xff]
    %v471 = vld [vmem:[#allocation7 + $0x600] sm:$0xff]
    %v472 = vld [vmem:[#allocation7 + $0x608] sm:$0xff]
    %v473 = vld [vmem:[#allocation7 + $0x610] sm:$0xff]
    %v474 = vld [vmem:[#allocation7 + $0x618] sm:$0xff]
    %v475 = vld [vmem:[#allocation7 + $0x620] sm:$0xff]
    %v476 = vld [vmem:[#allocation7 + $0x628] sm:$0xff]
    %v477 = vld [vmem:[#allocation7 + $0x630] sm:$0xff]
    %v478 = vld [vmem:[#allocation7 + $0x638] sm:$0xff]
    %v479 = vld [vmem:[#allocation7 + $0x640] sm:$0xff]
    %v480 = vld [vmem:[#allocation7 + $0x648] sm:$0xff]
    %v481 = vld [vmem:[#allocation7 + $0x650] sm:$0xff]
    %v482 = vld [vmem:[#allocation7 + $0x658] sm:$0xff]
    %v483 = vld [vmem:[#allocation7 + $0x660] sm:$0xff]
    %v484 = vld [vmem:[#allocation7 + $0x668] sm:$0xff]
    %v485 = vld [vmem:[#allocation7 + $0x670] sm:$0xff]
    %v486 = vld [vmem:[#allocation7 + $0x678] sm:$0xff]
    %v487 = vld [vmem:[#allocation7 + $0x680] sm:$0xff]
    %v488 = vld [vmem:[#allocation7 + $0x688] sm:$0xff]
    %v489 = vld [vmem:[#allocation7 + $0x690] sm:$0xff]
    %v490 = vld [vmem:[#allocation7 + $0x698] sm:$0xff]
    %v491 = vld [vmem:[#allocation7 + $0x6a0] sm:$0xff]
    %v492 = vld [vmem:[#allocation7 + $0x6a8] sm:$0xff]
    %v493 = vld [vmem:[#allocation7 + $0x6b0] sm:$0xff]
    %v494 = vld [vmem:[#allocation7 + $0x6b8] sm:$0xff]
    %v495 = vld [vmem:[#allocation7 + $0x6c0] sm:$0xff]
    %v496 = vld [vmem:[#allocation7 + $0x6c8] sm:$0xff]
    %v497 = vld [vmem:[#allocation7 + $0x6d0] sm:$0xff]
    %v498 = vld [vmem:[#allocation7 + $0x6d8] sm:$0xff]
    %v499 = vld [vmem:[#allocation7 + $0x6e0] sm:$0xff]
    %v500 = vld [vmem:[#allocation7 + $0x6e8] sm:$0xff]
    %v501 = vld [vmem:[#allocation7 + $0x6f0] sm:$0xff]
    %v502 = vld [vmem:[#allocation7 + $0x6f8] sm:$0xff]
    %v503 = vld [vmem:[#allocation7 + $0x700] sm:$0xff]
    %v504 = vld [vmem:[#allocation7 + $0x708] sm:$0xff]
    %v505 = vld [vmem:[#allocation7 + $0x710] sm:$0xff]
    %v506 = vld [vmem:[#allocation7 + $0x718] sm:$0xff]
    %v507 = vld [vmem:[#allocation7 + $0x720] sm:$0xff]
    %v508 = vld [vmem:[#allocation7 + $0x728] sm:$0xff]
    %v509 = vld [vmem:[#allocation7 + $0x730] sm:$0xff]
    %v510 = vld [vmem:[#allocation7 + $0x738] sm:$0xff]
    %v511 = vld [vmem:[#allocation7 + $0x740] sm:$0xff]
    %v512 = vld [vmem:[#allocation7 + $0x748] sm:$0xff]
    %v513 = vld [vmem:[#allocation7 + $0x750] sm:$0xff]
    %v514 = vld [vmem:[#allocation7 + $0x758] sm:$0xff]
    %v515 = vld [vmem:[#allocation7 + $0x760] sm:$0xff]
    %v516 = vld [vmem:[#allocation7 + $0x768] sm:$0xff]
    %v517 = vld [vmem:[#allocation7 + $0x770] sm:$0xff]
    %v518 = vld [vmem:[#allocation7 + $0x778] sm:$0xff]
    %v519 = vld [vmem:[#allocation7 + $0x780] sm:$0xff]
    %v520 = vld [vmem:[#allocation7 + $0x788] sm:$0xff]
    %v521 = vld [vmem:[#allocation7 + $0x790] sm:$0xff]
    %v522 = vld [vmem:[#allocation7 + $0x798] sm:$0xff]
    %v523 = vld [vmem:[#allocation7 + $0x7a0] sm:$0xff]
    %v524 = vld [vmem:[#allocation7 + $0x7a8] sm:$0xff]
    %v525 = vld [vmem:[#allocation7 + $0x7b0] sm:$0xff]
    %v526 = vld [vmem:[#allocation7 + $0x7b8] sm:$0xff]
    %v527 = vld [vmem:[#allocation7 + $0x7c0] sm:$0xff]
    %v528 = vld [vmem:[#allocation7 + $0x7c8] sm:$0xff]
    %v529 = vld [vmem:[#allocation7 + $0x7d0] sm:$0xff]
    %v530 = vld [vmem:[#allocation7 + $0x7d8] sm:$0xff]
    %v531 = vld [vmem:[#allocation7 + $0x7e0] sm:$0xff]
    %v532 = vld [vmem:[#allocation7 + $0x7e8] sm:$0xff]
    %v533 = vld [vmem:[#allocation7 + $0x7f0] sm:$0xff]
    %v534 = vld [vmem:[#allocation7 + $0x7f8] sm:$0xff]
    %v535 = vld [vmem:[%s0] sm:$0xf]
    %v536 = vld [vmem:[%s0 + $0xc] sm:$0xf]
    %v537 = vld [vmem:[%s0 + $0x4] sm:$0x1]
    %v538 = vld [vmem:[%s0 + $0x10] sm:$0x1]
    %vm539 = vsmask.f32 3328
    %vm540 = vsmask.f32 7440
    %vm541 = vmor %vm539, %vm540
    %v543 = vshrl.u32 %v535, 16
    %v545 = vrot.slane %v543, 4
    %v546 = vshll.u32 %v535, 16
    %v548 = vrot.slane %v546, 5
    %v549 = vor.u32 %v545, %v548
    %v550 = vrot.slane %v549, 4
    %v552 = vshll.u32 %v537, 16
    %v554 = vrot.slane %v552, 5
    %v555 = vsel %vm541, %v550, %v554
    %v557 = vshrl.u32 %v536, 16
    %v559 = vrot.slane %v557, 4
    %v560 = vshll.u32 %v536, 16
    %v562 = vrot.slane %v560, 5
    %v563 = vor.u32 %v559, %v562
    %v564 = vrot.slane %v563, 4
    %v566 = vshll.u32 %v538, 16
    %v568 = vrot.slane %v566, 5
    %v569 = vsel %vm541, %v564, %v568
    %v570 = vld [vmem:[%s0] sm:$0xe]
    %v571 = vld [vmem:[%s0 + $0xc] sm:$0xe]
    %vm576 = vcmask 1042432
    %vm577 = vcmask 1046532
    %vm578 = vmor %vm576, %vm577
    %v579 = vrot.slane %v570, 5
    %v580 = vrot.slane %v579, 4
    %v581 = vrot.slane %v537, 5
    %v582 = vsel %vm578, %v580, %v581
    %v583 = vrot.slane %v571, 5
    %v584 = vrot.slane %v583, 4
    %v585 = vrot.slane %v538, 5
    %v586 = vsel %vm578, %v584, %v585
    %v587 = vunpack.c.l.b16 %v555
    %v588 = vunpack.c.l.b16 %v569
    %v589 = vpack.c.b16 %v588, %v587
    %v654 = vunpack.c.l.b16 %v149
    %v655 = vunpack.c.h.b16 %v149
    %v656 = vunpack.c.l.b16 %v150
    %v657 = vunpack.c.h.b16 %v150
    %v658 = vunpack.c.l.b16 %v151
    %v659 = vunpack.c.h.b16 %v151
    %v660 = vunpack.c.l.b16 %v152
    %v661 = vunpack.c.h.b16 %v152
    %v662 = vunpack.c.l.b16 %v153
    %v663 = vunpack.c.h.b16 %v153
    %v664 = vunpack.c.l.b16 %v154
    %v665 = vunpack.c.h.b16 %v154
    %v666 = vunpack.c.l.b16 %v155
    %v667 = vunpack.c.h.b16 %v155
    %v668 = vunpack.c.l.b16 %v156
    %v669 = vunpack.c.h.b16 %v156
    %v670 = vunpack.c.l.b16 %v157
    %v671 = vunpack.c.h.b16 %v157
    %v672 = vunpack.c.l.b16 %v158
    %v673 = vunpack.c.h.b16 %v158
    %v674 = vunpack.c.l.b16 %v159
    %v675 = vunpack.c.h.b16 %v159
    %v676 = vunpack.c.l.b16 %v160
    %v677 = vunpack.c.h.b16 %v160
    %v678 = vunpack.c.l.b16 %v161
    %v679 = vunpack.c.h.b16 %v161
    %v680 = vunpack.c.l.b16 %v162
    %v681 = vunpack.c.h.b16 %v162
    %v682 = vunpack.c.l.b16 %v163
    %v683 = vunpack.c.h.b16 %v163
    %v684 = vunpack.c.l.b16 %v164
    %v685 = vunpack.c.h.b16 %v164
    %v686 = vunpack.c.l.b16 %v165
    %v687 = vunpack.c.h.b16 %v165
    %v688 = vunpack.c.l.b16 %v166
    %v689 = vunpack.c.h.b16 %v166
    %v690 = vunpack.c.l.b16 %v167
    %v691 = vunpack.c.h.b16 %v167
    %v692 = vunpack.c.l.b16 %v168
    %v693 = vunpack.c.h.b16 %v168
    %v694 = vunpack.c.l.b16 %v169
    %v695 = vunpack.c.h.b16 %v169
    %v696 = vunpack.c.l.b16 %v170
    %v697 = vunpack.c.h.b16 %v170
    %v698 = vunpack.c.l.b16 %v171
    %v699 = vunpack.c.h.b16 %v171
    %v700 = vunpack.c.l.b16 %v172
    %v701 = vunpack.c.h.b16 %v172
    %v702 = vunpack.c.l.b16 %v173
    %v703 = vunpack.c.h.b16 %v173
    %v704 = vunpack.c.l.b16 %v174
    %v705 = vunpack.c.h.b16 %v174
    %v706 = vunpack.c.l.b16 %v175
    %v707 = vunpack.c.h.b16 %v175
    %v708 = vunpack.c.l.b16 %v176
    %v709 = vunpack.c.h.b16 %v176
    %v710 = vunpack.c.l.b16 %v177
    %v711 = vunpack.c.h.b16 %v177
    %v712 = vunpack.c.l.b16 %v178
    %v713 = vunpack.c.h.b16 %v178
    %v714 = vunpack.c.l.b16 %v179
    %v715 = vunpack.c.h.b16 %v179
    %v716 = vunpack.c.l.b16 %v180
    %v717 = vunpack.c.h.b16 %v180
    %v718 = vunpack.c.l.b16 %v181
    %v719 = vunpack.c.h.b16 %v181
    %v720 = vunpack.c.l.b16 %v182
    %v721 = vunpack.c.h.b16 %v182
    %v722 = vunpack.c.l.b16 %v183
    %v723 = vunpack.c.h.b16 %v183
    %v724 = vunpack.c.l.b16 %v184
    %v725 = vunpack.c.h.b16 %v184
    %v726 = vunpack.c.l.b16 %v185
    %v727 = vunpack.c.h.b16 %v185
    %v728 = vunpack.c.l.b16 %v186
    %v729 = vunpack.c.h.b16 %v186
    %v730 = vunpack.c.l.b16 %v187
    %v731 = vunpack.c.h.b16 %v187
    %v732 = vunpack.c.l.b16 %v188
    %v733 = vunpack.c.h.b16 %v188
    %v734 = vunpack.c.l.b16 %v189
    %v735 = vunpack.c.h.b16 %v189
    %v736 = vunpack.c.l.b16 %v190
    %v737 = vunpack.c.h.b16 %v190
    %v738 = vunpack.c.l.b16 %v191
    %v739 = vunpack.c.h.b16 %v191
    %v740 = vunpack.c.l.b16 %v192
    %v741 = vunpack.c.h.b16 %v192
    %v742 = vunpack.c.l.b16 %v193
    %v743 = vunpack.c.h.b16 %v193
    %v744 = vunpack.c.l.b16 %v194
    %v745 = vunpack.c.h.b16 %v194
    %v746 = vunpack.c.l.b16 %v195
    %v747 = vunpack.c.h.b16 %v195
    %v748 = vunpack.c.l.b16 %v196
    %v749 = vunpack.c.h.b16 %v196
    %v750 = vunpack.c.l.b16 %v197
    %v751 = vunpack.c.h.b16 %v197
    %v752 = vunpack.c.l.b16 %v198
    %v753 = vunpack.c.h.b16 %v198
    %v754 = vunpack.c.l.b16 %v199
    %v755 = vunpack.c.h.b16 %v199
    %v756 = vunpack.c.l.b16 %v200
    %v757 = vunpack.c.h.b16 %v200
    %v758 = vunpack.c.l.b16 %v201
    %v759 = vunpack.c.h.b16 %v201
    %v760 = vunpack.c.l.b16 %v202
    %v761 = vunpack.c.h.b16 %v202
    %v762 = vunpack.c.l.b16 %v203
    %v763 = vunpack.c.h.b16 %v203
    %v764 = vunpack.c.l.b16 %v204
    %v765 = vunpack.c.h.b16 %v204
    %v766 = vunpack.c.l.b16 %v205
    %v767 = vunpack.c.h.b16 %v205
    %v768 = vunpack.c.l.b16 %v206
    %v769 = vunpack.c.h.b16 %v206
    %v770 = vunpack.c.l.b16 %v207
    %v771 = vunpack.c.h.b16 %v207
    %v772 = vunpack.c.l.b16 %v208
    %v773 = vunpack.c.h.b16 %v208
    %v774 = vunpack.c.l.b16 %v209
    %v775 = vunpack.c.h.b16 %v209
    %v776 = vunpack.c.l.b16 %v210
    %v777 = vunpack.c.h.b16 %v210
    %v778 = vunpack.c.l.b16 %v211
    %v779 = vunpack.c.h.b16 %v211
    %v780 = vunpack.c.l.b16 %v212
    %v781 = vunpack.c.h.b16 %v212
    %v782 = vpack.c.b16 %v670, %v654
    %v783 = vpack.c.b16 %v671, %v655
    %v784 = vpack.c.b16 %v672, %v656
    %v785 = vpack.c.b16 %v673, %v657
    %v786 = vpack.c.b16 %v674, %v658
    %v787 = vpack.c.b16 %v675, %v659
    %v788 = vpack.c.b16 %v676, %v660
    %v789 = vpack.c.b16 %v677, %v661
    %v790 = vpack.c.b16 %v678, %v662
    %v791 = vpack.c.b16 %v679, %v663
    %v792 = vpack.c.b16 %v680, %v664
    %v793 = vpack.c.b16 %v681, %v665
    %v794 = vpack.c.b16 %v682, %v666
    %v795 = vpack.c.b16 %v683, %v667
    %v796 = vpack.c.b16 %v684, %v668
    %v797 = vpack.c.b16 %v685, %v669
    %v798 = vpack.c.b16 %v702, %v686
    %v799 = vpack.c.b16 %v703, %v687
    %v800 = vpack.c.b16 %v704, %v688
    %v801 = vpack.c.b16 %v705, %v689
    %v802 = vpack.c.b16 %v706, %v690
    %v803 = vpack.c.b16 %v707, %v691
    %v804 = vpack.c.b16 %v708, %v692
    %v805 = vpack.c.b16 %v709, %v693
    %v806 = vpack.c.b16 %v710, %v694
    %v807 = vpack.c.b16 %v711, %v695
    %v808 = vpack.c.b16 %v712, %v696
    %v809 = vpack.c.b16 %v713, %v697
    %v810 = vpack.c.b16 %v714, %v698
    %v811 = vpack.c.b16 %v715, %v699
    %v812 = vpack.c.b16 %v716, %v700
    %v813 = vpack.c.b16 %v717, %v701
    %v814 = vpack.c.b16 %v734, %v718
    %v815 = vpack.c.b16 %v735, %v719
    %v816 = vpack.c.b16 %v736, %v720
    %v817 = vpack.c.b16 %v737, %v721
    %v818 = vpack.c.b16 %v738, %v722
    %v819 = vpack.c.b16 %v739, %v723
    %v820 = vpack.c.b16 %v740, %v724
    %v821 = vpack.c.b16 %v741, %v725
    %v822 = vpack.c.b16 %v742, %v726
    %v823 = vpack.c.b16 %v743, %v727
    %v824 = vpack.c.b16 %v744, %v728
    %v825 = vpack.c.b16 %v745, %v729
    %v826 = vpack.c.b16 %v746, %v730
    %v827 = vpack.c.b16 %v747, %v731
    %v828 = vpack.c.b16 %v748, %v732
    %v829 = vpack.c.b16 %v749, %v733
    %v830 = vpack.c.b16 %v766, %v750
    %v831 = vpack.c.b16 %v767, %v751
    %v832 = vpack.c.b16 %v768, %v752
    %v833 = vpack.c.b16 %v769, %v753
    %v834 = vpack.c.b16 %v770, %v754
    %v835 = vpack.c.b16 %v771, %v755
    %v836 = vpack.c.b16 %v772, %v756
    %v837 = vpack.c.b16 %v773, %v757
    %v838 = vpack.c.b16 %v774, %v758
    %v839 = vpack.c.b16 %v775, %v759
    %v840 = vpack.c.b16 %v776, %v760
    %v841 = vpack.c.b16 %v777, %v761
    %v842 = vpack.c.b16 %v778, %v762
    %v843 = vpack.c.b16 %v779, %v763
    %v844 = vpack.c.b16 %v780, %v764
    %v845 = vpack.c.b16 %v781, %v765
    %vm910 = vcmask 523264
    %v912 = vsel %vm910, %v589, 0
    %914 = vmatprep.subr.bf16.mxu0 %v783
    %915 = vmatpush1.bf16.msra.mxu0 %v782
    %916 = vmatprep.subr.bf16.mxu0 %v799
    %917 = vmatpush1.bf16.msra.mxu0 %v798
    %918 = vmatprep.subr.bf16.mxu0 %v815
    %919 = vmatpush1.bf16.msra.mxu0 %v814
    %920 = vmatprep.subr.bf16.mxu0 %v831
    %921 = vmatpush1.bf16.msra.mxu0 %v830
    %922 = vmatprep.subr.bf16.mxu0 0
    %923 = vmatpush1.bf16.msra.mxu0 0
    %924 = vmatprep.subr.bf16.mxu0 0
    %925 = vmatpush1.bf16.msra.mxu0 0
    %926 = vmatprep.subr.bf16.mxu0 0
    %927 = vmatpush1.bf16.msra.mxu0 0
    %928 = vmatprep.subr.bf16.mxu0 0
    %929 = vmatpush1.bf16.msra.mxu0 0
    %930 = vmatprep.subr.bf16.mxu0 0
    %931 = vmatpush1.bf16.msra.mxu0 0
    %932 = vmatprep.subr.bf16.mxu0 0
    %933 = vmatpush1.bf16.msra.mxu0 0
    %934 = vmatprep.subr.bf16.mxu0 0
    %935 = vmatpush1.bf16.msra.mxu0 0
    %936 = vmatprep.subr.bf16.mxu0 0
    %937 = vmatpush1.bf16.msra.mxu0 0
    %938 = vmatprep.subr.bf16.mxu0 0
    %939 = vmatpush1.bf16.msra.mxu0 0
    %940 = vmatprep.subr.bf16.mxu0 0
    %941 = vmatpush1.bf16.msra.mxu0 0
    %942 = vmatprep.subr.bf16.mxu0 0
    %943 = vmatpush1.bf16.msra.mxu0 0
    %944 = vmatprep.subr.bf16.mxu0 0
    %945 = vmatpush1.bf16.msra.mxu0 0
    %946 = vmatprep.mubr.bf16.mxu0 0
    %947 = vmatmul.mubr.bf16.gmra.mrb[0].mxu0 %v912
    %v948 = vpop.f32.mrb[0].mxu0
    %v949 = vadd.f32 0.0, %v948
    %v950 = vpop.f32.mrb[0].mxu0
    %v951 = vadd.f32 0.0, %v950
    %v952 = vpop.f32.mrb[0].mxu0
    %v953 = vadd.f32 0.0, %v952
    %v954 = vpop.f32.mrb[0].mxu0
    %v955 = vadd.f32 0.0, %v954
    %956 = vdwg.mxu0
    %957 = vmatprep.subr.bf16.mxu0 %v785
    %958 = vmatpush1.bf16.msra.mxu0 %v784
    %959 = vmatprep.subr.bf16.mxu0 %v801
    %960 = vmatpush1.bf16.msra.mxu0 %v800
    %961 = vmatprep.subr.bf16.mxu0 %v817
    %962 = vmatpush1.bf16.msra.mxu0 %v816
    %963 = vmatprep.subr.bf16.mxu0 %v833
    %964 = vmatpush1.bf16.msra.mxu0 %v832
    %965 = vmatprep.subr.bf16.mxu0 0
    %966 = vmatpush1.bf16.msra.mxu0 0
    %967 = vmatprep.subr.bf16.mxu0 0
    %968 = vmatpush1.bf16.msra.mxu0 0
    %969 = vmatprep.subr.bf16.mxu0 0
    %970 = vmatpush1.bf16.msra.mxu0 0
    %971 = vmatprep.subr.bf16.mxu0 0
    %972 = vmatpush1.bf16.msra.mxu0 0
    %973 = vmatprep.subr.bf16.mxu0 0
    %974 = vmatpush1.bf16.msra.mxu0 0
    %975 = vmatprep.subr.bf16.mxu0 0
    %976 = vmatpush1.bf16.msra.mxu0 0
    %977 = vmatprep.subr.bf16.mxu0 0
    %978 = vmatpush1.bf16.msra.mxu0 0
    %979 = vmatprep.subr.bf16.mxu0 0
    %980 = vmatpush1.bf16.msra.mxu0 0
    %981 = vmatprep.subr.bf16.mxu0 0
    %982 = vmatpush1.bf16.msra.mxu0 0
    %983 = vmatprep.subr.bf16.mxu0 0
    %984 = vmatpush1.bf16.msra.mxu0 0
    %985 = vmatprep.subr.bf16.mxu0 0
    %986 = vmatpush1.bf16.msra.mxu0 0
    %987 = vmatprep.subr.bf16.mxu0 0
    %988 = vmatpush1.bf16.msra.mxu0 0
    %989 = vmatprep.mubr.bf16.mxu0 0
    %990 = vmatmul.mubr.bf16.gmra.mrb[0].mxu0 %v912
    %v991 = vpop.f32.mrb[0].mxu0
    %v992 = vadd.f32 0.0, %v991
    %v993 = vpop.f32.mrb[0].mxu0
    %v994 = vadd.f32 0.0, %v993
    %v995 = vpop.f32.mrb[0].mxu0
    %v996 = vadd.f32 0.0, %v995
    %v997 = vpop.f32.mrb[0].mxu0
    %v998 = vadd.f32 0.0, %v997
    %999 = vdwg.mxu0
    %1000 = vmatprep.subr.bf16.mxu0 %v787
    %1001 = vmatpush1.bf16.msra.mxu0 %v786
    %1002 = vmatprep.subr.bf16.mxu0 %v803
    %1003 = vmatpush1.bf16.msra.mxu0 %v802
    %1004 = vmatprep.subr.bf16.mxu0 %v819
    %1005 = vmatpush1.bf16.msra.mxu0 %v818
    %1006 = vmatprep.subr.bf16.mxu0 %v835
    %1007 = vmatpush1.bf16.msra.mxu0 %v834
    %1008 = vmatprep.subr.bf16.mxu0 0
    %1009 = vmatpush1.bf16.msra.mxu0 0
    %1010 = vmatprep.subr.bf16.mxu0 0
    %1011 = vmatpush1.bf16.msra.mxu0 0
    %1012 = vmatprep.subr.bf16.mxu0 0
    %1013 = vmatpush1.bf16.msra.mxu0 0
    %1014 = vmatprep.subr.bf16.mxu0 0
    %1015 = vmatpush1.bf16.msra.mxu0 0
    %1016 = vmatprep.subr.bf16.mxu0 0
    %1017 = vmatpush1.bf16.msra.mxu0 0
    %1018 = vmatprep.subr.bf16.mxu0 0
    %1019 = vmatpush1.bf16.msra.mxu0 0
    %1020 = vmatprep.subr.bf16.mxu0 0
    %1021 = vmatpush1.bf16.msra.mxu0 0
    %1022 = vmatprep.subr.bf16.mxu0 0
    %1023 = vmatpush1.bf16.msra.mxu0 0
    %1024 = vmatprep.subr.bf16.mxu0 0
    %1025 = vmatpush1.bf16.msra.mxu0 0
    %1026 = vmatprep.subr.bf16.mxu0 0
    %1027 = vmatpush1.bf16.msra.mxu0 0
    %1028 = vmatprep.subr.bf16.mxu0 0
    %1029 = vmatpush1.bf16.msra.mxu0 0
    %1030 = vmatprep.subr.bf16.mxu0 0
    %1031 = vmatpush1.bf16.msra.mxu0 0
    %1032 = vmatprep.mubr.bf16.mxu0 0
    %1033 = vmatmul.mubr.bf16.gmra.mrb[0].mxu0 %v912
    %v1034 = vpop.f32.mrb[0].mxu0
    %v1035 = vadd.f32 0.0, %v1034
    %v1036 = vpop.f32.mrb[0].mxu0
    %v1037 = vadd.f32 0.0, %v1036
    %v1038 = vpop.f32.mrb[0].mxu0
    %v1039 = vadd.f32 0.0, %v1038
    %v1040 = vpop.f32.mrb[0].mxu0
    %v1041 = vadd.f32 0.0, %v1040
    %1042 = vdwg.mxu0
    %1043 = vmatprep.subr.bf16.mxu0 %v789
    %1044 = vmatpush1.bf16.msra.mxu0 %v788
    %1045 = vmatprep.subr.bf16.mxu0 %v805
    %1046 = vmatpush1.bf16.msra.mxu0 %v804
    %1047 = vmatprep.subr.bf16.mxu0 %v821
    %1048 = vmatpush1.bf16.msra.mxu0 %v820
    %1049 = vmatprep.subr.bf16.mxu0 %v837
    %1050 = vmatpush1.bf16.msra.mxu0 %v836
    %1051 = vmatprep.subr.bf16.mxu0 0
    %1052 = vmatpush1.bf16.msra.mxu0 0
    %1053 = vmatprep.subr.bf16.mxu0 0
    %1054 = vmatpush1.bf16.msra.mxu0 0
    %1055 = vmatprep.subr.bf16.mxu0 0
    %1056 = vmatpush1.bf16.msra.mxu0 0
    %1057 = vmatprep.subr.bf16.mxu0 0
    %1058 = vmatpush1.bf16.msra.mxu0 0
    %1059 = vmatprep.subr.bf16.mxu0 0
    %1060 = vmatpush1.bf16.msra.mxu0 0
    %1061 = vmatprep.subr.bf16.mxu0 0
    %1062 = vmatpush1.bf16.msra.mxu0 0
    %1063 = vmatprep.subr.bf16.mxu0 0
    %1064 = vmatpush1.bf16.msra.mxu0 0
    %1065 = vmatprep.subr.bf16.mxu0 0
    %1066 = vmatpush1.bf16.msra.mxu0 0
    %1067 = vmatprep.subr.bf16.mxu0 0
    %1068 = vmatpush1.bf16.msra.mxu0 0
    %1069 = vmatprep.subr.bf16.mxu0 0
    %1070 = vmatpush1.bf16.msra.mxu0 0
    %1071 = vmatprep.subr.bf16.mxu0 0
    %1072 = vmatpush1.bf16.msra.mxu0 0
    %1073 = vmatprep.subr.bf16.mxu0 0
    %1074 = vmatpush1.bf16.msra.mxu0 0
    %1075 = vmatprep.mubr.bf16.mxu0 0
    %1076 = vmatmul.mubr.bf16.gmra.mrb[0].mxu0 %v912
    %v1077 = vpop.f32.mrb[0].mxu0
    %v1078 = vadd.f32 0.0, %v1077
    %v1079 = vpop.f32.mrb[0].mxu0
    %v1080 = vadd.f32 0.0, %v1079
    %v1081 = vpop.f32.mrb[0].mxu0
    %v1082 = vadd.f32 0.0, %v1081
    %v1083 = vpop.f32.mrb[0].mxu0
    %v1084 = vadd.f32 0.0, %v1083
    %1085 = vdwg.mxu0
    %1086 = vmatprep.subr.bf16.mxu0 %v791
    %1087 = vmatpush1.bf16.msra.mxu0 %v790
    %1088 = vmatprep.subr.bf16.mxu0 %v807
    %1089 = vmatpush1.bf16.msra.mxu0 %v806
    %1090 = vmatprep.subr.bf16.mxu0 %v823
    %1091 = vmatpush1.bf16.msra.mxu0 %v822
    %1092 = vmatprep.subr.bf16.mxu0 %v839
    %1093 = vmatpush1.bf16.msra.mxu0 %v838
    %1094 = vmatprep.subr.bf16.mxu0 0
    %1095 = vmatpush1.bf16.msra.mxu0 0
    %1096 = vmatprep.subr.bf16.mxu0 0
    %1097 = vmatpush1.bf16.msra.mxu0 0
    %1098 = vmatprep.subr.bf16.mxu0 0
    %1099 = vmatpush1.bf16.msra.mxu0 0
    %1100 = vmatprep.subr.bf16.mxu0 0
    %1101 = vmatpush1.bf16.msra.mxu0 0
    %1102 = vmatprep.subr.bf16.mxu0 0
    %1103 = vmatpush1.bf16.msra.mxu0 0
    %1104 = vmatprep.subr.bf16.mxu0 0
    %1105 = vmatpush1.bf16.msra.mxu0 0
    %1106 = vmatprep.subr.bf16.mxu0 0
    %1107 = vmatpush1.bf16.msra.mxu0 0
    %1108 = vmatprep.subr.bf16.mxu0 0
    %1109 = vmatpush1.bf16.msra.mxu0 0
    %1110 = vmatprep.subr.bf16.mxu0 0
    %1111 = vmatpush1.bf16.msra.mxu0 0
    %1112 = vmatprep.subr.bf16.mxu0 0
    %1113 = vmatpush1.bf16.msra.mxu0 0
    %1114 = vmatprep.subr.bf16.mxu0 0
    %1115 = vmatpush1.bf16.msra.mxu0 0
    %1116 = vmatprep.subr.bf16.mxu0 0
    %1117 = vmatpush1.bf16.msra.mxu0 0
    %1118 = vmatprep.mubr.bf16.mxu0 0
    %1119 = vmatmul.mubr.bf16.gmra.mrb[0].mxu0 %v912
    %v1120 = vpop.f32.mrb[0].mxu0
    %v1121 = vadd.f32 0.0, %v1120
    %v1122 = vpop.f32.mrb[0].mxu0
    %v1123 = vadd.f32 0.0, %v1122
    %v1124 = vpop.f32.mrb[0].mxu0
    %v1125 = vadd.f32 0.0, %v1124
    %v1126 = vpop.f32.mrb[0].mxu0
    %v1127 = vadd.f32 0.0, %v1126
    %1128 = vdwg.mxu0
    %1129 = vmatprep.subr.bf16.mxu0 %v793
    %1130 = vmatpush1.bf16.msra.mxu0 %v792
    %1131 = vmatprep.subr.bf16.mxu0 %v809
    %1132 = vmatpush1.bf16.msra.mxu0 %v808
    %1133 = vmatprep.subr.bf16.mxu0 %v825
    %1134 = vmatpush1.bf16.msra.mxu0 %v824
    %1135 = vmatprep.subr.bf16.mxu0 %v841
    %1136 = vmatpush1.bf16.msra.mxu0 %v840
    %1137 = vmatprep.subr.bf16.mxu0 0
    %1138 = vmatpush1.bf16.msra.mxu0 0
    %1139 = vmatprep.subr.bf16.mxu0 0
    %1140 = vmatpush1.bf16.msra.mxu0 0
    %1141 = vmatprep.subr.bf16.mxu0 0
    %1142 = vmatpush1.bf16.msra.mxu0 0
    %1143 = vmatprep.subr.bf16.mxu0 0
    %1144 = vmatpush1.bf16.msra.mxu0 0
    %1145 = vmatprep.subr.bf16.mxu0 0
    %1146 = vmatpush1.bf16.msra.mxu0 0
    %1147 = vmatprep.subr.bf16.mxu0 0
    %1148 = vmatpush1.bf16.msra.mxu0 0
    %1149 = vmatprep.subr.bf16.mxu0 0
    %1150 = vmatpush1.bf16.msra.mxu0 0
    %1151 = vmatprep.subr.bf16.mxu0 0
    %1152 = vmatpush1.bf16.msra.mxu0 0
    %1153 = vmatprep.subr.bf16.mxu0 0
    %1154 = vmatpush1.bf16.msra.mxu0 0
    %1155 = vmatprep.subr.bf16.mxu0 0
    %1156 = vmatpush1.bf16.msra.mxu0 0
    %1157 = vmatprep.subr.bf16.mxu0 0
    %1158 = vmatpush1.bf16.msra.mxu0 0
    %1159 = vmatprep.subr.bf16.mxu0 0
    %1160 = vmatpush1.bf16.msra.mxu0 0
    %1161 = vmatprep.mubr.bf16.mxu0 0
    %1162 = vmatmul.mubr.bf16.gmra.mrb[0].mxu0 %v912
    %v1163 = vpop.f32.mrb[0].mxu0
    %v1164 = vadd.f32 0.0, %v1163
    %v1165 = vpop.f32.mrb[0].mxu0
    %v1166 = vadd.f32 0.0, %v1165
    %v1167 = vpop.f32.mrb[0].mxu0
    %v1168 = vadd.f32 0.0, %v1167
    %v1169 = vpop.f32.mrb[0].mxu0
    %v1170 = vadd.f32 0.0, %v1169
    %1171 = vdwg.mxu0
    %1172 = vmatprep.subr.bf16.mxu0 %v795
    %1173 = vmatpush1.bf16.msra.mxu0 %v794
    %1174 = vmatprep.subr.bf16.mxu0 %v811
    %1175 = vmatpush1.bf16.msra.mxu0 %v810
    %1176 = vmatprep.subr.bf16.mxu0 %v827
    %1177 = vmatpush1.bf16.msra.mxu0 %v826
    %1178 = vmatprep.subr.bf16.mxu0 %v843
    %1179 = vmatpush1.bf16.msra.mxu0 %v842
    %1180 = vmatprep.subr.bf16.mxu0 0
    %1181 = vmatpush1.bf16.msra.mxu0 0
    %1182 = vmatprep.subr.bf16.mxu0 0
    %1183 = vmatpush1.bf16.msra.mxu0 0
    %1184 = vmatprep.subr.bf16.mxu0 0
    %1185 = vmatpush1.bf16.msra.mxu0 0
    %1186 = vmatprep.subr.bf16.mxu0 0
    %1187 = vmatpush1.bf16.msra.mxu0 0
    %1188 = vmatprep.subr.bf16.mxu0 0
    %1189 = vmatpush1.bf16.msra.mxu0 0
    %1190 = vmatprep.subr.bf16.mxu0 0
    %1191 = vmatpush1.bf16.msra.mxu0 0
    %1192 = vmatprep.subr.bf16.mxu0 0
    %1193 = vmatpush1.bf16.msra.mxu0 0
    %1194 = vmatprep.subr.bf16.mxu0 0
    %1195 = vmatpush1.bf16.msra.mxu0 0
    %1196 = vmatprep.subr.bf16.mxu0 0
    %1197 = vmatpush1.bf16.msra.mxu0 0
    %1198 = vmatprep.subr.bf16.mxu0 0
    %1199 = vmatpush1.bf16.msra.mxu0 0
    %1200 = vmatprep.subr.bf16.mxu0 0
    %1201 = vmatpush1.bf16.msra.mxu0 0
    %1202 = vmatprep.subr.bf16.mxu0 0
    %1203 = vmatpush1.bf16.msra.mxu0 0
    %1204 = vmatprep.mubr.bf16.mxu0 0
    %1205 = vmatmul.mubr.bf16.gmra.mrb[0].mxu0 %v912
    %v1206 = vpop.f32.mrb[0].mxu0
    %v1207 = vadd.f32 0.0, %v1206
    %v1208 = vpop.f32.mrb[0].mxu0
    %v1209 = vadd.f32 0.0, %v1208
    %v1210 = vpop.f32.mrb[0].mxu0
    %v1211 = vadd.f32 0.0, %v1210
    %v1212 = vpop.f32.mrb[0].mxu0
    %v1213 = vadd.f32 0.0, %v1212
    %1214 = vdwg.mxu0
    %1215 = vmatprep.subr.bf16.mxu0 %v797
    %1216 = vmatpush1.bf16.msra.mxu0 %v796
    %1217 = vmatprep.subr.bf16.mxu0 %v813
    %1218 = vmatpush1.bf16.msra.mxu0 %v812
    %1219 = vmatprep.subr.bf16.mxu0 %v829
    %1220 = vmatpush1.bf16.msra.mxu0 %v828
    %1221 = vmatprep.subr.bf16.mxu0 %v845
    %1222 = vmatpush1.bf16.msra.mxu0 %v844
    %1223 = vmatprep.subr.bf16.mxu0 0
    %1224 = vmatpush1.bf16.msra.mxu0 0
    %1225 = vmatprep.subr.bf16.mxu0 0
    %1226 = vmatpush1.bf16.msra.mxu0 0
    %1227 = vmatprep.subr.bf16.mxu0 0
    %1228 = vmatpush1.bf16.msra.mxu0 0
    %1229 = vmatprep.subr.bf16.mxu0 0
    %1230 = vmatpush1.bf16.msra.mxu0 0
    %1231 = vmatprep.subr.bf16.mxu0 0
    %1232 = vmatpush1.bf16.msra.mxu0 0
    %1233 = vmatprep.subr.bf16.mxu0 0
    %1234 = vmatpush1.bf16.msra.mxu0 0
    %1235 = vmatprep.subr.bf16.mxu0 0
    %1236 = vmatpush1.bf16.msra.mxu0 0
    %1237 = vmatprep.subr.bf16.mxu0 0
    %1238 = vmatpush1.bf16.msra.mxu0 0
    %1239 = vmatprep.subr.bf16.mxu0 0
    %1240 = vmatpush1.bf16.msra.mxu0 0
    %1241 = vmatprep.subr.bf16.mxu0 0
    %1242 = vmatpush1.bf16.msra.mxu0 0
    %1243 = vmatprep.subr.bf16.mxu0 0
    %1244 = vmatpush1.bf16.msra.mxu0 0
    %1245 = vmatprep.subr.bf16.mxu0 0
    %1246 = vmatpush1.bf16.msra.mxu0 0
    %1247 = vmatprep.mubr.bf16.mxu0 0
    %1248 = vmatmul.mubr.bf16.gmra.mrb[0].mxu0 %v912
    %v1249 = vpop.f32.mrb[0].mxu0
    %v1250 = vadd.f32 0.0, %v1249
    %v1251 = vpop.f32.mrb[0].mxu0
    %v1252 = vadd.f32 0.0, %v1251
    %v1253 = vpop.f32.mrb[0].mxu0
    %v1254 = vadd.f32 0.0, %v1253
    %v1255 = vpop.f32.mrb[0].mxu0
    %v1256 = vadd.f32 0.0, %v1255
    %1257 = vdwg.mxu0
    %v1260 = vunpack.c.l.b16 %v535
    %v1261 = vunpack.c.l.b16 %v536
    %v1262 = vpack.c.b16 %v1261, %v1260
    %v1327 = vunpack.c.l.b16 %v85
    %v1328 = vunpack.c.h.b16 %v85
    %v1329 = vunpack.c.l.b16 %v86
    %v1330 = vunpack.c.h.b16 %v86
    %v1331 = vunpack.c.l.b16 %v87
    %v1332 = vunpack.c.h.b16 %v87
    %v1333 = vunpack.c.l.b16 %v88
    %v1334 = vunpack.c.h.b16 %v88
    %v1335 = vunpack.c.l.b16 %v89
    %v1336 = vunpack.c.h.b16 %v89
    %v1337 = vunpack.c.l.b16 %v90
    %v1338 = vunpack.c.h.b16 %v90
    %v1339 = vunpack.c.l.b16 %v91
    %v1340 = vunpack.c.h.b16 %v91
    %v1341 = vunpack.c.l.b16 %v92
    %v1342 = vunpack.c.h.b16 %v92
    %v1343 = vunpack.c.l.b16 %v93
    %v1344 = vunpack.c.h.b16 %v93
    %v1345 = vunpack.c.l.b16 %v94
    %v1346 = vunpack.c.h.b16 %v94
    %v1347 = vunpack.c.l.b16 %v95
    %v1348 = vunpack.c.h.b16 %v95
    %v1349 = vunpack.c.l.b16 %v96
    %v1350 = vunpack.c.h.b16 %v96
    %v1351 = vunpack.c.l.b16 %v97
    %v1352 = vunpack.c.h.b16 %v97
    %v1353 = vunpack.c.l.b16 %v98
    %v1354 = vunpack.c.h.b16 %v98
    %v1355 = vunpack.c.l.b16 %v99
    %v1356 = vunpack.c.h.b16 %v99
    %v1357 = vunpack.c.l.b16 %v100
    %v1358 = vunpack.c.h.b16 %v100
    %v1359 = vunpack.c.l.b16 %v101
    %v1360 = vunpack.c.h.b16 %v101
    %v1361 = vunpack.c.l.b16 %v102
    %v1362 = vunpack.c.h.b16 %v102
    %v1363 = vunpack.c.l.b16 %v103
    %v1364 = vunpack.c.h.b16 %v103
    %v1365 = vunpack.c.l.b16 %v104
    %v1366 = vunpack.c.h.b16 %v104
    %v1367 = vunpack.c.l.b16 %v105
    %v1368 = vunpack.c.h.b16 %v105
    %v1369 = vunpack.c.l.b16 %v106
    %v1370 = vunpack.c.h.b16 %v106
    %v1371 = vunpack.c.l.b16 %v107
    %v1372 = vunpack.c.h.b16 %v107
    %v1373 = vunpack.c.l.b16 %v108
    %v1374 = vunpack.c.h.b16 %v108
    %v1375 = vunpack.c.l.b16 %v109
    %v1376 = vunpack.c.h.b16 %v109
    %v1377 = vunpack.c.l.b16 %v110
    %v1378 = vunpack.c.h.b16 %v110
    %v1379 = vunpack.c.l.b16 %v111
    %v1380 = vunpack.c.h.b16 %v111
    %v1381 = vunpack.c.l.b16 %v112
    %v1382 = vunpack.c.h.b16 %v112
    %v1383 = vunpack.c.l.b16 %v113
    %v1384 = vunpack.c.h.b16 %v113
    %v1385 = vunpack.c.l.b16 %v114
    %v1386 = vunpack.c.h.b16 %v114
    %v1387 = vunpack.c.l.b16 %v115
    %v1388 = vunpack.c.h.b16 %v115
    %v1389 = vunpack.c.l.b16 %v116
    %v1390 = vunpack.c.h.b16 %v116
    %v1391 = vunpack.c.l.b16 %v117
    %v1392 = vunpack.c.h.b16 %v117
    %v1393 = vunpack.c.l.b16 %v118
    %v1394 = vunpack.c.h.b16 %v118
    %v1395 = vunpack.c.l.b16 %v119
    %v1396 = vunpack.c.h.b16 %v119
    %v1397 = vunpack.c.l.b16 %v120
    %v1398 = vunpack.c.h.b16 %v120
    %v1399 = vunpack.c.l.b16 %v121
    %v1400 = vunpack.c.h.b16 %v121
    %v1401 = vunpack.c.l.b16 %v122
    %v1402 = vunpack.c.h.b16 %v122
    %v1403 = vunpack.c.l.b16 %v123
    %v1404 = vunpack.c.h.b16 %v123
    %v1405 = vunpack.c.l.b16 %v124
    %v1406 = vunpack.c.h.b16 %v124
    %v1407 = vunpack.c.l.b16 %v125
    %v1408 = vunpack.c.h.b16 %v125
    %v1409 = vunpack.c.l.b16 %v126
    %v1410 = vunpack.c.h.b16 %v126
    %v1411 = vunpack.c.l.b16 %v127
    %v1412 = vunpack.c.h.b16 %v127
    %v1413 = vunpack.c.l.b16 %v128
    %v1414 = vunpack.c.h.b16 %v128
    %v1415 = vunpack.c.l.b16 %v129
    %v1416 = vunpack.c.h.b16 %v129
    %v1417 = vunpack.c.l.b16 %v130
    %v1418 = vunpack.c.h.b16 %v130
    %v1419 = vunpack.c.l.b16 %v131
    %v1420 = vunpack.c.h.b16 %v131
    %v1421 = vunpack.c.l.b16 %v132
    %v1422 = vunpack.c.h.b16 %v132
    %v1423 = vunpack.c.l.b16 %v133
    %v1424 = vunpack.c.h.b16 %v133
    %v1425 = vunpack.c.l.b16 %v134
    %v1426 = vunpack.c.h.b16 %v134
    %v1427 = vunpack.c.l.b16 %v135
    %v1428 = vunpack.c.h.b16 %v135
    %v1429 = vunpack.c.l.b16 %v136
    %v1430 = vunpack.c.h.b16 %v136
    %v1431 = vunpack.c.l.b16 %v137
    %v1432 = vunpack.c.h.b16 %v137
    %v1433 = vunpack.c.l.b16 %v138
    %v1434 = vunpack.c.h.b16 %v138
    %v1435 = vunpack.c.l.b16 %v139
    %v1436 = vunpack.c.h.b16 %v139
    %v1437 = vunpack.c.l.b16 %v140
    %v1438 = vunpack.c.h.b16 %v140
    %v1439 = vunpack.c.l.b16 %v141
    %v1440 = vunpack.c.h.b16 %v141
    %v1441 = vunpack.c.l.b16 %v142
    %v1442 = vunpack.c.h.b16 %v142
    %v1443 = vunpack.c.l.b16 %v143
    %v1444 = vunpack.c.h.b16 %v143
    %v1445 = vunpack.c.l.b16 %v144
    %v1446 = vunpack.c.h.b16 %v144
    %v1447 = vunpack.c.l.b16 %v145
    %v1448 = vunpack.c.h.b16 %v145
    %v1449 = vunpack.c.l.b16 %v146
    %v1450 = vunpack.c.h.b16 %v146
    %v1451 = vunpack.c.l.b16 %v147
    %v1452 = vunpack.c.h.b16 %v147
    %v1453 = vunpack.c.l.b16 %v148
    %v1454 = vunpack.c.h.b16 %v148
    %v1455 = vpack.c.b16 %v1343, %v1327
    %v1456 = vpack.c.b16 %v1344, %v1328
    %v1457 = vpack.c.b16 %v1345, %v1329
    %v1458 = vpack.c.b16 %v1346, %v1330
    %v1459 = vpack.c.b16 %v1347, %v1331
    %v1460 = vpack.c.b16 %v1348, %v1332
    %v1461 = vpack.c.b16 %v1349, %v1333
    %v1462 = vpack.c.b16 %v1350, %v1334
    %v1463 = vpack.c.b16 %v1351, %v1335
    %v1464 = vpack.c.b16 %v1352, %v1336
    %v1465 = vpack.c.b16 %v1353, %v1337
    %v1466 = vpack.c.b16 %v1354, %v1338
    %v1467 = vpack.c.b16 %v1355, %v1339
    %v1468 = vpack.c.b16 %v1356, %v1340
    %v1469 = vpack.c.b16 %v1357, %v1341
    %v1470 = vpack.c.b16 %v1358, %v1342
    %v1471 = vpack.c.b16 %v1375, %v1359
    %v1472 = vpack.c.b16 %v1376, %v1360
    %v1473 = vpack.c.b16 %v1377, %v1361
    %v1474 = vpack.c.b16 %v1378, %v1362
    %v1475 = vpack.c.b16 %v1379, %v1363
    %v1476 = vpack.c.b16 %v1380, %v1364
    %v1477 = vpack.c.b16 %v1381, %v1365
    %v1478 = vpack.c.b16 %v1382, %v1366
    %v1479 = vpack.c.b16 %v1383, %v1367
    %v1480 = vpack.c.b16 %v1384, %v1368
    %v1481 = vpack.c.b16 %v1385, %v1369
    %v1482 = vpack.c.b16 %v1386, %v1370
    %v1483 = vpack.c.b16 %v1387, %v1371
    %v1484 = vpack.c.b16 %v1388, %v1372
    %v1485 = vpack.c.b16 %v1389, %v1373
    %v1486 = vpack.c.b16 %v1390, %v1374
    %v1487 = vpack.c.b16 %v1407, %v1391
    %v1488 = vpack.c.b16 %v1408, %v1392
    %v1489 = vpack.c.b16 %v1409, %v1393
    %v1490 = vpack.c.b16 %v1410, %v1394
    %v1491 = vpack.c.b16 %v1411, %v1395
    %v1492 = vpack.c.b16 %v1412, %v1396
    %v1493 = vpack.c.b16 %v1413, %v1397
    %v1494 = vpack.c.b16 %v1414, %v1398
    %v1495 = vpack.c.b16 %v1415, %v1399
    %v1496 = vpack.c.b16 %v1416, %v1400
    %v1497 = vpack.c.b16 %v1417, %v1401
    %v1498 = vpack.c.b16 %v1418, %v1402
    %v1499 = vpack.c.b16 %v1419, %v1403
    %v1500 = vpack.c.b16 %v1420, %v1404
    %v1501 = vpack.c.b16 %v1421, %v1405
    %v1502 = vpack.c.b16 %v1422, %v1406
    %v1503 = vpack.c.b16 %v1439, %v1423
    %v1504 = vpack.c.b16 %v1440, %v1424
    %v1505 = vpack.c.b16 %v1441, %v1425
    %v1506 = vpack.c.b16 %v1442, %v1426
    %v1507 = vpack.c.b16 %v1443, %v1427
    %v1508 = vpack.c.b16 %v1444, %v1428
    %v1509 = vpack.c.b16 %v1445, %v1429
    %v1510 = vpack.c.b16 %v1446, %v1430
    %v1511 = vpack.c.b16 %v1447, %v1431
    %v1512 = vpack.c.b16 %v1448, %v1432
    %v1513 = vpack.c.b16 %v1449, %v1433
    %v1514 = vpack.c.b16 %v1450, %v1434
    %v1515 = vpack.c.b16 %v1451, %v1435
    %v1516 = vpack.c.b16 %v1452, %v1436
    %v1517 = vpack.c.b16 %v1453, %v1437
    %v1518 = vpack.c.b16 %v1454, %v1438
    %v1584 = vsel %vm910, %v1262, 0
    %1586 = vmatprep.subr.bf16.mxu0 %v1456
    %1587 = vmatpush1.bf16.msra.mxu0 %v1455
    %1588 = vmatprep.subr.bf16.mxu0 %v1472
    %1589 = vmatpush1.bf16.msra.mxu0 %v1471
    %1590 = vmatprep.subr.bf16.mxu0 %v1488
    %1591 = vmatpush1.bf16.msra.mxu0 %v1487
    %1592 = vmatprep.subr.bf16.mxu0 %v1504
    %1593 = vmatpush1.bf16.msra.mxu0 %v1503
    %1594 = vmatprep.subr.bf16.mxu0 0
    %1595 = vmatpush1.bf16.msra.mxu0 0
    %1596 = vmatprep.subr.bf16.mxu0 0
    %1597 = vmatpush1.bf16.msra.mxu0 0
    %1598 = vmatprep.subr.bf16.mxu0 0
    %1599 = vmatpush1.bf16.msra.mxu0 0
    %1600 = vmatprep.subr.bf16.mxu0 0
    %1601 = vmatpush1.bf16.msra.mxu0 0
    %1602 = vmatprep.subr.bf16.mxu0 0
    %1603 = vmatpush1.bf16.msra.mxu0 0
    %1604 = vmatprep.subr.bf16.mxu0 0
    %1605 = vmatpush1.bf16.msra.mxu0 0
    %1606 = vmatprep.subr.bf16.mxu0 0
    %1607 = vmatpush1.bf16.msra.mxu0 0
    %1608 = vmatprep.subr.bf16.mxu0 0
    %1609 = vmatpush1.bf16.msra.mxu0 0
    %1610 = vmatprep.subr.bf16.mxu0 0
    %1611 = vmatpush1.bf16.msra.mxu0 0
    %1612 = vmatprep.subr.bf16.mxu0 0
    %1613 = vmatpush1.bf16.msra.mxu0 0
    %1614 = vmatprep.subr.bf16.mxu0 0
    %1615 = vmatpush1.bf16.msra.mxu0 0
    %1616 = vmatprep.subr.bf16.mxu0 0
    %1617 = vmatpush1.bf16.msra.mxu0 0
    %1618 = vmatprep.mubr.bf16.mxu0 0
    %1619 = vmatmul.mubr.bf16.gmra.mrb[0].mxu0 %v1584
    %v1620 = vpop.f32.mrb[0].mxu0
    %v1621 = vadd.f32 %v949, %v1620
    %v1622 = vpop.f32.mrb[0].mxu0
    %v1623 = vadd.f32 %v951, %v1622
    %v1624 = vpop.f32.mrb[0].mxu0
    %v1625 = vadd.f32 %v953, %v1624
    %v1626 = vpop.f32.mrb[0].mxu0
    %v1627 = vadd.f32 %v955, %v1626
    %1628 = vdwg.mxu0
    %1629 = vmatprep.subr.bf16.mxu0 %v1458
    %1630 = vmatpush1.bf16.msra.mxu0 %v1457
    %1631 = vmatprep.subr.bf16.mxu0 %v1474
    %1632 = vmatpush1.bf16.msra.mxu0 %v1473
    %1633 = vmatprep.subr.bf16.mxu0 %v1490
    %1634 = vmatpush1.bf16.msra.mxu0 %v1489
    %1635 = vmatprep.subr.bf16.mxu0 %v1506
    %1636 = vmatpush1.bf16.msra.mxu0 %v1505
    %1637 = vmatprep.subr.bf16.mxu0 0
    %1638 = vmatpush1.bf16.msra.mxu0 0
    %1639 = vmatprep.subr.bf16.mxu0 0
    %1640 = vmatpush1.bf16.msra.mxu0 0
    %1641 = vmatprep.subr.bf16.mxu0 0
    %1642 = vmatpush1.bf16.msra.mxu0 0
    %1643 = vmatprep.subr.bf16.mxu0 0
    %1644 = vmatpush1.bf16.msra.mxu0 0
    %1645 = vmatprep.subr.bf16.mxu0 0
    %1646 = vmatpush1.bf16.msra.mxu0 0
    %1647 = vmatprep.subr.bf16.mxu0 0
    %1648 = vmatpush1.bf16.msra.mxu0 0
    %1649 = vmatprep.subr.bf16.mxu0 0
    %1650 = vmatpush1.bf16.msra.mxu0 0
    %1651 = vmatprep.subr.bf16.mxu0 0
    %1652 = vmatpush1.bf16.msra.mxu0 0
    %1653 = vmatprep.subr.bf16.mxu0 0
    %1654 = vmatpush1.bf16.msra.mxu0 0
    %1655 = vmatprep.subr.bf16.mxu0 0
    %1656 = vmatpush1.bf16.msra.mxu0 0
    %1657 = vmatprep.subr.bf16.mxu0 0
    %1658 = vmatpush1.bf16.msra.mxu0 0
    %1659 = vmatprep.subr.bf16.mxu0 0
    %1660 = vmatpush1.bf16.msra.mxu0 0
    %1661 = vmatprep.mubr.bf16.mxu0 0
    %1662 = vmatmul.mubr.bf16.gmra.mrb[0].mxu0 %v1584
    %v1663 = vpop.f32.mrb[0].mxu0
    %v1664 = vadd.f32 %v992, %v1663
    %v1665 = vpop.f32.mrb[0].mxu0
    %v1666 = vadd.f32 %v994, %v1665
    %v1667 = vpop.f32.mrb[0].mxu0
    %v1668 = vadd.f32 %v996, %v1667
    %v1669 = vpop.f32.mrb[0].mxu0
    %v1670 = vadd.f32 %v998, %v1669
    %1671 = vdwg.mxu0
    %1672 = vmatprep.subr.bf16.mxu0 %v1460
    %1673 = vmatpush1.bf16.msra.mxu0 %v1459
    %1674 = vmatprep.subr.bf16.mxu0 %v1476
    %1675 = vmatpush1.bf16.msra.mxu0 %v1475
    %1676 = vmatprep.subr.bf16.mxu0 %v1492
    %1677 = vmatpush1.bf16.msra.mxu0 %v1491
    %1678 = vmatprep.subr.bf16.mxu0 %v1508
    %1679 = vmatpush1.bf16.msra.mxu0 %v1507
    %1680 = vmatprep.subr.bf16.mxu0 0
    %1681 = vmatpush1.bf16.msra.mxu0 0
    %1682 = vmatprep.subr.bf16.mxu0 0
    %1683 = vmatpush1.bf16.msra.mxu0 0
    %1684 = vmatprep.subr.bf16.mxu0 0
    %1685 = vmatpush1.bf16.msra.mxu0 0
    %1686 = vmatprep.subr.bf16.mxu0 0
    %1687 = vmatpush1.bf16.msra.mxu0 0
    %1688 = vmatprep.subr.bf16.mxu0 0
    %1689 = vmatpush1.bf16.msra.mxu0 0
    %1690 = vmatprep.subr.bf16.mxu0 0
    %1691 = vmatpush1.bf16.msra.mxu0 0
    %1692 = vmatprep.subr.bf16.mxu0 0
    %1693 = vmatpush1.bf16.msra.mxu0 0
    %1694 = vmatprep.subr.bf16.mxu0 0
    %1695 = vmatpush1.bf16.msra.mxu0 0
    %1696 = vmatprep.subr.bf16.mxu0 0
    %1697 = vmatpush1.bf16.msra.mxu0 0
    %1698 = vmatprep.subr.bf16.mxu0 0
    %1699 = vmatpush1.bf16.msra.mxu0 0
    %1700 = vmatprep.subr.bf16.mxu0 0
    %1701 = vmatpush1.bf16.msra.mxu0 0
    %1702 = vmatprep.subr.bf16.mxu0 0
    %1703 = vmatpush1.bf16.msra.mxu0 0
    %1704 = vmatprep.mubr.bf16.mxu0 0
    %1705 = vmatmul.mubr.bf16.gmra.mrb[0].mxu0 %v1584
    %v1706 = vpop.f32.mrb[0].mxu0
    %v1707 = vadd.f32 %v1035, %v1706
    %v1708 = vpop.f32.mrb[0].mxu0
    %v1709 = vadd.f32 %v1037, %v1708
    %v1710 = vpop.f32.mrb[0].mxu0
    %v1711 = vadd.f32 %v1039, %v1710
    %v1712 = vpop.f32.mrb[0].mxu0
    %v1713 = vadd.f32 %v1041, %v1712
    %1714 = vdwg.mxu0
    %1715 = vmatprep.subr.bf16.mxu0 %v1462
    %1716 = vmatpush1.bf16.msra.mxu0 %v1461
    %1717 = vmatprep.subr.bf16.mxu0 %v1478
    %1718 = vmatpush1.bf16.msra.mxu0 %v1477
    %1719 = vmatprep.subr.bf16.mxu0 %v1494
    %1720 = vmatpush1.bf16.msra.mxu0 %v1493
    %1721 = vmatprep.subr.bf16.mxu0 %v1510
    %1722 = vmatpush1.bf16.msra.mxu0 %v1509
    %1723 = vmatprep.subr.bf16.mxu0 0
    %1724 = vmatpush1.bf16.msra.mxu0 0
    %1725 = vmatprep.subr.bf16.mxu0 0
    %1726 = vmatpush1.bf16.msra.mxu0 0
    %1727 = vmatprep.subr.bf16.mxu0 0
    %1728 = vmatpush1.bf16.msra.mxu0 0
    %1729 = vmatprep.subr.bf16.mxu0 0
    %1730 = vmatpush1.bf16.msra.mxu0 0
    %1731 = vmatprep.subr.bf16.mxu0 0
    %1732 = vmatpush1.bf16.msra.mxu0 0
    %1733 = vmatprep.subr.bf16.mxu0 0
    %1734 = vmatpush1.bf16.msra.mxu0 0
    %1735 = vmatprep.subr.bf16.mxu0 0
    %1736 = vmatpush1.bf16.msra.mxu0 0
    %1737 = vmatprep.subr.bf16.mxu0 0
    %1738 = vmatpush1.bf16.msra.mxu0 0
    %1739 = vmatprep.subr.bf16.mxu0 0
    %1740 = vmatpush1.bf16.msra.mxu0 0
    %1741 = vmatprep.subr.bf16.mxu0 0
    %1742 = vmatpush1.bf16.msra.mxu0 0
    %1743 = vmatprep.subr.bf16.mxu0 0
    %1744 = vmatpush1.bf16.msra.mxu0 0
    %1745 = vmatprep.subr.bf16.mxu0 0
    %1746 = vmatpush1.bf16.msra.mxu0 0
    %1747 = vmatprep.mubr.bf16.mxu0 0
    %1748 = vmatmul.mubr.bf16.gmra.mrb[0].mxu0 %v1584
    %v1749 = vpop.f32.mrb[0].mxu0
    %v1750 = vadd.f32 %v1078, %v1749
    %v1751 = vpop.f32.mrb[0].mxu0
    %v1752 = vadd.f32 %v1080, %v1751
    %v1753 = vpop.f32.mrb[0].mxu0
    %v1754 = vadd.f32 %v1082, %v1753
    %v1755 = vpop.f32.mrb[0].mxu0
    %v1756 = vadd.f32 %v1084, %v1755
    %1757 = vdwg.mxu0
    %1758 = vmatprep.subr.bf16.mxu0 %v1464
    %1759 = vmatpush1.bf16.msra.mxu0 %v1463
    %1760 = vmatprep.subr.bf16.mxu0 %v1480
    %1761 = vmatpush1.bf16.msra.mxu0 %v1479
    %1762 = vmatprep.subr.bf16.mxu0 %v1496
    %1763 = vmatpush1.bf16.msra.mxu0 %v1495
    %1764 = vmatprep.subr.bf16.mxu0 %v1512
    %1765 = vmatpush1.bf16.msra.mxu0 %v1511
    %1766 = vmatprep.subr.bf16.mxu0 0
    %1767 = vmatpush1.bf16.msra.mxu0 0
    %1768 = vmatprep.subr.bf16.mxu0 0
    %1769 = vmatpush1.bf16.msra.mxu0 0
    %1770 = vmatprep.subr.bf16.mxu0 0
    %1771 = vmatpush1.bf16.msra.mxu0 0
    %1772 = vmatprep.subr.bf16.mxu0 0
    %1773 = vmatpush1.bf16.msra.mxu0 0
    %1774 = vmatprep.subr.bf16.mxu0 0
    %1775 = vmatpush1.bf16.msra.mxu0 0
    %1776 = vmatprep.subr.bf16.mxu0 0
    %1777 = vmatpush1.bf16.msra.mxu0 0
    %1778 = vmatprep.subr.bf16.mxu0 0
    %1779 = vmatpush1.bf16.msra.mxu0 0
    %1780 = vmatprep.subr.bf16.mxu0 0
    %1781 = vmatpush1.bf16.msra.mxu0 0
    %1782 = vmatprep.subr.bf16.mxu0 0
    %1783 = vmatpush1.bf16.msra.mxu0 0
    %1784 = vmatprep.subr.bf16.mxu0 0
    %1785 = vmatpush1.bf16.msra.mxu0 0
    %1786 = vmatprep.subr.bf16.mxu0 0
    %1787 = vmatpush1.bf16.msra.mxu0 0
    %1788 = vmatprep.subr.bf16.mxu0 0
    %1789 = vmatpush1.bf16.msra.mxu0 0
    %1790 = vmatprep.mubr.bf16.mxu0 0
    %1791 = vmatmul.mubr.bf16.gmra.mrb[0].mxu0 %v1584
    %v1792 = vpop.f32.mrb[0].mxu0
    %v1793 = vadd.f32 %v1121, %v1792
    %v1794 = vpop.f32.mrb[0].mxu0
    %v1795 = vadd.f32 %v1123, %v1794
    %v1796 = vpop.f32.mrb[0].mxu0
    %v1797 = vadd.f32 %v1125, %v1796
    %v1798 = vpop.f32.mrb[0].mxu0
    %v1799 = vadd.f32 %v1127, %v1798
    %1800 = vdwg.mxu0
    %1801 = vmatprep.subr.bf16.mxu0 %v1466
    %1802 = vmatpush1.bf16.msra.mxu0 %v1465
    %1803 = vmatprep.subr.bf16.mxu0 %v1482
    %1804 = vmatpush1.bf16.msra.mxu0 %v1481
    %1805 = vmatprep.subr.bf16.mxu0 %v1498
    %1806 = vmatpush1.bf16.msra.mxu0 %v1497
    %1807 = vmatprep.subr.bf16.mxu0 %v1514
    %1808 = vmatpush1.bf16.msra.mxu0 %v1513
    %1809 = vmatprep.subr.bf16.mxu0 0
    %1810 = vmatpush1.bf16.msra.mxu0 0
    %1811 = vmatprep.subr.bf16.mxu0 0
    %1812 = vmatpush1.bf16.msra.mxu0 0
    %1813 = vmatprep.subr.bf16.mxu0 0
    %1814 = vmatpush1.bf16.msra.mxu0 0
    %1815 = vmatprep.subr.bf16.mxu0 0
    %1816 = vmatpush1.bf16.msra.mxu0 0
    %1817 = vmatprep.subr.bf16.mxu0 0
    %1818 = vmatpush1.bf16.msra.mxu0 0
    %1819 = vmatprep.subr.bf16.mxu0 0
    %1820 = vmatpush1.bf16.msra.mxu0 0
    %1821 = vmatprep.subr.bf16.mxu0 0
    %1822 = vmatpush1.bf16.msra.mxu0 0
    %1823 = vmatprep.subr.bf16.mxu0 0
    %1824 = vmatpush1.bf16.msra.mxu0 0
    %1825 = vmatprep.subr.bf16.mxu0 0
    %1826 = vmatpush1.bf16.msra.mxu0 0
    %1827 = vmatprep.subr.bf16.mxu0 0
    %1828 = vmatpush1.bf16.msra.mxu0 0
    %1829 = vmatprep.subr.bf16.mxu0 0
    %1830 = vmatpush1.bf16.msra.mxu0 0
    %1831 = vmatprep.subr.bf16.mxu0 0
    %1832 = vmatpush1.bf16.msra.mxu0 0
    %1833 = vmatprep.mubr.bf16.mxu0 0
    %1834 = vmatmul.mubr.bf16.gmra.mrb[0].mxu0 %v1584
    %v1835 = vpop.f32.mrb[0].mxu0
    %v1836 = vadd.f32 %v1164, %v1835
    %v1837 = vpop.f32.mrb[0].mxu0
    %v1838 = vadd.f32 %v1166, %v1837
    %v1839 = vpop.f32.mrb[0].mxu0
    %v1840 = vadd.f32 %v1168, %v1839
    %v1841 = vpop.f32.mrb[0].mxu0
    %v1842 = vadd.f32 %v1170, %v1841
    %1843 = vdwg.mxu0
    %1844 = vmatprep.subr.bf16.mxu0 %v1468
    %1845 = vmatpush1.bf16.msra.mxu0 %v1467
    %1846 = vmatprep.subr.bf16.mxu0 %v1484
    %1847 = vmatpush1.bf16.msra.mxu0 %v1483
    %1848 = vmatprep.subr.bf16.mxu0 %v1500
    %1849 = vmatpush1.bf16.msra.mxu0 %v1499
    %1850 = vmatprep.subr.bf16.mxu0 %v1516
    %1851 = vmatpush1.bf16.msra.mxu0 %v1515
    %1852 = vmatprep.subr.bf16.mxu0 0
    %1853 = vmatpush1.bf16.msra.mxu0 0
    %1854 = vmatprep.subr.bf16.mxu0 0
    %1855 = vmatpush1.bf16.msra.mxu0 0
    %1856 = vmatprep.subr.bf16.mxu0 0
    %1857 = vmatpush1.bf16.msra.mxu0 0
    %1858 = vmatprep.subr.bf16.mxu0 0
    %1859 = vmatpush1.bf16.msra.mxu0 0
    %1860 = vmatprep.subr.bf16.mxu0 0
    %1861 = vmatpush1.bf16.msra.mxu0 0
    %1862 = vmatprep.subr.bf16.mxu0 0
    %1863 = vmatpush1.bf16.msra.mxu0 0
    %1864 = vmatprep.subr.bf16.mxu0 0
    %1865 = vmatpush1.bf16.msra.mxu0 0
    %1866 = vmatprep.subr.bf16.mxu0 0
    %1867 = vmatpush1.bf16.msra.mxu0 0
    %1868 = vmatprep.subr.bf16.mxu0 0
    %1869 = vmatpush1.bf16.msra.mxu0 0
    %1870 = vmatprep.subr.bf16.mxu0 0
    %1871 = vmatpush1.bf16.msra.mxu0 0
    %1872 = vmatprep.subr.bf16.mxu0 0
    %1873 = vmatpush1.bf16.msra.mxu0 0
    %1874 = vmatprep.subr.bf16.mxu0 0
    %1875 = vmatpush1.bf16.msra.mxu0 0
    %1876 = vmatprep.mubr.bf16.mxu0 0
    %1877 = vmatmul.mubr.bf16.gmra.mrb[0].mxu0 %v1584
    %v1878 = vpop.f32.mrb[0].mxu0
    %v1879 = vadd.f32 %v1207, %v1878
    %v1880 = vpop.f32.mrb[0].mxu0
    %v1881 = vadd.f32 %v1209, %v1880
    %v1882 = vpop.f32.mrb[0].mxu0
    %v1883 = vadd.f32 %v1211, %v1882
    %v1884 = vpop.f32.mrb[0].mxu0
    %v1885 = vadd.f32 %v1213, %v1884
    %1886 = vdwg.mxu0
    %1887 = vmatprep.subr.bf16.mxu0 %v1470
    %1888 = vmatpush1.bf16.msra.mxu0 %v1469
    %1889 = vmatprep.subr.bf16.mxu0 %v1486
    %1890 = vmatpush1.bf16.msra.mxu0 %v1485
    %1891 = vmatprep.subr.bf16.mxu0 %v1502
    %1892 = vmatpush1.bf16.msra.mxu0 %v1501
    %1893 = vmatprep.subr.bf16.mxu0 %v1518
    %1894 = vmatpush1.bf16.msra.mxu0 %v1517
    %1895 = vmatprep.subr.bf16.mxu0 0
    %1896 = vmatpush1.bf16.msra.mxu0 0
    %1897 = vmatprep.subr.bf16.mxu0 0
    %1898 = vmatpush1.bf16.msra.mxu0 0
    %1899 = vmatprep.subr.bf16.mxu0 0
    %1900 = vmatpush1.bf16.msra.mxu0 0
    %1901 = vmatprep.subr.bf16.mxu0 0
    %1902 = vmatpush1.bf16.msra.mxu0 0
    %1903 = vmatprep.subr.bf16.mxu0 0
    %1904 = vmatpush1.bf16.msra.mxu0 0
    %1905 = vmatprep.subr.bf16.mxu0 0
    %1906 = vmatpush1.bf16.msra.mxu0 0
    %1907 = vmatprep.subr.bf16.mxu0 0
    %1908 = vmatpush1.bf16.msra.mxu0 0
    %1909 = vmatprep.subr.bf16.mxu0 0
    %1910 = vmatpush1.bf16.msra.mxu0 0
    %1911 = vmatprep.subr.bf16.mxu0 0
    %1912 = vmatpush1.bf16.msra.mxu0 0
    %1913 = vmatprep.subr.bf16.mxu0 0
    %1914 = vmatpush1.bf16.msra.mxu0 0
    %1915 = vmatprep.subr.bf16.mxu0 0
    %1916 = vmatpush1.bf16.msra.mxu0 0
    %1917 = vmatprep.subr.bf16.mxu0 0
    %1918 = vmatpush1.bf16.msra.mxu0 0
    %1919 = vmatprep.mubr.bf16.mxu0 0
    %1920 = vmatmul.mubr.bf16.gmra.mrb[0].mxu0 %v1584
    %v1921 = vpop.f32.mrb[0].mxu0
    %v1922 = vadd.f32 %v1250, %v1921
    %v1923 = vpop.f32.mrb[0].mxu0
    %v1924 = vadd.f32 %v1252, %v1923
    %v1925 = vpop.f32.mrb[0].mxu0
    %v1926 = vadd.f32 %v1254, %v1925
    %v1927 = vpop.f32.mrb[0].mxu0
    %v1928 = vadd.f32 %v1256, %v1927
    %1929 = vdwg.mxu0
    %v1930 = vunpack.c.l.b16 %v582
    %v1931 = vunpack.c.l.b16 %v586
    %v1932 = vpack.c.b16 %v1931, %v1930
    %v1997 = vunpack.c.l.b16 %v213
    %v1998 = vunpack.c.h.b16 %v213
    %v1999 = vunpack.c.l.b16 %v214
    %v2000 = vunpack.c.h.b16 %v214
    %v2001 = vunpack.c.l.b16 %v215
    %v2002 = vunpack.c.h.b16 %v215
    %v2003 = vunpack.c.l.b16 %v216
    %v2004 = vunpack.c.h.b16 %v216
    %v2005 = vunpack.c.l.b16 %v217
    %v2006 = vunpack.c.h.b16 %v217
    %v2007 = vunpack.c.l.b16 %v218
    %v2008 = vunpack.c.h.b16 %v218
    %v2009 = vunpack.c.l.b16 %v219
    %v2010 = vunpack.c.h.b16 %v219
    %v2011 = vunpack.c.l.b16 %v220
    %v2012 = vunpack.c.h.b16 %v220
    %v2013 = vunpack.c.l.b16 %v221
    %v2014 = vunpack.c.h.b16 %v221
    %v2015 = vunpack.c.l.b16 %v222
    %v2016 = vunpack.c.h.b16 %v222
    %v2017 = vunpack.c.l.b16 %v223
    %v2018 = vunpack.c.h.b16 %v223
    %v2019 = vunpack.c.l.b16 %v224
    %v2020 = vunpack.c.h.b16 %v224
    %v2021 = vunpack.c.l.b16 %v225
    %v2022 = vunpack.c.h.b16 %v225
    %v2023 = vunpack.c.l.b16 %v226
    %v2024 = vunpack.c.h.b16 %v226
    %v2025 = vunpack.c.l.b16 %v227
    %v2026 = vunpack.c.h.b16 %v227
    %v2027 = vunpack.c.l.b16 %v228
    %v2028 = vunpack.c.h.b16 %v228
    %v2029 = vunpack.c.l.b16 %v229
    %v2030 = vunpack.c.h.b16 %v229
    %v2031 = vunpack.c.l.b16 %v230
    %v2032 = vunpack.c.h.b16 %v230
    %v2033 = vunpack.c.l.b16 %v231
    %v2034 = vunpack.c.h.b16 %v231
    %v2035 = vunpack.c.l.b16 %v232
    %v2036 = vunpack.c.h.b16 %v232
    %v2037 = vunpack.c.l.b16 %v233
    %v2038 = vunpack.c.h.b16 %v233
    %v2039 = vunpack.c.l.b16 %v234
    %v2040 = vunpack.c.h.b16 %v234
    %v2041 = vunpack.c.l.b16 %v235
    %v2042 = vunpack.c.h.b16 %v235
    %v2043 = vunpack.c.l.b16 %v236
    %v2044 = vunpack.c.h.b16 %v236
    %v2045 = vunpack.c.l.b16 %v237
    %v2046 = vunpack.c.h.b16 %v237
    %v2047 = vunpack.c.l.b16 %v238
    %v2048 = vunpack.c.h.b16 %v238
    %v2049 = vunpack.c.l.b16 %v239
    %v2050 = vunpack.c.h.b16 %v239
    %v2051 = vunpack.c.l.b16 %v240
    %v2052 = vunpack.c.h.b16 %v240
    %v2053 = vunpack.c.l.b16 %v241
    %v2054 = vunpack.c.h.b16 %v241
    %v2055 = vunpack.c.l.b16 %v242
    %v2056 = vunpack.c.h.b16 %v242
    %v2057 = vunpack.c.l.b16 %v243
    %v2058 = vunpack.c.h.b16 %v243
    %v2059 = vunpack.c.l.b16 %v244
    %v2060 = vunpack.c.h.b16 %v244
    %v2061 = vunpack.c.l.b16 %v245
    %v2062 = vunpack.c.h.b16 %v245
    %v2063 = vunpack.c.l.b16 %v246
    %v2064 = vunpack.c.h.b16 %v246
    %v2065 = vunpack.c.l.b16 %v247
    %v2066 = vunpack.c.h.b16 %v247
    %v2067 = vunpack.c.l.b16 %v248
    %v2068 = vunpack.c.h.b16 %v248
    %v2069 = vunpack.c.l.b16 %v249
    %v2070 = vunpack.c.h.b16 %v249
    %v2071 = vunpack.c.l.b16 %v250
    %v2072 = vunpack.c.h.b16 %v250
    %v2073 = vunpack.c.l.b16 %v251
    %v2074 = vunpack.c.h.b16 %v251
    %v2075 = vunpack.c.l.b16 %v252
    %v2076 = vunpack.c.h.b16 %v252
    %v2077 = vunpack.c.l.b16 %v253
    %v2078 = vunpack.c.h.b16 %v253
    %v2079 = vunpack.c.l.b16 %v254
    %v2080 = vunpack.c.h.b16 %v254
    %v2081 = vunpack.c.l.b16 %v255
    %v2082 = vunpack.c.h.b16 %v255
    %v2083 = vunpack.c.l.b16 %v256
    %v2084 = vunpack.c.h.b16 %v256
    %v2085 = vunpack.c.l.b16 %v257
    %v2086 = vunpack.c.h.b16 %v257
    %v2087 = vunpack.c.l.b16 %v258
    %v2088 = vunpack.c.h.b16 %v258
    %v2089 = vunpack.c.l.b16 %v259
    %v2090 = vunpack.c.h.b16 %v259
    %v2091 = vunpack.c.l.b16 %v260
    %v2092 = vunpack.c.h.b16 %v260
    %v2093 = vunpack.c.l.b16 %v261
    %v2094 = vunpack.c.h.b16 %v261
    %v2095 = vunpack.c.l.b16 %v262
    %v2096 = vunpack.c.h.b16 %v262
    %v2097 = vunpack.c.l.b16 %v263
    %v2098 = vunpack.c.h.b16 %v263
    %v2099 = vunpack.c.l.b16 %v264
    %v2100 = vunpack.c.h.b16 %v264
    %v2101 = vunpack.c.l.b16 %v265
    %v2102 = vunpack.c.h.b16 %v265
    %v2103 = vunpack.c.l.b16 %v266
    %v2104 = vunpack.c.h.b16 %v266
    %v2105 = vunpack.c.l.b16 %v267
    %v2106 = vunpack.c.h.b16 %v267
    %v2107 = vunpack.c.l.b16 %v268
    %v2108 = vunpack.c.h.b16 %v268
    %v2109 = vunpack.c.l.b16 %v269
    %v2110 = vunpack.c.h.b16 %v269
    %v2111 = vunpack.c.l.b16 %v270
    %v2112 = vunpack.c.h.b16 %v270
    %v2113 = vunpack.c.l.b16 %v271
    %v2114 = vunpack.c.h.b16 %v271
    %v2115 = vunpack.c.l.b16 %v272
    %v2116 = vunpack.c.h.b16 %v272
    %v2117 = vunpack.c.l.b16 %v273
    %v2118 = vunpack.c.h.b16 %v273
    %v2119 = vunpack.c.l.b16 %v274
    %v2120 = vunpack.c.h.b16 %v274
    %v2121 = vunpack.c.l.b16 %v275
    %v2122 = vunpack.c.h.b16 %v275
    %v2123 = vunpack.c.l.b16 %v276
    %v2124 = vunpack.c.h.b16 %v276
    %v2125 = vpack.c.b16 %v2013, %v1997
    %v2126 = vpack.c.b16 %v2014, %v1998
    %v2127 = vpack.c.b16 %v2015, %v1999
    %v2128 = vpack.c.b16 %v2016, %v2000
    %v2129 = vpack.c.b16 %v2017, %v2001
    %v2130 = vpack.c.b16 %v2018, %v2002
    %v2131 = vpack.c.b16 %v2019, %v2003
    %v2132 = vpack.c.b16 %v2020, %v2004
    %v2133 = vpack.c.b16 %v2021, %v2005
    %v2134 = vpack.c.b16 %v2022, %v2006
    %v2135 = vpack.c.b16 %v2023, %v2007
    %v2136 = vpack.c.b16 %v2024, %v2008
    %v2137 = vpack.c.b16 %v2025, %v2009
    %v2138 = vpack.c.b16 %v2026, %v2010
    %v2139 = vpack.c.b16 %v2027, %v2011
    %v2140 = vpack.c.b16 %v2028, %v2012
    %v2141 = vpack.c.b16 %v2045, %v2029
    %v2142 = vpack.c.b16 %v2046, %v2030
    %v2143 = vpack.c.b16 %v2047, %v2031
    %v2144 = vpack.c.b16 %v2048, %v2032
    %v2145 = vpack.c.b16 %v2049, %v2033
    %v2146 = vpack.c.b16 %v2050, %v2034
    %v2147 = vpack.c.b16 %v2051, %v2035
    %v2148 = vpack.c.b16 %v2052, %v2036
    %v2149 = vpack.c.b16 %v2053, %v2037
    %v2150 = vpack.c.b16 %v2054, %v2038
    %v2151 = vpack.c.b16 %v2055, %v2039
    %v2152 = vpack.c.b16 %v2056, %v2040
    %v2153 = vpack.c.b16 %v2057, %v2041
    %v2154 = vpack.c.b16 %v2058, %v2042
    %v2155 = vpack.c.b16 %v2059, %v2043
    %v2156 = vpack.c.b16 %v2060, %v2044
    %v2157 = vpack.c.b16 %v2077, %v2061
    %v2158 = vpack.c.b16 %v2078, %v2062
    %v2159 = vpack.c.b16 %v2079, %v2063
    %v2160 = vpack.c.b16 %v2080, %v2064
    %v2161 = vpack.c.b16 %v2081, %v2065
    %v2162 = vpack.c.b16 %v2082, %v2066
    %v2163 = vpack.c.b16 %v2083, %v2067
    %v2164 = vpack.c.b16 %v2084, %v2068
    %v2165 = vpack.c.b16 %v2085, %v2069
    %v2166 = vpack.c.b16 %v2086, %v2070
    %v2167 = vpack.c.b16 %v2087, %v2071
    %v2168 = vpack.c.b16 %v2088, %v2072
    %v2169 = vpack.c.b16 %v2089, %v2073
    %v2170 = vpack.c.b16 %v2090, %v2074
    %v2171 = vpack.c.b16 %v2091, %v2075
    %v2172 = vpack.c.b16 %v2092, %v2076
    %v2173 = vpack.c.b16 %v2109, %v2093
    %v2174 = vpack.c.b16 %v2110, %v2094
    %v2175 = vpack.c.b16 %v2111, %v2095
    %v2176 = vpack.c.b16 %v2112, %v2096
    %v2177 = vpack.c.b16 %v2113, %v2097
    %v2178 = vpack.c.b16 %v2114, %v2098
    %v2179 = vpack.c.b16 %v2115, %v2099
    %v2180 = vpack.c.b16 %v2116, %v2100
    %v2181 = vpack.c.b16 %v2117, %v2101
    %v2182 = vpack.c.b16 %v2118, %v2102
    %v2183 = vpack.c.b16 %v2119, %v2103
    %v2184 = vpack.c.b16 %v2120, %v2104
    %v2185 = vpack.c.b16 %v2121, %v2105
    %v2186 = vpack.c.b16 %v2122, %v2106
    %v2187 = vpack.c.b16 %v2123, %v2107
    %v2188 = vpack.c.b16 %v2124, %v2108
    %v2254 = vsel %vm910, %v1932, 0
    %2256 = vmatprep.subr.bf16.mxu0 %v2126
    %2257 = vmatpush1.bf16.msra.mxu0 %v2125
    %2258 = vmatprep.subr.bf16.mxu0 %v2142
    %2259 = vmatpush1.bf16.msra.mxu0 %v2141
    %2260 = vmatprep.subr.bf16.mxu0 %v2158
    %2261 = vmatpush1.bf16.msra.mxu0 %v2157
    %2262 = vmatprep.subr.bf16.mxu0 %v2174
    %2263 = vmatpush1.bf16.msra.mxu0 %v2173
    %2264 = vmatprep.subr.bf16.mxu0 0
    %2265 = vmatpush1.bf16.msra.mxu0 0
    %2266 = vmatprep.subr.bf16.mxu0 0
    %2267 = vmatpush1.bf16.msra.mxu0 0
    %2268 = vmatprep.subr.bf16.mxu0 0
    %2269 = vmatpush1.bf16.msra.mxu0 0
    %2270 = vmatprep.subr.bf16.mxu0 0
    %2271 = vmatpush1.bf16.msra.mxu0 0
    %2272 = vmatprep.subr.bf16.mxu0 0
    %2273 = vmatpush1.bf16.msra.mxu0 0
    %2274 = vmatprep.subr.bf16.mxu0 0
    %2275 = vmatpush1.bf16.msra.mxu0 0
    %2276 = vmatprep.subr.bf16.mxu0 0
    %2277 = vmatpush1.bf16.msra.mxu0 0
    %2278 = vmatprep.subr.bf16.mxu0 0
    %2279 = vmatpush1.bf16.msra.mxu0 0
    %2280 = vmatprep.subr.bf16.mxu0 0
    %2281 = vmatpush1.bf16.msra.mxu0 0
    %2282 = vmatprep.subr.bf16.mxu0 0
    %2283 = vmatpush1.bf16.msra.mxu0 0
    %2284 = vmatprep.subr.bf16.mxu0 0
    %2285 = vmatpush1.bf16.msra.mxu0 0
    %2286 = vmatprep.subr.bf16.mxu0 0
    %2287 = vmatpush1.bf16.msra.mxu0 0
    %2288 = vmatprep.mubr.bf16.mxu0 0
    %2289 = vmatmul.mubr.bf16.gmra.mrb[0].mxu0 %v2254
    %v2290 = vpop.f32.mrb[0].mxu0
    %v2291 = vadd.f32 0.0, %v2290
    %v2292 = vpop.f32.mrb[0].mxu0
    %v2293 = vadd.f32 0.0, %v2292
    %v2294 = vpop.f32.mrb[0].mxu0
    %v2295 = vadd.f32 0.0, %v2294
    %v2296 = vpop.f32.mrb[0].mxu0
    %v2297 = vadd.f32 0.0, %v2296
    %2298 = vdwg.mxu0
    %2299 = vmatprep.subr.bf16.mxu0 %v2128
    %2300 = vmatpush1.bf16.msra.mxu0 %v2127
    %2301 = vmatprep.subr.bf16.mxu0 %v2144
    %2302 = vmatpush1.bf16.msra.mxu0 %v2143
    %2303 = vmatprep.subr.bf16.mxu0 %v2160
    %2304 = vmatpush1.bf16.msra.mxu0 %v2159
    %2305 = vmatprep.subr.bf16.mxu0 %v2176
    %2306 = vmatpush1.bf16.msra.mxu0 %v2175
    %2307 = vmatprep.subr.bf16.mxu0 0
    %2308 = vmatpush1.bf16.msra.mxu0 0
    %2309 = vmatprep.subr.bf16.mxu0 0
    %2310 = vmatpush1.bf16.msra.mxu0 0
    %2311 = vmatprep.subr.bf16.mxu0 0
    %2312 = vmatpush1.bf16.msra.mxu0 0
    %2313 = vmatprep.subr.bf16.mxu0 0
    %2314 = vmatpush1.bf16.msra.mxu0 0
    %2315 = vmatprep.subr.bf16.mxu0 0
    %2316 = vmatpush1.bf16.msra.mxu0 0
    %2317 = vmatprep.subr.bf16.mxu0 0
    %2318 = vmatpush1.bf16.msra.mxu0 0
    %2319 = vmatprep.subr.bf16.mxu0 0
    %2320 = vmatpush1.bf16.msra.mxu0 0
    %2321 = vmatprep.subr.bf16.mxu0 0
    %2322 = vmatpush1.bf16.msra.mxu0 0
    %2323 = vmatprep.subr.bf16.mxu0 0
    %2324 = vmatpush1.bf16.msra.mxu0 0
    %2325 = vmatprep.subr.bf16.mxu0 0
    %2326 = vmatpush1.bf16.msra.mxu0 0
    %2327 = vmatprep.subr.bf16.mxu0 0
    %2328 = vmatpush1.bf16.msra.mxu0 0
    %2329 = vmatprep.subr.bf16.mxu0 0
    %2330 = vmatpush1.bf16.msra.mxu0 0
    %2331 = vmatprep.mubr.bf16.mxu0 0
    %2332 = vmatmul.mubr.bf16.gmra.mrb[0].mxu0 %v2254
    %v2333 = vpop.f32.mrb[0].mxu0
    %v2334 = vadd.f32 0.0, %v2333
    %v2335 = vpop.f32.mrb[0].mxu0
    %v2336 = vadd.f32 0.0, %v2335
    %v2337 = vpop.f32.mrb[0].mxu0
    %v2338 = vadd.f32 0.0, %v2337
    %v2339 = vpop.f32.mrb[0].mxu0
    %v2340 = vadd.f32 0.0, %v2339
    %2341 = vdwg.mxu0
    %2342 = vmatprep.subr.bf16.mxu0 %v2130
    %2343 = vmatpush1.bf16.msra.mxu0 %v2129
    %2344 = vmatprep.subr.bf16.mxu0 %v2146
    %2345 = vmatpush1.bf16.msra.mxu0 %v2145
    %2346 = vmatprep.subr.bf16.mxu0 %v2162
    %2347 = vmatpush1.bf16.msra.mxu0 %v2161
    %2348 = vmatprep.subr.bf16.mxu0 %v2178
    %2349 = vmatpush1.bf16.msra.mxu0 %v2177
    %2350 = vmatprep.subr.bf16.mxu0 0
    %2351 = vmatpush1.bf16.msra.mxu0 0
    %2352 = vmatprep.subr.bf16.mxu0 0
    %2353 = vmatpush1.bf16.msra.mxu0 0
    %2354 = vmatprep.subr.bf16.mxu0 0
    %2355 = vmatpush1.bf16.msra.mxu0 0
    %2356 = vmatprep.subr.bf16.mxu0 0
    %2357 = vmatpush1.bf16.msra.mxu0 0
    %2358 = vmatprep.subr.bf16.mxu0 0
    %2359 = vmatpush1.bf16.msra.mxu0 0
    %2360 = vmatprep.subr.bf16.mxu0 0
    %2361 = vmatpush1.bf16.msra.mxu0 0
    %2362 = vmatprep.subr.bf16.mxu0 0
    %2363 = vmatpush1.bf16.msra.mxu0 0
    %2364 = vmatprep.subr.bf16.mxu0 0
    %2365 = vmatpush1.bf16.msra.mxu0 0
    %2366 = vmatprep.subr.bf16.mxu0 0
    %2367 = vmatpush1.bf16.msra.mxu0 0
    %2368 = vmatprep.subr.bf16.mxu0 0
    %2369 = vmatpush1.bf16.msra.mxu0 0
    %2370 = vmatprep.subr.bf16.mxu0 0
    %2371 = vmatpush1.bf16.msra.mxu0 0
    %2372 = vmatprep.subr.bf16.mxu0 0
    %2373 = vmatpush1.bf16.msra.mxu0 0
    %2374 = vmatprep.mubr.bf16.mxu0 0
    %2375 = vmatmul.mubr.bf16.gmra.mrb[0].mxu0 %v2254
    %v2376 = vpop.f32.mrb[0].mxu0
    %v2377 = vadd.f32 0.0, %v2376
    %v2378 = vpop.f32.mrb[0].mxu0
    %v2379 = vadd.f32 0.0, %v2378
    %v2380 = vpop.f32.mrb[0].mxu0
    %v2381 = vadd.f32 0.0, %v2380
    %v2382 = vpop.f32.mrb[0].mxu0
    %v2383 = vadd.f32 0.0, %v2382
    %2384 = vdwg.mxu0
    %2385 = vmatprep.subr.bf16.mxu0 %v2132
    %2386 = vmatpush1.bf16.msra.mxu0 %v2131
    %2387 = vmatprep.subr.bf16.mxu0 %v2148
    %2388 = vmatpush1.bf16.msra.mxu0 %v2147
    %2389 = vmatprep.subr.bf16.mxu0 %v2164
    %2390 = vmatpush1.bf16.msra.mxu0 %v2163
    %2391 = vmatprep.subr.bf16.mxu0 %v2180
    %2392 = vmatpush1.bf16.msra.mxu0 %v2179
    %2393 = vmatprep.subr.bf16.mxu0 0
    %2394 = vmatpush1.bf16.msra.mxu0 0
    %2395 = vmatprep.subr.bf16.mxu0 0
    %2396 = vmatpush1.bf16.msra.mxu0 0
    %2397 = vmatprep.subr.bf16.mxu0 0
    %2398 = vmatpush1.bf16.msra.mxu0 0
    %2399 = vmatprep.subr.bf16.mxu0 0
    %2400 = vmatpush1.bf16.msra.mxu0 0
    %2401 = vmatprep.subr.bf16.mxu0 0
    %2402 = vmatpush1.bf16.msra.mxu0 0
    %2403 = vmatprep.subr.bf16.mxu0 0
    %2404 = vmatpush1.bf16.msra.mxu0 0
    %2405 = vmatprep.subr.bf16.mxu0 0
    %2406 = vmatpush1.bf16.msra.mxu0 0
    %2407 = vmatprep.subr.bf16.mxu0 0
    %2408 = vmatpush1.bf16.msra.mxu0 0
    %2409 = vmatprep.subr.bf16.mxu0 0
    %2410 = vmatpush1.bf16.msra.mxu0 0
    %2411 = vmatprep.subr.bf16.mxu0 0
    %2412 = vmatpush1.bf16.msra.mxu0 0
    %2413 = vmatprep.subr.bf16.mxu0 0
    %2414 = vmatpush1.bf16.msra.mxu0 0
    %2415 = vmatprep.subr.bf16.mxu0 0
    %2416 = vmatpush1.bf16.msra.mxu0 0
    %2417 = vmatprep.mubr.bf16.mxu0 0
    %2418 = vmatmul.mubr.bf16.gmra.mrb[0].mxu0 %v2254
    %v2419 = vpop.f32.mrb[0].mxu0
    %v2420 = vadd.f32 0.0, %v2419
    %v2421 = vpop.f32.mrb[0].mxu0
    %v2422 = vadd.f32 0.0, %v2421
    %v2423 = vpop.f32.mrb[0].mxu0
    %v2424 = vadd.f32 0.0, %v2423
    %v2425 = vpop.f32.mrb[0].mxu0
    %v2426 = vadd.f32 0.0, %v2425
    %2427 = vdwg.mxu0
    %2428 = vmatprep.subr.bf16.mxu0 %v2134
    %2429 = vmatpush1.bf16.msra.mxu0 %v2133
    %2430 = vmatprep.subr.bf16.mxu0 %v2150
    %2431 = vmatpush1.bf16.msra.mxu0 %v2149
    %2432 = vmatprep.subr.bf16.mxu0 %v2166
    %2433 = vmatpush1.bf16.msra.mxu0 %v2165
    %2434 = vmatprep.subr.bf16.mxu0 %v2182
    %2435 = vmatpush1.bf16.msra.mxu0 %v2181
    %2436 = vmatprep.subr.bf16.mxu0 0
    %2437 = vmatpush1.bf16.msra.mxu0 0
    %2438 = vmatprep.subr.bf16.mxu0 0
    %2439 = vmatpush1.bf16.msra.mxu0 0
    %2440 = vmatprep.subr.bf16.mxu0 0
    %2441 = vmatpush1.bf16.msra.mxu0 0
    %2442 = vmatprep.subr.bf16.mxu0 0
    %2443 = vmatpush1.bf16.msra.mxu0 0
    %2444 = vmatprep.subr.bf16.mxu0 0
    %2445 = vmatpush1.bf16.msra.mxu0 0
    %2446 = vmatprep.subr.bf16.mxu0 0
    %2447 = vmatpush1.bf16.msra.mxu0 0
    %2448 = vmatprep.subr.bf16.mxu0 0
    %2449 = vmatpush1.bf16.msra.mxu0 0
    %2450 = vmatprep.subr.bf16.mxu0 0
    %2451 = vmatpush1.bf16.msra.mxu0 0
    %2452 = vmatprep.subr.bf16.mxu0 0
    %2453 = vmatpush1.bf16.msra.mxu0 0
    %2454 = vmatprep.subr.bf16.mxu0 0
    %2455 = vmatpush1.bf16.msra.mxu0 0
    %2456 = vmatprep.subr.bf16.mxu0 0
    %2457 = vmatpush1.bf16.msra.mxu0 0
    %2458 = vmatprep.subr.bf16.mxu0 0
    %2459 = vmatpush1.bf16.msra.mxu0 0
    %2460 = vmatprep.mubr.bf16.mxu0 0
    %2461 = vmatmul.mubr.bf16.gmra.mrb[0].mxu0 %v2254
    %v2462 = vpop.f32.mrb[0].mxu0
    %v2463 = vadd.f32 0.0, %v2462
    %v2464 = vpop.f32.mrb[0].mxu0
    %v2465 = vadd.f32 0.0, %v2464
    %v2466 = vpop.f32.mrb[0].mxu0
    %v2467 = vadd.f32 0.0, %v2466
    %v2468 = vpop.f32.mrb[0].mxu0
    %v2469 = vadd.f32 0.0, %v2468
    %2470 = vdwg.mxu0
    %2471 = vmatprep.subr.bf16.mxu0 %v2136
    %2472 = vmatpush1.bf16.msra.mxu0 %v2135
    %2473 = vmatprep.subr.bf16.mxu0 %v2152
    %2474 = vmatpush1.bf16.msra.mxu0 %v2151
    %2475 = vmatprep.subr.bf16.mxu0 %v2168
    %2476 = vmatpush1.bf16.msra.mxu0 %v2167
    %2477 = vmatprep.subr.bf16.mxu0 %v2184
    %2478 = vmatpush1.bf16.msra.mxu0 %v2183
    %2479 = vmatprep.subr.bf16.mxu0 0
    %2480 = vmatpush1.bf16.msra.mxu0 0
    %2481 = vmatprep.subr.bf16.mxu0 0
    %2482 = vmatpush1.bf16.msra.mxu0 0
    %2483 = vmatprep.subr.bf16.mxu0 0
    %2484 = vmatpush1.bf16.msra.mxu0 0
    %2485 = vmatprep.subr.bf16.mxu0 0
    %2486 = vmatpush1.bf16.msra.mxu0 0
    %2487 = vmatprep.subr.bf16.mxu0 0
    %2488 = vmatpush1.bf16.msra.mxu0 0
    %2489 = vmatprep.subr.bf16.mxu0 0
    %2490 = vmatpush1.bf16.msra.mxu0 0
    %2491 = vmatprep.subr.bf16.mxu0 0
    %2492 = vmatpush1.bf16.msra.mxu0 0
    %2493 = vmatprep.subr.bf16.mxu0 0
    %2494 = vmatpush1.bf16.msra.mxu0 0
    %2495 = vmatprep.subr.bf16.mxu0 0
    %2496 = vmatpush1.bf16.msra.mxu0 0
    %2497 = vmatprep.subr.bf16.mxu0 0
    %2498 = vmatpush1.bf16.msra.mxu0 0
    %2499 = vmatprep.subr.bf16.mxu0 0
    %2500 = vmatpush1.bf16.msra.mxu0 0
    %2501 = vmatprep.subr.bf16.mxu0 0
    %2502 = vmatpush1.bf16.msra.mxu0 0
    %2503 = vmatprep.mubr.bf16.mxu0 0
    %2504 = vmatmul.mubr.bf16.gmra.mrb[0].mxu0 %v2254
    %v2505 = vpop.f32.mrb[0].mxu0
    %v2506 = vadd.f32 0.0, %v2505
    %v2507 = vpop.f32.mrb[0].mxu0
    %v2508 = vadd.f32 0.0, %v2507
    %v2509 = vpop.f32.mrb[0].mxu0
    %v2510 = vadd.f32 0.0, %v2509
    %v2511 = vpop.f32.mrb[0].mxu0
    %v2512 = vadd.f32 0.0, %v2511
    %2513 = vdwg.mxu0
    %2514 = vmatprep.subr.bf16.mxu0 %v2138
    %2515 = vmatpush1.bf16.msra.mxu0 %v2137
    %2516 = vmatprep.subr.bf16.mxu0 %v2154
    %2517 = vmatpush1.bf16.msra.mxu0 %v2153
    %2518 = vmatprep.subr.bf16.mxu0 %v2170
    %2519 = vmatpush1.bf16.msra.mxu0 %v2169
    %2520 = vmatprep.subr.bf16.mxu0 %v2186
    %2521 = vmatpush1.bf16.msra.mxu0 %v2185
    %2522 = vmatprep.subr.bf16.mxu0 0
    %2523 = vmatpush1.bf16.msra.mxu0 0
    %2524 = vmatprep.subr.bf16.mxu0 0
    %2525 = vmatpush1.bf16.msra.mxu0 0
    %2526 = vmatprep.subr.bf16.mxu0 0
    %2527 = vmatpush1.bf16.msra.mxu0 0
    %2528 = vmatprep.subr.bf16.mxu0 0
    %2529 = vmatpush1.bf16.msra.mxu0 0
    %2530 = vmatprep.subr.bf16.mxu0 0
    %2531 = vmatpush1.bf16.msra.mxu0 0
    %2532 = vmatprep.subr.bf16.mxu0 0
    %2533 = vmatpush1.bf16.msra.mxu0 0
    %2534 = vmatprep.subr.bf16.mxu0 0
    %2535 = vmatpush1.bf16.msra.mxu0 0
    %2536 = vmatprep.subr.bf16.mxu0 0
    %2537 = vmatpush1.bf16.msra.mxu0 0
    %2538 = vmatprep.subr.bf16.mxu0 0
    %2539 = vmatpush1.bf16.msra.mxu0 0
    %2540 = vmatprep.subr.bf16.mxu0 0
    %2541 = vmatpush1.bf16.msra.mxu0 0
    %2542 = vmatprep.subr.bf16.mxu0 0
    %2543 = vmatpush1.bf16.msra.mxu0 0
    %2544 = vmatprep.subr.bf16.mxu0 0
    %2545 = vmatpush1.bf16.msra.mxu0 0
    %2546 = vmatprep.mubr.bf16.mxu0 0
    %2547 = vmatmul.mubr.bf16.gmra.mrb[0].mxu0 %v2254
    %v2548 = vpop.f32.mrb[0].mxu0
    %v2549 = vadd.f32 0.0, %v2548
    %v2550 = vpop.f32.mrb[0].mxu0
    %v2551 = vadd.f32 0.0, %v2550
    %v2552 = vpop.f32.mrb[0].mxu0
    %v2553 = vadd.f32 0.0, %v2552
    %v2554 = vpop.f32.mrb[0].mxu0
    %v2555 = vadd.f32 0.0, %v2554
    %2556 = vdwg.mxu0
    %2557 = vmatprep.subr.bf16.mxu0 %v2140
    %2558 = vmatpush1.bf16.msra.mxu0 %v2139
    %2559 = vmatprep.subr.bf16.mxu0 %v2156
    %2560 = vmatpush1.bf16.msra.mxu0 %v2155
    %2561 = vmatprep.subr.bf16.mxu0 %v2172
    %2562 = vmatpush1.bf16.msra.mxu0 %v2171
    %2563 = vmatprep.subr.bf16.mxu0 %v2188
    %2564 = vmatpush1.bf16.msra.mxu0 %v2187
    %2565 = vmatprep.subr.bf16.mxu0 0
    %2566 = vmatpush1.bf16.msra.mxu0 0
    %2567 = vmatprep.subr.bf16.mxu0 0
    %2568 = vmatpush1.bf16.msra.mxu0 0
    %2569 = vmatprep.subr.bf16.mxu0 0
    %2570 = vmatpush1.bf16.msra.mxu0 0
    %2571 = vmatprep.subr.bf16.mxu0 0
    %2572 = vmatpush1.bf16.msra.mxu0 0
    %2573 = vmatprep.subr.bf16.mxu0 0
    %2574 = vmatpush1.bf16.msra.mxu0 0
    %2575 = vmatprep.subr.bf16.mxu0 0
    %2576 = vmatpush1.bf16.msra.mxu0 0
    %2577 = vmatprep.subr.bf16.mxu0 0
    %2578 = vmatpush1.bf16.msra.mxu0 0
    %2579 = vmatprep.subr.bf16.mxu0 0
    %2580 = vmatpush1.bf16.msra.mxu0 0
    %2581 = vmatprep.subr.bf16.mxu0 0
    %2582 = vmatpush1.bf16.msra.mxu0 0
    %2583 = vmatprep.subr.bf16.mxu0 0
    %2584 = vmatpush1.bf16.msra.mxu0 0
    %2585 = vmatprep.subr.bf16.mxu0 0
    %2586 = vmatpush1.bf16.msra.mxu0 0
    %2587 = vmatprep.subr.bf16.mxu0 0
    %2588 = vmatpush1.bf16.msra.mxu0 0
    %2589 = vmatprep.mubr.bf16.mxu0 0
    %2590 = vmatmul.mubr.bf16.gmra.mrb[0].mxu0 %v2254
    %v2591 = vpop.f32.mrb[0].mxu0
    %v2592 = vadd.f32 0.0, %v2591
    %v2593 = vpop.f32.mrb[0].mxu0
    %v2594 = vadd.f32 0.0, %v2593
    %v2595 = vpop.f32.mrb[0].mxu0
    %v2596 = vadd.f32 0.0, %v2595
    %v2597 = vpop.f32.mrb[0].mxu0
    %v2598 = vadd.f32 0.0, %v2597
    %2599 = vdwg.mxu0
    %v2600 = vadd.f32 %v1621, %v2291
    %v2601 = vadd.f32 %v1623, %v2293
    %v2602 = vadd.f32 %v1664, %v2334
    %v2603 = vadd.f32 %v1666, %v2336
    %v2604 = vadd.f32 %v1707, %v2377
    %v2605 = vadd.f32 %v1709, %v2379
    %v2606 = vadd.f32 %v1750, %v2420
    %v2607 = vadd.f32 %v1752, %v2422
    %v2608 = vadd.f32 %v1793, %v2463
    %v2609 = vadd.f32 %v1795, %v2465
    %v2610 = vadd.f32 %v1836, %v2506
    %v2611 = vadd.f32 %v1838, %v2508
    %v2612 = vadd.f32 %v1879, %v2549
    %v2613 = vadd.f32 %v1881, %v2551
    %v2614 = vadd.f32 %v1922, %v2592
    %v2615 = vadd.f32 %v1924, %v2594
    %v2616 = vadd.f32 %v1625, %v2295
    %v2617 = vadd.f32 %v1627, %v2297
    %v2618 = vadd.f32 %v1668, %v2338
    %v2619 = vadd.f32 %v1670, %v2340
    %v2620 = vadd.f32 %v1711, %v2381
    %v2621 = vadd.f32 %v1713, %v2383
    %v2622 = vadd.f32 %v1754, %v2424
    %v2623 = vadd.f32 %v1756, %v2426
    %v2624 = vadd.f32 %v1797, %v2467
    %v2625 = vadd.f32 %v1799, %v2469
    %v2626 = vadd.f32 %v1840, %v2510
    %v2627 = vadd.f32 %v1842, %v2512
    %v2628 = vadd.f32 %v1883, %v2553
    %v2629 = vadd.f32 %v1885, %v2555
    %v2630 = vadd.f32 %v1926, %v2596
    %v2631 = vadd.f32 %v1928, %v2598
    %v2634 = vlaneseq
    %v2635 = vshrl.u32 %v2634, 7
    %v2636 = vsub.s32 0, %v2635
    %v2637 = vrot.slane %v277, %v2636
    %v2638 = vlaneseq
    %v2639 = vshrl.u32 %v2638, 7
    %v2640 = vsub.s32 1, %v2639
    %v2641 = vrot.slane %v277, %v2640
    %v2642 = vlaneseq
    %v2643 = vshrl.u32 %v2642, 7
    %v2644 = vsub.s32 2, %v2643
    %v2645 = vrot.slane %v277, %v2644
    %v2646 = vlaneseq
    %v2647 = vshrl.u32 %v2646, 7
    %v2648 = vsub.s32 3, %v2647
    %v2649 = vrot.slane %v277, %v2648
    %v2650 = vlaneseq
    %v2651 = vshrl.u32 %v2650, 7
    %v2652 = vsub.s32 4, %v2651
    %v2653 = vrot.slane %v277, %v2652
    %v2654 = vlaneseq
    %v2655 = vshrl.u32 %v2654, 7
    %v2656 = vsub.s32 5, %v2655
    %v2657 = vrot.slane %v277, %v2656
    %v2658 = vlaneseq
    %v2659 = vshrl.u32 %v2658, 7
    %v2660 = vsub.s32 6, %v2659
    %v2661 = vrot.slane %v277, %v2660
    %v2662 = vlaneseq
    %v2663 = vshrl.u32 %v2662, 7
    %v2664 = vsub.s32 7, %v2663
    %v2665 = vrot.slane %v277, %v2664
    %v2666 = vlaneseq
    %v2667 = vshrl.u32 %v2666, 7
    %v2668 = vsub.s32 0, %v2667
    %v2669 = vrot.slane %v278, %v2668
    %v2670 = vlaneseq
    %v2671 = vshrl.u32 %v2670, 7
    %v2672 = vsub.s32 1, %v2671
    %v2673 = vrot.slane %v278, %v2672
    %v2674 = vlaneseq
    %v2675 = vshrl.u32 %v2674, 7
    %v2676 = vsub.s32 2, %v2675
    %v2677 = vrot.slane %v278, %v2676
    %v2678 = vlaneseq
    %v2679 = vshrl.u32 %v2678, 7
    %v2680 = vsub.s32 3, %v2679
    %v2681 = vrot.slane %v278, %v2680
    %v2682 = vlaneseq
    %v2683 = vshrl.u32 %v2682, 7
    %v2684 = vsub.s32 4, %v2683
    %v2685 = vrot.slane %v278, %v2684
    %v2686 = vlaneseq
    %v2687 = vshrl.u32 %v2686, 7
    %v2688 = vsub.s32 5, %v2687
    %v2689 = vrot.slane %v278, %v2688
    %v2690 = vlaneseq
    %v2691 = vshrl.u32 %v2690, 7
    %v2692 = vsub.s32 6, %v2691
    %v2693 = vrot.slane %v278, %v2692
    %v2694 = vlaneseq
    %v2695 = vshrl.u32 %v2694, 7
    %v2696 = vsub.s32 7, %v2695
    %v2697 = vrot.slane %v278, %v2696
    %v2714 = vadd.f32 %v2600, %v2637
    %v2715 = vadd.f32 %v2601, %v2641
    %v2716 = vadd.f32 %v2602, %v2645
    %v2717 = vadd.f32 %v2603, %v2649
    %v2718 = vadd.f32 %v2604, %v2653
    %v2719 = vadd.f32 %v2605, %v2657
    %v2720 = vadd.f32 %v2606, %v2661
    %v2721 = vadd.f32 %v2607, %v2665
    %v2722 = vadd.f32 %v2608, %v2669
    %v2723 = vadd.f32 %v2609, %v2673
    %v2724 = vadd.f32 %v2610, %v2677
    %v2725 = vadd.f32 %v2611, %v2681
    %v2726 = vadd.f32 %v2612, %v2685
    %v2727 = vadd.f32 %v2613, %v2689
    %v2728 = vadd.f32 %v2614, %v2693
    %v2729 = vadd.f32 %v2615, %v2697
    %v2730 = vadd.f32 %v2616, %v2637
    %v2731 = vadd.f32 %v2617, %v2641
    %v2732 = vadd.f32 %v2618, %v2645
    %v2733 = vadd.f32 %v2619, %v2649
    %v2734 = vadd.f32 %v2620, %v2653
    %v2735 = vadd.f32 %v2621, %v2657
    %v2736 = vadd.f32 %v2622, %v2661
    %v2737 = vadd.f32 %v2623, %v2665
    %v2738 = vadd.f32 %v2624, %v2669
    %v2739 = vadd.f32 %v2625, %v2673
    %v2740 = vadd.f32 %v2626, %v2677
    %v2741 = vadd.f32 %v2627, %v2681
    %v2742 = vadd.f32 %v2628, %v2685
    %v2743 = vadd.f32 %v2629, %v2689
    %v2744 = vadd.f32 %v2630, %v2693
    %v2745 = vadd.f32 %v2631, %v2697
    %v2746 = vmax.f32 %v2714, 0.0
    %v2747 = vmax.f32 %v2715, 0.0
    %v2748 = vmax.f32 %v2716, 0.0
    %v2749 = vmax.f32 %v2717, 0.0
    %v2750 = vmax.f32 %v2718, 0.0
    %v2751 = vmax.f32 %v2719, 0.0
    %v2752 = vmax.f32 %v2720, 0.0
    %v2753 = vmax.f32 %v2721, 0.0
    %v2754 = vmax.f32 %v2722, 0.0
    %v2755 = vmax.f32 %v2723, 0.0
    %v2756 = vmax.f32 %v2724, 0.0
    %v2757 = vmax.f32 %v2725, 0.0
    %v2758 = vmax.f32 %v2726, 0.0
    %v2759 = vmax.f32 %v2727, 0.0
    %v2760 = vmax.f32 %v2728, 0.0
    %v2761 = vmax.f32 %v2729, 0.0
    %v2762 = vmax.f32 %v2730, 0.0
    %v2763 = vmax.f32 %v2731, 0.0
    %v2764 = vmax.f32 %v2732, 0.0
    %v2765 = vmax.f32 %v2733, 0.0
    %v2766 = vmax.f32 %v2734, 0.0
    %v2767 = vmax.f32 %v2735, 0.0
    %v2768 = vmax.f32 %v2736, 0.0
    %v2769 = vmax.f32 %v2737, 0.0
    %v2770 = vmax.f32 %v2738, 0.0
    %v2771 = vmax.f32 %v2739, 0.0
    %v2772 = vmax.f32 %v2740, 0.0
    %v2773 = vmax.f32 %v2741, 0.0
    %v2774 = vmax.f32 %v2742, 0.0
    %v2775 = vmax.f32 %v2743, 0.0
    %v2776 = vmax.f32 %v2744, 0.0
    %v2777 = vmax.f32 %v2745, 0.0
    %2778 = vmatprep.subr.mxu0 0.0
    %2779 = vmatpush1.msra.mxu0 %v279
    %2780 = vmatprep.subr.mxu0 0.0
    %2781 = vmatpush1.msra.mxu0 %v280
    %2782 = vmatprep.subr.mxu0 0.0
    %2783 = vmatpush1.msra.mxu0 %v281
    %2784 = vmatprep.subr.mxu0 0.0
    %2785 = vmatpush1.msra.mxu0 %v282
    %2786 = vmatprep.subr.mxu0 0.0
    %2787 = vmatpush1.msra.mxu0 %v283
    %2788 = vmatprep.subr.mxu0 0.0
    %2789 = vmatpush1.msra.mxu0 %v284
    %2790 = vmatprep.subr.mxu0 0.0
    %2791 = vmatpush1.msra.mxu0 %v285
    %2792 = vmatprep.subr.mxu0 0.0
    %2793 = vmatpush1.msra.mxu0 %v286
    %2794 = vmatprep.subr.mxu0 0.0
    %2795 = vmatpush1.msra.mxu0 %v287
    %2796 = vmatprep.subr.mxu0 0.0
    %2797 = vmatpush1.msra.mxu0 %v288
    %2798 = vmatprep.subr.mxu0 0.0
    %2799 = vmatpush1.msra.mxu0 %v289
    %2800 = vmatprep.subr.mxu0 0.0
    %2801 = vmatpush1.msra.mxu0 %v290
    %2802 = vmatprep.subr.mxu0 0.0
    %2803 = vmatpush1.msra.mxu0 %v291
    %2804 = vmatprep.subr.mxu0 0.0
    %2805 = vmatpush1.msra.mxu0 %v292
    %2806 = vmatprep.subr.mxu0 0.0
    %2807 = vmatpush1.msra.mxu0 %v293
    %2808 = vmatprep.subr.mxu0 0.0
    %2809 = vmatpush1.msra.mxu0 %v294
    %2810 = vmatprep.subr.mxu0 0.0
    %2811 = vmatpush1.msra.mxu0 %v295
    %2812 = vmatprep.subr.mxu0 0.0
    %2813 = vmatpush1.msra.mxu0 %v296
    %2814 = vmatprep.subr.mxu0 0.0
    %2815 = vmatpush1.msra.mxu0 %v297
    %2816 = vmatprep.subr.mxu0 0.0
    %2817 = vmatpush1.msra.mxu0 %v298
    %2818 = vmatprep.subr.mxu0 0.0
    %2819 = vmatpush1.msra.mxu0 %v299
    %2820 = vmatprep.subr.mxu0 0.0
    %2821 = vmatpush1.msra.mxu0 %v300
    %2822 = vmatprep.subr.mxu0 0.0
    %2823 = vmatpush1.msra.mxu0 %v301
    %2824 = vmatprep.subr.mxu0 0.0
    %2825 = vmatpush1.msra.mxu0 %v302
    %2826 = vmatprep.subr.mxu0 0.0
    %2827 = vmatpush1.msra.mxu0 %v303
    %2828 = vmatprep.subr.mxu0 0.0
    %2829 = vmatpush1.msra.mxu0 %v304
    %2830 = vmatprep.subr.mxu0 0.0
    %2831 = vmatpush1.msra.mxu0 %v305
    %2832 = vmatprep.subr.mxu0 0.0
    %2833 = vmatpush1.msra.mxu0 %v306
    %2834 = vmatprep.subr.mxu0 0.0
    %2835 = vmatpush1.msra.mxu0 %v307
    %2836 = vmatprep.subr.mxu0 0.0
    %2837 = vmatpush1.msra.mxu0 %v308
    %2838 = vmatprep.subr.mxu0 0.0
    %2839 = vmatpush1.msra.mxu0 %v309
    %2840 = vmatprep.subr.mxu0 0.0
    %2841 = vmatpush1.msra.mxu0 %v310
    %2842 = vmatprep.mubr.f32.mxu0 %v2747
    %2843 = vmatmul.mubr.f32.gmra.mrb[0].mxu0 %v2746
    %v2844 = vpop.f32.mrb[0].mxu0
    %v2845 = vadd.f32 0.0, %v2844
    %v2846 = vpop.f32.mrb[0].mxu0
    %2847 = vmatprep.mubr.f32.mxu0 %v2763
    %2848 = vmatmul.mubr.f32.gmra.mrb[0].mxu0 %v2762
    %v2849 = vpop.f32.mrb[0].mxu0
    %v2850 = vadd.f32 0.0, %v2849
    %v2851 = vpop.f32.mrb[0].mxu0
    %2852 = vdwg.mxu0
    %2853 = vmatprep.subr.mxu0 0.0
    %2854 = vmatpush1.msra.mxu0 %v311
    %2855 = vmatprep.subr.mxu0 0.0
    %2856 = vmatpush1.msra.mxu0 %v312
    %2857 = vmatprep.subr.mxu0 0.0
    %2858 = vmatpush1.msra.mxu0 %v313
    %2859 = vmatprep.subr.mxu0 0.0
    %2860 = vmatpush1.msra.mxu0 %v314
    %2861 = vmatprep.subr.mxu0 0.0
    %2862 = vmatpush1.msra.mxu0 %v315
    %2863 = vmatprep.subr.mxu0 0.0
    %2864 = vmatpush1.msra.mxu0 %v316
    %2865 = vmatprep.subr.mxu0 0.0
    %2866 = vmatpush1.msra.mxu0 %v317
    %2867 = vmatprep.subr.mxu0 0.0
    %2868 = vmatpush1.msra.mxu0 %v318
    %2869 = vmatprep.subr.mxu0 0.0
    %2870 = vmatpush1.msra.mxu0 %v319
    %2871 = vmatprep.subr.mxu0 0.0
    %2872 = vmatpush1.msra.mxu0 %v320
    %2873 = vmatprep.subr.mxu0 0.0
    %2874 = vmatpush1.msra.mxu0 %v321
    %2875 = vmatprep.subr.mxu0 0.0
    %2876 = vmatpush1.msra.mxu0 %v322
    %2877 = vmatprep.subr.mxu0 0.0
    %2878 = vmatpush1.msra.mxu0 %v323
    %2879 = vmatprep.subr.mxu0 0.0
    %2880 = vmatpush1.msra.mxu0 %v324
    %2881 = vmatprep.subr.mxu0 0.0
    %2882 = vmatpush1.msra.mxu0 %v325
    %2883 = vmatprep.subr.mxu0 0.0
    %2884 = vmatpush1.msra.mxu0 %v326
    %2885 = vmatprep.subr.mxu0 0.0
    %2886 = vmatpush1.msra.mxu0 %v327
    %2887 = vmatprep.subr.mxu0 0.0
    %2888 = vmatpush1.msra.mxu0 %v328
    %2889 = vmatprep.subr.mxu0 0.0
    %2890 = vmatpush1.msra.mxu0 %v329
    %2891 = vmatprep.subr.mxu0 0.0
    %2892 = vmatpush1.msra.mxu0 %v330
    %2893 = vmatprep.subr.mxu0 0.0
    %2894 = vmatpush1.msra.mxu0 %v331
    %2895 = vmatprep.subr.mxu0 0.0
    %2896 = vmatpush1.msra.mxu0 %v332
    %2897 = vmatprep.subr.mxu0 0.0
    %2898 = vmatpush1.msra.mxu0 %v333
    %2899 = vmatprep.subr.mxu0 0.0
    %2900 = vmatpush1.msra.mxu0 %v334
    %2901 = vmatprep.subr.mxu0 0.0
    %2902 = vmatpush1.msra.mxu0 %v335
    %2903 = vmatprep.subr.mxu0 0.0
    %2904 = vmatpush1.msra.mxu0 %v336
    %2905 = vmatprep.subr.mxu0 0.0
    %2906 = vmatpush1.msra.mxu0 %v337
    %2907 = vmatprep.subr.mxu0 0.0
    %2908 = vmatpush1.msra.mxu0 %v338
    %2909 = vmatprep.subr.mxu0 0.0
    %2910 = vmatpush1.msra.mxu0 %v339
    %2911 = vmatprep.subr.mxu0 0.0
    %2912 = vmatpush1.msra.mxu0 %v340
    %2913 = vmatprep.subr.mxu0 0.0
    %2914 = vmatpush1.msra.mxu0 %v341
    %2915 = vmatprep.subr.mxu0 0.0
    %2916 = vmatpush1.msra.mxu0 %v342
    %2917 = vmatprep.mubr.f32.mxu0 %v2749
    %2918 = vmatmul.mubr.f32.gmra.mrb[0].mxu0 %v2748
    %v2919 = vpop.f32.mrb[0].mxu0
    %v2920 = vadd.f32 %v2845, %v2919
    %v2921 = vpop.f32.mrb[0].mxu0
    %2922 = vmatprep.mubr.f32.mxu0 %v2765
    %2923 = vmatmul.mubr.f32.gmra.mrb[0].mxu0 %v2764
    %v2924 = vpop.f32.mrb[0].mxu0
    %v2925 = vadd.f32 %v2850, %v2924
    %v2926 = vpop.f32.mrb[0].mxu0
    %2927 = vdwg.mxu0
    %2928 = vmatprep.subr.mxu0 0.0
    %2929 = vmatpush1.msra.mxu0 %v343
    %2930 = vmatprep.subr.mxu0 0.0
    %2931 = vmatpush1.msra.mxu0 %v344
    %2932 = vmatprep.subr.mxu0 0.0
    %2933 = vmatpush1.msra.mxu0 %v345
    %2934 = vmatprep.subr.mxu0 0.0
    %2935 = vmatpush1.msra.mxu0 %v346
    %2936 = vmatprep.subr.mxu0 0.0
    %2937 = vmatpush1.msra.mxu0 %v347
    %2938 = vmatprep.subr.mxu0 0.0
    %2939 = vmatpush1.msra.mxu0 %v348
    %2940 = vmatprep.subr.mxu0 0.0
    %2941 = vmatpush1.msra.mxu0 %v349
    %2942 = vmatprep.subr.mxu0 0.0
    %2943 = vmatpush1.msra.mxu0 %v350
    %2944 = vmatprep.subr.mxu0 0.0
    %2945 = vmatpush1.msra.mxu0 %v351
    %2946 = vmatprep.subr.mxu0 0.0
    %2947 = vmatpush1.msra.mxu0 %v352
    %2948 = vmatprep.subr.mxu0 0.0
    %2949 = vmatpush1.msra.mxu0 %v353
    %2950 = vmatprep.subr.mxu0 0.0
    %2951 = vmatpush1.msra.mxu0 %v354
    %2952 = vmatprep.subr.mxu0 0.0
    %2953 = vmatpush1.msra.mxu0 %v355
    %2954 = vmatprep.subr.mxu0 0.0
    %2955 = vmatpush1.msra.mxu0 %v356
    %2956 = vmatprep.subr.mxu0 0.0
    %2957 = vmatpush1.msra.mxu0 %v357
    %2958 = vmatprep.subr.mxu0 0.0
    %2959 = vmatpush1.msra.mxu0 %v358
    %2960 = vmatprep.subr.mxu0 0.0
    %2961 = vmatpush1.msra.mxu0 %v359
    %2962 = vmatprep.subr.mxu0 0.0
    %2963 = vmatpush1.msra.mxu0 %v360
    %2964 = vmatprep.subr.mxu0 0.0
    %2965 = vmatpush1.msra.mxu0 %v361
    %2966 = vmatprep.subr.mxu0 0.0
    %2967 = vmatpush1.msra.mxu0 %v362
    %2968 = vmatprep.subr.mxu0 0.0
    %2969 = vmatpush1.msra.mxu0 %v363
    %2970 = vmatprep.subr.mxu0 0.0
    %2971 = vmatpush1.msra.mxu0 %v364
    %2972 = vmatprep.subr.mxu0 0.0
    %2973 = vmatpush1.msra.mxu0 %v365
    %2974 = vmatprep.subr.mxu0 0.0
    %2975 = vmatpush1.msra.mxu0 %v366
    %2976 = vmatprep.subr.mxu0 0.0
    %2977 = vmatpush1.msra.mxu0 %v367
    %2978 = vmatprep.subr.mxu0 0.0
    %2979 = vmatpush1.msra.mxu0 %v368
    %2980 = vmatprep.subr.mxu0 0.0
    %2981 = vmatpush1.msra.mxu0 %v369
    %2982 = vmatprep.subr.mxu0 0.0
    %2983 = vmatpush1.msra.mxu0 %v370
    %2984 = vmatprep.subr.mxu0 0.0
    %2985 = vmatpush1.msra.mxu0 %v371
    %2986 = vmatprep.subr.mxu0 0.0
    %2987 = vmatpush1.msra.mxu0 %v372
    %2988 = vmatprep.subr.mxu0 0.0
    %2989 = vmatpush1.msra.mxu0 %v373
    %2990 = vmatprep.subr.mxu0 0.0
    %2991 = vmatpush1.msra.mxu0 %v374
    %2992 = vmatprep.mubr.f32.mxu0 %v2751
    %2993 = vmatmul.mubr.f32.gmra.mrb[0].mxu0 %v2750
    %v2994 = vpop.f32.mrb[0].mxu0
    %v2995 = vadd.f32 %v2920, %v2994
    %v2996 = vpop.f32.mrb[0].mxu0
    %2997 = vmatprep.mubr.f32.mxu0 %v2767
    %2998 = vmatmul.mubr.f32.gmra.mrb[0].mxu0 %v2766
    %v2999 = vpop.f32.mrb[0].mxu0
    %v3000 = vadd.f32 %v2925, %v2999
    %v3001 = vpop.f32.mrb[0].mxu0
    %3002 = vdwg.mxu0
    %3003 = vmatprep.subr.mxu0 0.0
    %3004 = vmatpush1.msra.mxu0 %v375
    %3005 = vmatprep.subr.mxu0 0.0
    %3006 = vmatpush1.msra.mxu0 %v376
    %3007 = vmatprep.subr.mxu0 0.0
    %3008 = vmatpush1.msra.mxu0 %v377
    %3009 = vmatprep.subr.mxu0 0.0
    %3010 = vmatpush1.msra.mxu0 %v378
    %3011 = vmatprep.subr.mxu0 0.0
    %3012 = vmatpush1.msra.mxu0 %v379
    %3013 = vmatprep.subr.mxu0 0.0
    %3014 = vmatpush1.msra.mxu0 %v380
    %3015 = vmatprep.subr.mxu0 0.0
    %3016 = vmatpush1.msra.mxu0 %v381
    %3017 = vmatprep.subr.mxu0 0.0
    %3018 = vmatpush1.msra.mxu0 %v382
    %3019 = vmatprep.subr.mxu0 0.0
    %3020 = vmatpush1.msra.mxu0 %v383
    %3021 = vmatprep.subr.mxu0 0.0
    %3022 = vmatpush1.msra.mxu0 %v384
    %3023 = vmatprep.subr.mxu0 0.0
    %3024 = vmatpush1.msra.mxu0 %v385
    %3025 = vmatprep.subr.mxu0 0.0
    %3026 = vmatpush1.msra.mxu0 %v386
    %3027 = vmatprep.subr.mxu0 0.0
    %3028 = vmatpush1.msra.mxu0 %v387
    %3029 = vmatprep.subr.mxu0 0.0
    %3030 = vmatpush1.msra.mxu0 %v388
    %3031 = vmatprep.subr.mxu0 0.0
    %3032 = vmatpush1.msra.mxu0 %v389
    %3033 = vmatprep.subr.mxu0 0.0
    %3034 = vmatpush1.msra.mxu0 %v390
    %3035 = vmatprep.subr.mxu0 0.0
    %3036 = vmatpush1.msra.mxu0 %v391
    %3037 = vmatprep.subr.mxu0 0.0
    %3038 = vmatpush1.msra.mxu0 %v392
    %3039 = vmatprep.subr.mxu0 0.0
    %3040 = vmatpush1.msra.mxu0 %v393
    %3041 = vmatprep.subr.mxu0 0.0
    %3042 = vmatpush1.msra.mxu0 %v394
    %3043 = vmatprep.subr.mxu0 0.0
    %3044 = vmatpush1.msra.mxu0 %v395
    %3045 = vmatprep.subr.mxu0 0.0
    %3046 = vmatpush1.msra.mxu0 %v396
    %3047 = vmatprep.subr.mxu0 0.0
    %3048 = vmatpush1.msra.mxu0 %v397
    %3049 = vmatprep.subr.mxu0 0.0
    %3050 = vmatpush1.msra.mxu0 %v398
    %3051 = vmatprep.subr.mxu0 0.0
    %3052 = vmatpush1.msra.mxu0 %v399
    %3053 = vmatprep.subr.mxu0 0.0
    %3054 = vmatpush1.msra.mxu0 %v400
    %3055 = vmatprep.subr.mxu0 0.0
    %3056 = vmatpush1.msra.mxu0 %v401
    %3057 = vmatprep.subr.mxu0 0.0
    %3058 = vmatpush1.msra.mxu0 %v402
    %3059 = vmatprep.subr.mxu0 0.0
    %3060 = vmatpush1.msra.mxu0 %v403
    %3061 = vmatprep.subr.mxu0 0.0
    %3062 = vmatpush1.msra.mxu0 %v404
    %3063 = vmatprep.subr.mxu0 0.0
    %3064 = vmatpush1.msra.mxu0 %v405
    %3065 = vmatprep.subr.mxu0 0.0
    %3066 = vmatpush1.msra.mxu0 %v406
    %3067 = vmatprep.mubr.f32.mxu0 %v2753
    %3068 = vmatmul.mubr.f32.gmra.mrb[0].mxu0 %v2752
    %v3069 = vpop.f32.mrb[0].mxu0
    %v3070 = vadd.f32 %v2995, %v3069
    %v3071 = vpop.f32.mrb[0].mxu0
    %3072 = vmatprep.mubr.f32.mxu0 %v2769
    %3073 = vmatmul.mubr.f32.gmra.mrb[0].mxu0 %v2768
    %v3074 = vpop.f32.mrb[0].mxu0
    %v3075 = vadd.f32 %v3000, %v3074
    %v3076 = vpop.f32.mrb[0].mxu0
    %3077 = vdwg.mxu0
    %3078 = vmatprep.subr.mxu0 0.0
    %3079 = vmatpush1.msra.mxu0 %v407
    %3080 = vmatprep.subr.mxu0 0.0
    %3081 = vmatpush1.msra.mxu0 %v408
    %3082 = vmatprep.subr.mxu0 0.0
    %3083 = vmatpush1.msra.mxu0 %v409
    %3084 = vmatprep.subr.mxu0 0.0
    %3085 = vmatpush1.msra.mxu0 %v410
    %3086 = vmatprep.subr.mxu0 0.0
    %3087 = vmatpush1.msra.mxu0 %v411
    %3088 = vmatprep.subr.mxu0 0.0
    %3089 = vmatpush1.msra.mxu0 %v412
    %3090 = vmatprep.subr.mxu0 0.0
    %3091 = vmatpush1.msra.mxu0 %v413
    %3092 = vmatprep.subr.mxu0 0.0
    %3093 = vmatpush1.msra.mxu0 %v414
    %3094 = vmatprep.subr.mxu0 0.0
    %3095 = vmatpush1.msra.mxu0 %v415
    %3096 = vmatprep.subr.mxu0 0.0
    %3097 = vmatpush1.msra.mxu0 %v416
    %3098 = vmatprep.subr.mxu0 0.0
    %3099 = vmatpush1.msra.mxu0 %v417
    %3100 = vmatprep.subr.mxu0 0.0
    %3101 = vmatpush1.msra.mxu0 %v418
    %3102 = vmatprep.subr.mxu0 0.0
    %3103 = vmatpush1.msra.mxu0 %v419
    %3104 = vmatprep.subr.mxu0 0.0
    %3105 = vmatpush1.msra.mxu0 %v420
    %3106 = vmatprep.subr.mxu0 0.0
    %3107 = vmatpush1.msra.mxu0 %v421
    %3108 = vmatprep.subr.mxu0 0.0
    %3109 = vmatpush1.msra.mxu0 %v422
    %3110 = vmatprep.subr.mxu0 0.0
    %3111 = vmatpush1.msra.mxu0 %v423
    %3112 = vmatprep.subr.mxu0 0.0
    %3113 = vmatpush1.msra.mxu0 %v424
    %3114 = vmatprep.subr.mxu0 0.0
    %3115 = vmatpush1.msra.mxu0 %v425
    %3116 = vmatprep.subr.mxu0 0.0
    %3117 = vmatpush1.msra.mxu0 %v426
    %3118 = vmatprep.subr.mxu0 0.0
    %3119 = vmatpush1.msra.mxu0 %v427
    %3120 = vmatprep.subr.mxu0 0.0
    %3121 = vmatpush1.msra.mxu0 %v428
    %3122 = vmatprep.subr.mxu0 0.0
    %3123 = vmatpush1.msra.mxu0 %v429
    %3124 = vmatprep.subr.mxu0 0.0
    %3125 = vmatpush1.msra.mxu0 %v430
    %3126 = vmatprep.subr.mxu0 0.0
    %3127 = vmatpush1.msra.mxu0 %v431
    %3128 = vmatprep.subr.mxu0 0.0
    %3129 = vmatpush1.msra.mxu0 %v432
    %3130 = vmatprep.subr.mxu0 0.0
    %3131 = vmatpush1.msra.mxu0 %v433
    %3132 = vmatprep.subr.mxu0 0.0
    %3133 = vmatpush1.msra.mxu0 %v434
    %3134 = vmatprep.subr.mxu0 0.0
    %3135 = vmatpush1.msra.mxu0 %v435
    %3136 = vmatprep.subr.mxu0 0.0
    %3137 = vmatpush1.msra.mxu0 %v436
    %3138 = vmatprep.subr.mxu0 0.0
    %3139 = vmatpush1.msra.mxu0 %v437
    %3140 = vmatprep.subr.mxu0 0.0
    %3141 = vmatpush1.msra.mxu0 %v438
    %3142 = vmatprep.mubr.f32.mxu0 %v2755
    %3143 = vmatmul.mubr.f32.gmra.mrb[0].mxu0 %v2754
    %v3144 = vpop.f32.mrb[0].mxu0
    %v3145 = vadd.f32 %v3070, %v3144
    %v3146 = vpop.f32.mrb[0].mxu0
    %3147 = vmatprep.mubr.f32.mxu0 %v2771
    %3148 = vmatmul.mubr.f32.gmra.mrb[0].mxu0 %v2770
    %v3149 = vpop.f32.mrb[0].mxu0
    %v3150 = vadd.f32 %v3075, %v3149
    %v3151 = vpop.f32.mrb[0].mxu0
    %3152 = vdwg.mxu0
    %3153 = vmatprep.subr.mxu0 0.0
    %3154 = vmatpush1.msra.mxu0 %v439
    %3155 = vmatprep.subr.mxu0 0.0
    %3156 = vmatpush1.msra.mxu0 %v440
    %3157 = vmatprep.subr.mxu0 0.0
    %3158 = vmatpush1.msra.mxu0 %v441
    %3159 = vmatprep.subr.mxu0 0.0
    %3160 = vmatpush1.msra.mxu0 %v442
    %3161 = vmatprep.subr.mxu0 0.0
    %3162 = vmatpush1.msra.mxu0 %v443
    %3163 = vmatprep.subr.mxu0 0.0
    %3164 = vmatpush1.msra.mxu0 %v444
    %3165 = vmatprep.subr.mxu0 0.0
    %3166 = vmatpush1.msra.mxu0 %v445
    %3167 = vmatprep.subr.mxu0 0.0
    %3168 = vmatpush1.msra.mxu0 %v446
    %3169 = vmatprep.subr.mxu0 0.0
    %3170 = vmatpush1.msra.mxu0 %v447
    %3171 = vmatprep.subr.mxu0 0.0
    %3172 = vmatpush1.msra.mxu0 %v448
    %3173 = vmatprep.subr.mxu0 0.0
    %3174 = vmatpush1.msra.mxu0 %v449
    %3175 = vmatprep.subr.mxu0 0.0
    %3176 = vmatpush1.msra.mxu0 %v450
    %3177 = vmatprep.subr.mxu0 0.0
    %3178 = vmatpush1.msra.mxu0 %v451
    %3179 = vmatprep.subr.mxu0 0.0
    %3180 = vmatpush1.msra.mxu0 %v452
    %3181 = vmatprep.subr.mxu0 0.0
    %3182 = vmatpush1.msra.mxu0 %v453
    %3183 = vmatprep.subr.mxu0 0.0
    %3184 = vmatpush1.msra.mxu0 %v454
    %3185 = vmatprep.subr.mxu0 0.0
    %3186 = vmatpush1.msra.mxu0 %v455
    %3187 = vmatprep.subr.mxu0 0.0
    %3188 = vmatpush1.msra.mxu0 %v456
    %3189 = vmatprep.subr.mxu0 0.0
    %3190 = vmatpush1.msra.mxu0 %v457
    %3191 = vmatprep.subr.mxu0 0.0
    %3192 = vmatpush1.msra.mxu0 %v458
    %3193 = vmatprep.subr.mxu0 0.0
    %3194 = vmatpush1.msra.mxu0 %v459
    %3195 = vmatprep.subr.mxu0 0.0
    %3196 = vmatpush1.msra.mxu0 %v460
    %3197 = vmatprep.subr.mxu0 0.0
    %3198 = vmatpush1.msra.mxu0 %v461
    %3199 = vmatprep.subr.mxu0 0.0
    %3200 = vmatpush1.msra.mxu0 %v462
    %3201 = vmatprep.subr.mxu0 0.0
    %3202 = vmatpush1.msra.mxu0 %v463
    %3203 = vmatprep.subr.mxu0 0.0
    %3204 = vmatpush1.msra.mxu0 %v464
    %3205 = vmatprep.subr.mxu0 0.0
    %3206 = vmatpush1.msra.mxu0 %v465
    %3207 = vmatprep.subr.mxu0 0.0
    %3208 = vmatpush1.msra.mxu0 %v466
    %3209 = vmatprep.subr.mxu0 0.0
    %3210 = vmatpush1.msra.mxu0 %v467
    %3211 = vmatprep.subr.mxu0 0.0
    %3212 = vmatpush1.msra.mxu0 %v468
    %3213 = vmatprep.subr.mxu0 0.0
    %3214 = vmatpush1.msra.mxu0 %v469
    %3215 = vmatprep.subr.mxu0 0.0
    %3216 = vmatpush1.msra.mxu0 %v470
    %3217 = vmatprep.mubr.f32.mxu0 %v2757
    %3218 = vmatmul.mubr.f32.gmra.mrb[0].mxu0 %v2756
    %v3219 = vpop.f32.mrb[0].mxu0
    %v3220 = vadd.f32 %v3145, %v3219
    %v3221 = vpop.f32.mrb[0].mxu0
    %3222 = vmatprep.mubr.f32.mxu0 %v2773
    %3223 = vmatmul.mubr.f32.gmra.mrb[0].mxu0 %v2772
    %v3224 = vpop.f32.mrb[0].mxu0
    %v3225 = vadd.f32 %v3150, %v3224
    %v3226 = vpop.f32.mrb[0].mxu0
    %3227 = vdwg.mxu0
    %3228 = vmatprep.subr.mxu0 0.0
    %3229 = vmatpush1.msra.mxu0 %v471
    %3230 = vmatprep.subr.mxu0 0.0
    %3231 = vmatpush1.msra.mxu0 %v472
    %3232 = vmatprep.subr.mxu0 0.0
    %3233 = vmatpush1.msra.mxu0 %v473
    %3234 = vmatprep.subr.mxu0 0.0
    %3235 = vmatpush1.msra.mxu0 %v474
    %3236 = vmatprep.subr.mxu0 0.0
    %3237 = vmatpush1.msra.mxu0 %v475
    %3238 = vmatprep.subr.mxu0 0.0
    %3239 = vmatpush1.msra.mxu0 %v476
    %3240 = vmatprep.subr.mxu0 0.0
    %3241 = vmatpush1.msra.mxu0 %v477
    %3242 = vmatprep.subr.mxu0 0.0
    %3243 = vmatpush1.msra.mxu0 %v478
    %3244 = vmatprep.subr.mxu0 0.0
    %3245 = vmatpush1.msra.mxu0 %v479
    %3246 = vmatprep.subr.mxu0 0.0
    %3247 = vmatpush1.msra.mxu0 %v480
    %3248 = vmatprep.subr.mxu0 0.0
    %3249 = vmatpush1.msra.mxu0 %v481
    %3250 = vmatprep.subr.mxu0 0.0
    %3251 = vmatpush1.msra.mxu0 %v482
    %3252 = vmatprep.subr.mxu0 0.0
    %3253 = vmatpush1.msra.mxu0 %v483
    %3254 = vmatprep.subr.mxu0 0.0
    %3255 = vmatpush1.msra.mxu0 %v484
    %3256 = vmatprep.subr.mxu0 0.0
    %3257 = vmatpush1.msra.mxu0 %v485
    %3258 = vmatprep.subr.mxu0 0.0
    %3259 = vmatpush1.msra.mxu0 %v486
    %3260 = vmatprep.subr.mxu0 0.0
    %3261 = vmatpush1.msra.mxu0 %v487
    %3262 = vmatprep.subr.mxu0 0.0
    %3263 = vmatpush1.msra.mxu0 %v488
    %3264 = vmatprep.subr.mxu0 0.0
    %3265 = vmatpush1.msra.mxu0 %v489
    %3266 = vmatprep.subr.mxu0 0.0
    %3267 = vmatpush1.msra.mxu0 %v490
    %3268 = vmatprep.subr.mxu0 0.0
    %3269 = vmatpush1.msra.mxu0 %v491
    %3270 = vmatprep.subr.mxu0 0.0
    %3271 = vmatpush1.msra.mxu0 %v492
    %3272 = vmatprep.subr.mxu0 0.0
    %3273 = vmatpush1.msra.mxu0 %v493
    %3274 = vmatprep.subr.mxu0 0.0
    %3275 = vmatpush1.msra.mxu0 %v494
    %3276 = vmatprep.subr.mxu0 0.0
    %3277 = vmatpush1.msra.mxu0 %v495
    %3278 = vmatprep.subr.mxu0 0.0
    %3279 = vmatpush1.msra.mxu0 %v496
    %3280 = vmatprep.subr.mxu0 0.0
    %3281 = vmatpush1.msra.mxu0 %v497
    %3282 = vmatprep.subr.mxu0 0.0
    %3283 = vmatpush1.msra.mxu0 %v498
    %3284 = vmatprep.subr.mxu0 0.0
    %3285 = vmatpush1.msra.mxu0 %v499
    %3286 = vmatprep.subr.mxu0 0.0
    %3287 = vmatpush1.msra.mxu0 %v500
    %3288 = vmatprep.subr.mxu0 0.0
    %3289 = vmatpush1.msra.mxu0 %v501
    %3290 = vmatprep.subr.mxu0 0.0
    %3291 = vmatpush1.msra.mxu0 %v502
    %3292 = vmatprep.mubr.f32.mxu0 %v2759
    %3293 = vmatmul.mubr.f32.gmra.mrb[0].mxu0 %v2758
    %v3294 = vpop.f32.mrb[0].mxu0
    %v3295 = vadd.f32 %v3220, %v3294
    %v3296 = vpop.f32.mrb[0].mxu0
    %3297 = vmatprep.mubr.f32.mxu0 %v2775
    %3298 = vmatmul.mubr.f32.gmra.mrb[0].mxu0 %v2774
    %v3299 = vpop.f32.mrb[0].mxu0
    %v3300 = vadd.f32 %v3225, %v3299
    %v3301 = vpop.f32.mrb[0].mxu0
    %3302 = vdwg.mxu0
    %3303 = vmatprep.subr.mxu0 0.0
    %3304 = vmatpush1.msra.mxu0 %v503
    %3305 = vmatprep.subr.mxu0 0.0
    %3306 = vmatpush1.msra.mxu0 %v504
    %3307 = vmatprep.subr.mxu0 0.0
    %3308 = vmatpush1.msra.mxu0 %v505
    %3309 = vmatprep.subr.mxu0 0.0
    %3310 = vmatpush1.msra.mxu0 %v506
    %3311 = vmatprep.subr.mxu0 0.0
    %3312 = vmatpush1.msra.mxu0 %v507
    %3313 = vmatprep.subr.mxu0 0.0
    %3314 = vmatpush1.msra.mxu0 %v508
    %3315 = vmatprep.subr.mxu0 0.0
    %3316 = vmatpush1.msra.mxu0 %v509
    %3317 = vmatprep.subr.mxu0 0.0
    %3318 = vmatpush1.msra.mxu0 %v510
    %3319 = vmatprep.subr.mxu0 0.0
    %3320 = vmatpush1.msra.mxu0 %v511
    %3321 = vmatprep.subr.mxu0 0.0
    %3322 = vmatpush1.msra.mxu0 %v512
    %3323 = vmatprep.subr.mxu0 0.0
    %3324 = vmatpush1.msra.mxu0 %v513
    %3325 = vmatprep.subr.mxu0 0.0
    %3326 = vmatpush1.msra.mxu0 %v514
    %3327 = vmatprep.subr.mxu0 0.0
    %3328 = vmatpush1.msra.mxu0 %v515
    %3329 = vmatprep.subr.mxu0 0.0
    %3330 = vmatpush1.msra.mxu0 %v516
    %3331 = vmatprep.subr.mxu0 0.0
    %3332 = vmatpush1.msra.mxu0 %v517
    %3333 = vmatprep.subr.mxu0 0.0
    %3334 = vmatpush1.msra.mxu0 %v518
    %3335 = vmatprep.subr.mxu0 0.0
    %3336 = vmatpush1.msra.mxu0 %v519
    %3337 = vmatprep.subr.mxu0 0.0
    %3338 = vmatpush1.msra.mxu0 %v520
    %3339 = vmatprep.subr.mxu0 0.0
    %3340 = vmatpush1.msra.mxu0 %v521
    %3341 = vmatprep.subr.mxu0 0.0
    %3342 = vmatpush1.msra.mxu0 %v522
    %3343 = vmatprep.subr.mxu0 0.0
    %3344 = vmatpush1.msra.mxu0 %v523
    %3345 = vmatprep.subr.mxu0 0.0
    %3346 = vmatpush1.msra.mxu0 %v524
    %3347 = vmatprep.subr.mxu0 0.0
    %3348 = vmatpush1.msra.mxu0 %v525
    %3349 = vmatprep.subr.mxu0 0.0
    %3350 = vmatpush1.msra.mxu0 %v526
    %3351 = vmatprep.subr.mxu0 0.0
    %3352 = vmatpush1.msra.mxu0 %v527
    %3353 = vmatprep.subr.mxu0 0.0
    %3354 = vmatpush1.msra.mxu0 %v528
    %3355 = vmatprep.subr.mxu0 0.0
    %3356 = vmatpush1.msra.mxu0 %v529
    %3357 = vmatprep.subr.mxu0 0.0
    %3358 = vmatpush1.msra.mxu0 %v530
    %3359 = vmatprep.subr.mxu0 0.0
    %3360 = vmatpush1.msra.mxu0 %v531
    %3361 = vmatprep.subr.mxu0 0.0
    %3362 = vmatpush1.msra.mxu0 %v532
    %3363 = vmatprep.subr.mxu0 0.0
    %3364 = vmatpush1.msra.mxu0 %v533
    %3365 = vmatprep.subr.mxu0 0.0
    %3366 = vmatpush1.msra.mxu0 %v534
    %3367 = vmatprep.mubr.f32.mxu0 %v2761
    %3368 = vmatmul.mubr.f32.gmra.mrb[0].mxu0 %v2760
    %v3369 = vpop.f32.mrb[0].mxu0
    %v3370 = vadd.f32 %v3295, %v3369
    %v3371 = vpop.f32.mrb[0].mxu0
    %3372 = vmatprep.mubr.f32.mxu0 %v2777
    %3373 = vmatmul.mubr.f32.gmra.mrb[0].mxu0 %v2776
    %v3374 = vpop.f32.mrb[0].mxu0
    %v3375 = vadd.f32 %v3300, %v3374
    %v3376 = vpop.f32.mrb[0].mxu0
    %3377 = vdwg.mxu0
    %v3378 = vrot.slane %v3370, 4
    %v3379 = vadd.f32 %v3370, %v3378
    %v3380 = vrot.slane %v3379, 2
    %v3381 = vadd.f32 %v3379, %v3380
    %v3382 = vrot.slane %v3381, 1
    %v3383 = vadd.f32 %v3381, %v3382
    %v3384 = vrot.slane %v3375, 4
    %v3385 = vadd.f32 %v3375, %v3384
    %v3386 = vrot.slane %v3385, 2
    %v3387 = vadd.f32 %v3385, %v3386
    %v3388 = vrot.slane %v3387, 1
    %v3389 = vadd.f32 %v3387, %v3388
    %v3390 = vadd.f32 %v3383, 0.0
    %v3391 = vadd.f32 %v3389, 0.0
    %v3392 = vld [vmem:[%s0 + $0x4] sm:$0xf]
    %v3393 = vld [vmem:[%s0 + $0x10] sm:$0xf]
    %v3394 = vld [vmem:[%s0 + $0x8] sm:$0x1]
    %v3395 = vld [vmem:[%s0 + $0x14] sm:$0x1]
    %v3397 = vshrl.u32 %v3392, 16
    %v3399 = vrot.slane %v3397, 4
    %v3400 = vshll.u32 %v3392, 16
    %v3402 = vrot.slane %v3400, 5
    %v3403 = vor.u32 %v3399, %v3402
    %v3404 = vrot.slane %v3403, 4
    %v3406 = vshll.u32 %v3394, 16
    %v3408 = vrot.slane %v3406, 5
    %v3409 = vsel %vm541, %v3404, %v3408
    %v3411 = vshrl.u32 %v3393, 16
    %v3413 = vrot.slane %v3411, 4
    %v3414 = vshll.u32 %v3393, 16
    %v3416 = vrot.slane %v3414, 5
    %v3417 = vor.u32 %v3413, %v3416
    %v3418 = vrot.slane %v3417, 4
    %v3420 = vshll.u32 %v3395, 16
    %v3422 = vrot.slane %v3420, 5
    %v3423 = vsel %vm541, %v3418, %v3422
    %v3424 = vld [vmem:[%s0 + $0x4] sm:$0xe]
    %v3425 = vld [vmem:[%s0 + $0x10] sm:$0xe]
    %v3430 = vrot.slane %v3424, 5
    %v3431 = vrot.slane %v3430, 4
    %v3432 = vrot.slane %v3394, 5
    %v3433 = vsel %vm578, %v3431, %v3432
    %v3434 = vrot.slane %v3425, 5
    %v3435 = vrot.slane %v3434, 4
    %v3436 = vrot.slane %v3395, 5
    %v3437 = vsel %vm578, %v3435, %v3436
    %v3438 = vunpack.c.l.b16 %v3409
    %v3439 = vunpack.c.l.b16 %v3423
    %v3440 = vpack.c.b16 %v3439, %v3438
    %v3442 = vsel %vm910, %v3440, 0
    %3444 = vmatprep.subr.bf16.mxu0 %v783
    %3445 = vmatpush1.bf16.msra.mxu0 %v782
    %3446 = vmatprep.subr.bf16.mxu0 %v799
    %3447 = vmatpush1.bf16.msra.mxu0 %v798
    %3448 = vmatprep.subr.bf16.mxu0 %v815
    %3449 = vmatpush1.bf16.msra.mxu0 %v814
    %3450 = vmatprep.subr.bf16.mxu0 %v831
    %3451 = vmatpush1.bf16.msra.mxu0 %v830
    %3452 = vmatprep.subr.bf16.mxu0 0
    %3453 = vmatpush1.bf16.msra.mxu0 0
    %3454 = vmatprep.subr.bf16.mxu0 0
    %3455 = vmatpush1.bf16.msra.mxu0 0
    %3456 = vmatprep.subr.bf16.mxu0 0
    %3457 = vmatpush1.bf16.msra.mxu0 0
    %3458 = vmatprep.subr.bf16.mxu0 0
    %3459 = vmatpush1.bf16.msra.mxu0 0
    %3460 = vmatprep.subr.bf16.mxu0 0
    %3461 = vmatpush1.bf16.msra.mxu0 0
    %3462 = vmatprep.subr.bf16.mxu0 0
    %3463 = vmatpush1.bf16.msra.mxu0 0
    %3464 = vmatprep.subr.bf16.mxu0 0
    %3465 = vmatpush1.bf16.msra.mxu0 0
    %3466 = vmatprep.subr.bf16.mxu0 0
    %3467 = vmatpush1.bf16.msra.mxu0 0
    %3468 = vmatprep.subr.bf16.mxu0 0
    %3469 = vmatpush1.bf16.msra.mxu0 0
    %3470 = vmatprep.subr.bf16.mxu0 0
    %3471 = vmatpush1.bf16.msra.mxu0 0
    %3472 = vmatprep.subr.bf16.mxu0 0
    %3473 = vmatpush1.bf16.msra.mxu0 0
    %3474 = vmatprep.subr.bf16.mxu0 0
    %3475 = vmatpush1.bf16.msra.mxu0 0
    %3476 = vmatprep.mubr.bf16.mxu0 0
    %3477 = vmatmul.mubr.bf16.gmra.mrb[0].mxu0 %v3442
    %v3478 = vpop.f32.mrb[0].mxu0
    %v3479 = vadd.f32 0.0, %v3478
    %v3480 = vpop.f32.mrb[0].mxu0
    %v3481 = vadd.f32 0.0, %v3480
    %v3482 = vpop.f32.mrb[0].mxu0
    %v3483 = vadd.f32 0.0, %v3482
    %v3484 = vpop.f32.mrb[0].mxu0
    %v3485 = vadd.f32 0.0, %v3484
    %3486 = vdwg.mxu0
    %3487 = vmatprep.subr.bf16.mxu0 %v785
    %3488 = vmatpush1.bf16.msra.mxu0 %v784
    %3489 = vmatprep.subr.bf16.mxu0 %v801
    %3490 = vmatpush1.bf16.msra.mxu0 %v800
    %3491 = vmatprep.subr.bf16.mxu0 %v817
    %3492 = vmatpush1.bf16.msra.mxu0 %v816
    %3493 = vmatprep.subr.bf16.mxu0 %v833
    %3494 = vmatpush1.bf16.msra.mxu0 %v832
    %3495 = vmatprep.subr.bf16.mxu0 0
    %3496 = vmatpush1.bf16.msra.mxu0 0
    %3497 = vmatprep.subr.bf16.mxu0 0
    %3498 = vmatpush1.bf16.msra.mxu0 0
    %3499 = vmatprep.subr.bf16.mxu0 0
    %3500 = vmatpush1.bf16.msra.mxu0 0
    %3501 = vmatprep.subr.bf16.mxu0 0
    %3502 = vmatpush1.bf16.msra.mxu0 0
    %3503 = vmatprep.subr.bf16.mxu0 0
    %3504 = vmatpush1.bf16.msra.mxu0 0
    %3505 = vmatprep.subr.bf16.mxu0 0
    %3506 = vmatpush1.bf16.msra.mxu0 0
    %3507 = vmatprep.subr.bf16.mxu0 0
    %3508 = vmatpush1.bf16.msra.mxu0 0
    %3509 = vmatprep.subr.bf16.mxu0 0
    %3510 = vmatpush1.bf16.msra.mxu0 0
    %3511 = vmatprep.subr.bf16.mxu0 0
    %3512 = vmatpush1.bf16.msra.mxu0 0
    %3513 = vmatprep.subr.bf16.mxu0 0
    %3514 = vmatpush1.bf16.msra.mxu0 0
    %3515 = vmatprep.subr.bf16.mxu0 0
    %3516 = vmatpush1.bf16.msra.mxu0 0
    %3517 = vmatprep.subr.bf16.mxu0 0
    %3518 = vmatpush1.bf16.msra.mxu0 0
    %3519 = vmatprep.mubr.bf16.mxu0 0
    %3520 = vmatmul.mubr.bf16.gmra.mrb[0].mxu0 %v3442
    %v3521 = vpop.f32.mrb[0].mxu0
    %v3522 = vadd.f32 0.0, %v3521
    %v3523 = vpop.f32.mrb[0].mxu0
    %v3524 = vadd.f32 0.0, %v3523
    %v3525 = vpop.f32.mrb[0].mxu0
    %v3526 = vadd.f32 0.0, %v3525
    %v3527 = vpop.f32.mrb[0].mxu0
    %v3528 = vadd.f32 0.0, %v3527
    %3529 = vdwg.mxu0
    %3530 = vmatprep.subr.bf16.mxu0 %v787
    %3531 = vmatpush1.bf16.msra.mxu0 %v786
    %3532 = vmatprep.subr.bf16.mxu0 %v803
    %3533 = vmatpush1.bf16.msra.mxu0 %v802
    %3534 = vmatprep.subr.bf16.mxu0 %v819
    %3535 = vmatpush1.bf16.msra.mxu0 %v818
    %3536 = vmatprep.subr.bf16.mxu0 %v835
    %3537 = vmatpush1.bf16.msra.mxu0 %v834
    %3538 = vmatprep.subr.bf16.mxu0 0
    %3539 = vmatpush1.bf16.msra.mxu0 0
    %3540 = vmatprep.subr.bf16.mxu0 0
    %3541 = vmatpush1.bf16.msra.mxu0 0
    %3542 = vmatprep.subr.bf16.mxu0 0
    %3543 = vmatpush1.bf16.msra.mxu0 0
    %3544 = vmatprep.subr.bf16.mxu0 0
    %3545 = vmatpush1.bf16.msra.mxu0 0
    %3546 = vmatprep.subr.bf16.mxu0 0
    %3547 = vmatpush1.bf16.msra.mxu0 0
    %3548 = vmatprep.subr.bf16.mxu0 0
    %3549 = vmatpush1.bf16.msra.mxu0 0
    %3550 = vmatprep.subr.bf16.mxu0 0
    %3551 = vmatpush1.bf16.msra.mxu0 0
    %3552 = vmatprep.subr.bf16.mxu0 0
    %3553 = vmatpush1.bf16.msra.mxu0 0
    %3554 = vmatprep.subr.bf16.mxu0 0
    %3555 = vmatpush1.bf16.msra.mxu0 0
    %3556 = vmatprep.subr.bf16.mxu0 0
    %3557 = vmatpush1.bf16.msra.mxu0 0
    %3558 = vmatprep.subr.bf16.mxu0 0
    %3559 = vmatpush1.bf16.msra.mxu0 0
    %3560 = vmatprep.subr.bf16.mxu0 0
    %3561 = vmatpush1.bf16.msra.mxu0 0
    %3562 = vmatprep.mubr.bf16.mxu0 0
    %3563 = vmatmul.mubr.bf16.gmra.mrb[0].mxu0 %v3442
    %v3564 = vpop.f32.mrb[0].mxu0
    %v3565 = vadd.f32 0.0, %v3564
    %v3566 = vpop.f32.mrb[0].mxu0
    %v3567 = vadd.f32 0.0, %v3566
    %v3568 = vpop.f32.mrb[0].mxu0
    %v3569 = vadd.f32 0.0, %v3568
    %v3570 = vpop.f32.mrb[0].mxu0
    %v3571 = vadd.f32 0.0, %v3570
    %3572 = vdwg.mxu0
    %3573 = vmatprep.subr.bf16.mxu0 %v789
    %3574 = vmatpush1.bf16.msra.mxu0 %v788
    %3575 = vmatprep.subr.bf16.mxu0 %v805
    %3576 = vmatpush1.bf16.msra.mxu0 %v804
    %3577 = vmatprep.subr.bf16.mxu0 %v821
    %3578 = vmatpush1.bf16.msra.mxu0 %v820
    %3579 = vmatprep.subr.bf16.mxu0 %v837
    %3580 = vmatpush1.bf16.msra.mxu0 %v836
    %3581 = vmatprep.subr.bf16.mxu0 0
    %3582 = vmatpush1.bf16.msra.mxu0 0
    %3583 = vmatprep.subr.bf16.mxu0 0
    %3584 = vmatpush1.bf16.msra.mxu0 0
    %3585 = vmatprep.subr.bf16.mxu0 0
    %3586 = vmatpush1.bf16.msra.mxu0 0
    %3587 = vmatprep.subr.bf16.mxu0 0
    %3588 = vmatpush1.bf16.msra.mxu0 0
    %3589 = vmatprep.subr.bf16.mxu0 0
    %3590 = vmatpush1.bf16.msra.mxu0 0
    %3591 = vmatprep.subr.bf16.mxu0 0
    %3592 = vmatpush1.bf16.msra.mxu0 0
    %3593 = vmatprep.subr.bf16.mxu0 0
    %3594 = vmatpush1.bf16.msra.mxu0 0
    %3595 = vmatprep.subr.bf16.mxu0 0
    %3596 = vmatpush1.bf16.msra.mxu0 0
    %3597 = vmatprep.subr.bf16.mxu0 0
    %3598 = vmatpush1.bf16.msra.mxu0 0
    %3599 = vmatprep.subr.bf16.mxu0 0
    %3600 = vmatpush1.bf16.msra.mxu0 0
    %3601 = vmatprep.subr.bf16.mxu0 0
    %3602 = vmatpush1.bf16.msra.mxu0 0
    %3603 = vmatprep.subr.bf16.mxu0 0
    %3604 = vmatpush1.bf16.msra.mxu0 0
    %3605 = vmatprep.mubr.bf16.mxu0 0
    %3606 = vmatmul.mubr.bf16.gmra.mrb[0].mxu0 %v3442
    %v3607 = vpop.f32.mrb[0].mxu0
    %v3608 = vadd.f32 0.0, %v3607
    %v3609 = vpop.f32.mrb[0].mxu0
    %v3610 = vadd.f32 0.0, %v3609
    %v3611 = vpop.f32.mrb[0].mxu0
    %v3612 = vadd.f32 0.0, %v3611
    %v3613 = vpop.f32.mrb[0].mxu0
    %v3614 = vadd.f32 0.0, %v3613
    %3615 = vdwg.mxu0
    %3616 = vmatprep.subr.bf16.mxu0 %v791
    %3617 = vmatpush1.bf16.msra.mxu0 %v790
    %3618 = vmatprep.subr.bf16.mxu0 %v807
    %3619 = vmatpush1.bf16.msra.mxu0 %v806
    %3620 = vmatprep.subr.bf16.mxu0 %v823
    %3621 = vmatpush1.bf16.msra.mxu0 %v822
    %3622 = vmatprep.subr.bf16.mxu0 %v839
    %3623 = vmatpush1.bf16.msra.mxu0 %v838
    %3624 = vmatprep.subr.bf16.mxu0 0
    %3625 = vmatpush1.bf16.msra.mxu0 0
    %3626 = vmatprep.subr.bf16.mxu0 0
    %3627 = vmatpush1.bf16.msra.mxu0 0
    %3628 = vmatprep.subr.bf16.mxu0 0
    %3629 = vmatpush1.bf16.msra.mxu0 0
    %3630 = vmatprep.subr.bf16.mxu0 0
    %3631 = vmatpush1.bf16.msra.mxu0 0
    %3632 = vmatprep.subr.bf16.mxu0 0
    %3633 = vmatpush1.bf16.msra.mxu0 0
    %3634 = vmatprep.subr.bf16.mxu0 0
    %3635 = vmatpush1.bf16.msra.mxu0 0
    %3636 = vmatprep.subr.bf16.mxu0 0
    %3637 = vmatpush1.bf16.msra.mxu0 0
    %3638 = vmatprep.subr.bf16.mxu0 0
    %3639 = vmatpush1.bf16.msra.mxu0 0
    %3640 = vmatprep.subr.bf16.mxu0 0
    %3641 = vmatpush1.bf16.msra.mxu0 0
    %3642 = vmatprep.subr.bf16.mxu0 0
    %3643 = vmatpush1.bf16.msra.mxu0 0
    %3644 = vmatprep.subr.bf16.mxu0 0
    %3645 = vmatpush1.bf16.msra.mxu0 0
    %3646 = vmatprep.subr.bf16.mxu0 0
    %3647 = vmatpush1.bf16.msra.mxu0 0
    %3648 = vmatprep.mubr.bf16.mxu0 0
    %3649 = vmatmul.mubr.bf16.gmra.mrb[0].mxu0 %v3442
    %v3650 = vpop.f32.mrb[0].mxu0
    %v3651 = vadd.f32 0.0, %v3650
    %v3652 = vpop.f32.mrb[0].mxu0
    %v3653 = vadd.f32 0.0, %v3652
    %v3654 = vpop.f32.mrb[0].mxu0
    %v3655 = vadd.f32 0.0, %v3654
    %v3656 = vpop.f32.mrb[0].mxu0
    %v3657 = vadd.f32 0.0, %v3656
    %3658 = vdwg.mxu0
    %3659 = vmatprep.subr.bf16.mxu0 %v793
    %3660 = vmatpush1.bf16.msra.mxu0 %v792
    %3661 = vmatprep.subr.bf16.mxu0 %v809
    %3662 = vmatpush1.bf16.msra.mxu0 %v808
    %3663 = vmatprep.subr.bf16.mxu0 %v825
    %3664 = vmatpush1.bf16.msra.mxu0 %v824
    %3665 = vmatprep.subr.bf16.mxu0 %v841
    %3666 = vmatpush1.bf16.msra.mxu0 %v840
    %3667 = vmatprep.subr.bf16.mxu0 0
    %3668 = vmatpush1.bf16.msra.mxu0 0
    %3669 = vmatprep.subr.bf16.mxu0 0
    %3670 = vmatpush1.bf16.msra.mxu0 0
    %3671 = vmatprep.subr.bf16.mxu0 0
    %3672 = vmatpush1.bf16.msra.mxu0 0
    %3673 = vmatprep.subr.bf16.mxu0 0
    %3674 = vmatpush1.bf16.msra.mxu0 0
    %3675 = vmatprep.subr.bf16.mxu0 0
    %3676 = vmatpush1.bf16.msra.mxu0 0
    %3677 = vmatprep.subr.bf16.mxu0 0
    %3678 = vmatpush1.bf16.msra.mxu0 0
    %3679 = vmatprep.subr.bf16.mxu0 0
    %3680 = vmatpush1.bf16.msra.mxu0 0
    %3681 = vmatprep.subr.bf16.mxu0 0
    %3682 = vmatpush1.bf16.msra.mxu0 0
    %3683 = vmatprep.subr.bf16.mxu0 0
    %3684 = vmatpush1.bf16.msra.mxu0 0
    %3685 = vmatprep.subr.bf16.mxu0 0
    %3686 = vmatpush1.bf16.msra.mxu0 0
    %3687 = vmatprep.subr.bf16.mxu0 0
    %3688 = vmatpush1.bf16.msra.mxu0 0
    %3689 = vmatprep.subr.bf16.mxu0 0
    %3690 = vmatpush1.bf16.msra.mxu0 0
    %3691 = vmatprep.mubr.bf16.mxu0 0
    %3692 = vmatmul.mubr.bf16.gmra.mrb[0].mxu0 %v3442
    %v3693 = vpop.f32.mrb[0].mxu0
    %v3694 = vadd.f32 0.0, %v3693
    %v3695 = vpop.f32.mrb[0].mxu0
    %v3696 = vadd.f32 0.0, %v3695
    %v3697 = vpop.f32.mrb[0].mxu0
    %v3698 = vadd.f32 0.0, %v3697
    %v3699 = vpop.f32.mrb[0].mxu0
    %v3700 = vadd.f32 0.0, %v3699
    %3701 = vdwg.mxu0
    %3702 = vmatprep.subr.bf16.mxu0 %v795
    %3703 = vmatpush1.bf16.msra.mxu0 %v794
    %3704 = vmatprep.subr.bf16.mxu0 %v811
    %3705 = vmatpush1.bf16.msra.mxu0 %v810
    %3706 = vmatprep.subr.bf16.mxu0 %v827
    %3707 = vmatpush1.bf16.msra.mxu0 %v826
    %3708 = vmatprep.subr.bf16.mxu0 %v843
    %3709 = vmatpush1.bf16.msra.mxu0 %v842
    %3710 = vmatprep.subr.bf16.mxu0 0
    %3711 = vmatpush1.bf16.msra.mxu0 0
    %3712 = vmatprep.subr.bf16.mxu0 0
    %3713 = vmatpush1.bf16.msra.mxu0 0
    %3714 = vmatprep.subr.bf16.mxu0 0
    %3715 = vmatpush1.bf16.msra.mxu0 0
    %3716 = vmatprep.subr.bf16.mxu0 0
    %3717 = vmatpush1.bf16.msra.mxu0 0
    %3718 = vmatprep.subr.bf16.mxu0 0
    %3719 = vmatpush1.bf16.msra.mxu0 0
    %3720 = vmatprep.subr.bf16.mxu0 0
    %3721 = vmatpush1.bf16.msra.mxu0 0
    %3722 = vmatprep.subr.bf16.mxu0 0
    %3723 = vmatpush1.bf16.msra.mxu0 0
    %3724 = vmatprep.subr.bf16.mxu0 0
    %3725 = vmatpush1.bf16.msra.mxu0 0
    %3726 = vmatprep.subr.bf16.mxu0 0
    %3727 = vmatpush1.bf16.msra.mxu0 0
    %3728 = vmatprep.subr.bf16.mxu0 0
    %3729 = vmatpush1.bf16.msra.mxu0 0
    %3730 = vmatprep.subr.bf16.mxu0 0
    %3731 = vmatpush1.bf16.msra.mxu0 0
    %3732 = vmatprep.subr.bf16.mxu0 0
    %3733 = vmatpush1.bf16.msra.mxu0 0
    %3734 = vmatprep.mubr.bf16.mxu0 0
    %3735 = vmatmul.mubr.bf16.gmra.mrb[0].mxu0 %v3442
    %v3736 = vpop.f32.mrb[0].mxu0
    %v3737 = vadd.f32 0.0, %v3736
    %v3738 = vpop.f32.mrb[0].mxu0
    %v3739 = vadd.f32 0.0, %v3738
    %v3740 = vpop.f32.mrb[0].mxu0
    %v3741 = vadd.f32 0.0, %v3740
    %v3742 = vpop.f32.mrb[0].mxu0
    %v3743 = vadd.f32 0.0, %v3742
    %3744 = vdwg.mxu0
    %3745 = vmatprep.subr.bf16.mxu0 %v797
    %3746 = vmatpush1.bf16.msra.mxu0 %v796
    %3747 = vmatprep.subr.bf16.mxu0 %v813
    %3748 = vmatpush1.bf16.msra.mxu0 %v812
    %3749 = vmatprep.subr.bf16.mxu0 %v829
    %3750 = vmatpush1.bf16.msra.mxu0 %v828
    %3751 = vmatprep.subr.bf16.mxu0 %v845
    %3752 = vmatpush1.bf16.msra.mxu0 %v844
    %3753 = vmatprep.subr.bf16.mxu0 0
    %3754 = vmatpush1.bf16.msra.mxu0 0
    %3755 = vmatprep.subr.bf16.mxu0 0
    %3756 = vmatpush1.bf16.msra.mxu0 0
    %3757 = vmatprep.subr.bf16.mxu0 0
    %3758 = vmatpush1.bf16.msra.mxu0 0
    %3759 = vmatprep.subr.bf16.mxu0 0
    %3760 = vmatpush1.bf16.msra.mxu0 0
    %3761 = vmatprep.subr.bf16.mxu0 0
    %3762 = vmatpush1.bf16.msra.mxu0 0
    %3763 = vmatprep.subr.bf16.mxu0 0
    %3764 = vmatpush1.bf16.msra.mxu0 0
    %3765 = vmatprep.subr.bf16.mxu0 0
    %3766 = vmatpush1.bf16.msra.mxu0 0
    %3767 = vmatprep.subr.bf16.mxu0 0
    %3768 = vmatpush1.bf16.msra.mxu0 0
    %3769 = vmatprep.subr.bf16.mxu0 0
    %3770 = vmatpush1.bf16.msra.mxu0 0
    %3771 = vmatprep.subr.bf16.mxu0 0
    %3772 = vmatpush1.bf16.msra.mxu0 0
    %3773 = vmatprep.subr.bf16.mxu0 0
    %3774 = vmatpush1.bf16.msra.mxu0 0
    %3775 = vmatprep.subr.bf16.mxu0 0
    %3776 = vmatpush1.bf16.msra.mxu0 0
    %3777 = vmatprep.mubr.bf16.mxu0 0
    %3778 = vmatmul.mubr.bf16.gmra.mrb[0].mxu0 %v3442
    %v3779 = vpop.f32.mrb[0].mxu0
    %v3780 = vadd.f32 0.0, %v3779
    %v3781 = vpop.f32.mrb[0].mxu0
    %v3782 = vadd.f32 0.0, %v3781
    %v3783 = vpop.f32.mrb[0].mxu0
    %v3784 = vadd.f32 0.0, %v3783
    %v3785 = vpop.f32.mrb[0].mxu0
    %v3786 = vadd.f32 0.0, %v3785
    %3787 = vdwg.mxu0
    %v3790 = vunpack.c.l.b16 %v3392
    %v3791 = vunpack.c.l.b16 %v3393
    %v3792 = vpack.c.b16 %v3791, %v3790
    %v3794 = vsel %vm910, %v3792, 0
    %3796 = vmatprep.subr.bf16.mxu0 %v1456
    %3797 = vmatpush1.bf16.msra.mxu0 %v1455
    %3798 = vmatprep.subr.bf16.mxu0 %v1472
    %3799 = vmatpush1.bf16.msra.mxu0 %v1471
    %3800 = vmatprep.subr.bf16.mxu0 %v1488
    %3801 = vmatpush1.bf16.msra.mxu0 %v1487
    %3802 = vmatprep.subr.bf16.mxu0 %v1504
    %3803 = vmatpush1.bf16.msra.mxu0 %v1503
    %3804 = vmatprep.subr.bf16.mxu0 0
    %3805 = vmatpush1.bf16.msra.mxu0 0
    %3806 = vmatprep.subr.bf16.mxu0 0
    %3807 = vmatpush1.bf16.msra.mxu0 0
    %3808 = vmatprep.subr.bf16.mxu0 0
    %3809 = vmatpush1.bf16.msra.mxu0 0
    %3810 = vmatprep.subr.bf16.mxu0 0
    %3811 = vmatpush1.bf16.msra.mxu0 0
    %3812 = vmatprep.subr.bf16.mxu0 0
    %3813 = vmatpush1.bf16.msra.mxu0 0
    %3814 = vmatprep.subr.bf16.mxu0 0
    %3815 = vmatpush1.bf16.msra.mxu0 0
    %3816 = vmatprep.subr.bf16.mxu0 0
    %3817 = vmatpush1.bf16.msra.mxu0 0
    %3818 = vmatprep.subr.bf16.mxu0 0
    %3819 = vmatpush1.bf16.msra.mxu0 0
    %3820 = vmatprep.subr.bf16.mxu0 0
    %3821 = vmatpush1.bf16.msra.mxu0 0
    %3822 = vmatprep.subr.bf16.mxu0 0
    %3823 = vmatpush1.bf16.msra.mxu0 0
    %3824 = vmatprep.subr.bf16.mxu0 0
    %3825 = vmatpush1.bf16.msra.mxu0 0
    %3826 = vmatprep.subr.bf16.mxu0 0
    %3827 = vmatpush1.bf16.msra.mxu0 0
    %3828 = vmatprep.mubr.bf16.mxu0 0
    %3829 = vmatmul.mubr.bf16.gmra.mrb[0].mxu0 %v3794
    %v3830 = vpop.f32.mrb[0].mxu0
    %v3831 = vadd.f32 %v3479, %v3830
    %v3832 = vpop.f32.mrb[0].mxu0
    %v3833 = vadd.f32 %v3481, %v3832
    %v3834 = vpop.f32.mrb[0].mxu0
    %v3835 = vadd.f32 %v3483, %v3834
    %v3836 = vpop.f32.mrb[0].mxu0
    %v3837 = vadd.f32 %v3485, %v3836
    %3838 = vdwg.mxu0
    %3839 = vmatprep.subr.bf16.mxu0 %v1458
    %3840 = vmatpush1.bf16.msra.mxu0 %v1457
    %3841 = vmatprep.subr.bf16.mxu0 %v1474
    %3842 = vmatpush1.bf16.msra.mxu0 %v1473
    %3843 = vmatprep.subr.bf16.mxu0 %v1490
    %3844 = vmatpush1.bf16.msra.mxu0 %v1489
    %3845 = vmatprep.subr.bf16.mxu0 %v1506
    %3846 = vmatpush1.bf16.msra.mxu0 %v1505
    %3847 = vmatprep.subr.bf16.mxu0 0
    %3848 = vmatpush1.bf16.msra.mxu0 0
    %3849 = vmatprep.subr.bf16.mxu0 0
    %3850 = vmatpush1.bf16.msra.mxu0 0
    %3851 = vmatprep.subr.bf16.mxu0 0
    %3852 = vmatpush1.bf16.msra.mxu0 0
    %3853 = vmatprep.subr.bf16.mxu0 0
    %3854 = vmatpush1.bf16.msra.mxu0 0
    %3855 = vmatprep.subr.bf16.mxu0 0
    %3856 = vmatpush1.bf16.msra.mxu0 0
    %3857 = vmatprep.subr.bf16.mxu0 0
    %3858 = vmatpush1.bf16.msra.mxu0 0
    %3859 = vmatprep.subr.bf16.mxu0 0
    %3860 = vmatpush1.bf16.msra.mxu0 0
    %3861 = vmatprep.subr.bf16.mxu0 0
    %3862 = vmatpush1.bf16.msra.mxu0 0
    %3863 = vmatprep.subr.bf16.mxu0 0
    %3864 = vmatpush1.bf16.msra.mxu0 0
    %3865 = vmatprep.subr.bf16.mxu0 0
    %3866 = vmatpush1.bf16.msra.mxu0 0
    %3867 = vmatprep.subr.bf16.mxu0 0
    %3868 = vmatpush1.bf16.msra.mxu0 0
    %3869 = vmatprep.subr.bf16.mxu0 0
    %3870 = vmatpush1.bf16.msra.mxu0 0
    %3871 = vmatprep.mubr.bf16.mxu0 0
    %3872 = vmatmul.mubr.bf16.gmra.mrb[0].mxu0 %v3794
    %v3873 = vpop.f32.mrb[0].mxu0
    %v3874 = vadd.f32 %v3522, %v3873
    %v3875 = vpop.f32.mrb[0].mxu0
    %v3876 = vadd.f32 %v3524, %v3875
    %v3877 = vpop.f32.mrb[0].mxu0
    %v3878 = vadd.f32 %v3526, %v3877
    %v3879 = vpop.f32.mrb[0].mxu0
    %v3880 = vadd.f32 %v3528, %v3879
    %3881 = vdwg.mxu0
    %3882 = vmatprep.subr.bf16.mxu0 %v1460
    %3883 = vmatpush1.bf16.msra.mxu0 %v1459
    %3884 = vmatprep.subr.bf16.mxu0 %v1476
    %3885 = vmatpush1.bf16.msra.mxu0 %v1475
    %3886 = vmatprep.subr.bf16.mxu0 %v1492
    %3887 = vmatpush1.bf16.msra.mxu0 %v1491
    %3888 = vmatprep.subr.bf16.mxu0 %v1508
    %3889 = vmatpush1.bf16.msra.mxu0 %v1507
    %3890 = vmatprep.subr.bf16.mxu0 0
    %3891 = vmatpush1.bf16.msra.mxu0 0
    %3892 = vmatprep.subr.bf16.mxu0 0
    %3893 = vmatpush1.bf16.msra.mxu0 0
    %3894 = vmatprep.subr.bf16.mxu0 0
    %3895 = vmatpush1.bf16.msra.mxu0 0
    %3896 = vmatprep.subr.bf16.mxu0 0
    %3897 = vmatpush1.bf16.msra.mxu0 0
    %3898 = vmatprep.subr.bf16.mxu0 0
    %3899 = vmatpush1.bf16.msra.mxu0 0
    %3900 = vmatprep.subr.bf16.mxu0 0
    %3901 = vmatpush1.bf16.msra.mxu0 0
    %3902 = vmatprep.subr.bf16.mxu0 0
    %3903 = vmatpush1.bf16.msra.mxu0 0
    %3904 = vmatprep.subr.bf16.mxu0 0
    %3905 = vmatpush1.bf16.msra.mxu0 0
    %3906 = vmatprep.subr.bf16.mxu0 0
    %3907 = vmatpush1.bf16.msra.mxu0 0
    %3908 = vmatprep.subr.bf16.mxu0 0
    %3909 = vmatpush1.bf16.msra.mxu0 0
    %3910 = vmatprep.subr.bf16.mxu0 0
    %3911 = vmatpush1.bf16.msra.mxu0 0
    %3912 = vmatprep.subr.bf16.mxu0 0
    %3913 = vmatpush1.bf16.msra.mxu0 0
    %3914 = vmatprep.mubr.bf16.mxu0 0
    %3915 = vmatmul.mubr.bf16.gmra.mrb[0].mxu0 %v3794
    %v3916 = vpop.f32.mrb[0].mxu0
    %v3917 = vadd.f32 %v3565, %v3916
    %v3918 = vpop.f32.mrb[0].mxu0
    %v3919 = vadd.f32 %v3567, %v3918
    %v3920 = vpop.f32.mrb[0].mxu0
    %v3921 = vadd.f32 %v3569, %v3920
    %v3922 = vpop.f32.mrb[0].mxu0
    %v3923 = vadd.f32 %v3571, %v3922
    %3924 = vdwg.mxu0
    %3925 = vmatprep.subr.bf16.mxu0 %v1462
    %3926 = vmatpush1.bf16.msra.mxu0 %v1461
    %3927 = vmatprep.subr.bf16.mxu0 %v1478
    %3928 = vmatpush1.bf16.msra.mxu0 %v1477
    %3929 = vmatprep.subr.bf16.mxu0 %v1494
    %3930 = vmatpush1.bf16.msra.mxu0 %v1493
    %3931 = vmatprep.subr.bf16.mxu0 %v1510
    %3932 = vmatpush1.bf16.msra.mxu0 %v1509
    %3933 = vmatprep.subr.bf16.mxu0 0
    %3934 = vmatpush1.bf16.msra.mxu0 0
    %3935 = vmatprep.subr.bf16.mxu0 0
    %3936 = vmatpush1.bf16.msra.mxu0 0
    %3937 = vmatprep.subr.bf16.mxu0 0
    %3938 = vmatpush1.bf16.msra.mxu0 0
    %3939 = vmatprep.subr.bf16.mxu0 0
    %3940 = vmatpush1.bf16.msra.mxu0 0
    %3941 = vmatprep.subr.bf16.mxu0 0
    %3942 = vmatpush1.bf16.msra.mxu0 0
    %3943 = vmatprep.subr.bf16.mxu0 0
    %3944 = vmatpush1.bf16.msra.mxu0 0
    %3945 = vmatprep.subr.bf16.mxu0 0
    %3946 = vmatpush1.bf16.msra.mxu0 0
    %3947 = vmatprep.subr.bf16.mxu0 0
    %3948 = vmatpush1.bf16.msra.mxu0 0
    %3949 = vmatprep.subr.bf16.mxu0 0
    %3950 = vmatpush1.bf16.msra.mxu0 0
    %3951 = vmatprep.subr.bf16.mxu0 0
    %3952 = vmatpush1.bf16.msra.mxu0 0
    %3953 = vmatprep.subr.bf16.mxu0 0
    %3954 = vmatpush1.bf16.msra.mxu0 0
    %3955 = vmatprep.subr.bf16.mxu0 0
    %3956 = vmatpush1.bf16.msra.mxu0 0
    %3957 = vmatprep.mubr.bf16.mxu0 0
    %3958 = vmatmul.mubr.bf16.gmra.mrb[0].mxu0 %v3794
    %v3959 = vpop.f32.mrb[0].mxu0
    %v3960 = vadd.f32 %v3608, %v3959
    %v3961 = vpop.f32.mrb[0].mxu0
    %v3962 = vadd.f32 %v3610, %v3961
    %v3963 = vpop.f32.mrb[0].mxu0
    %v3964 = vadd.f32 %v3612, %v3963
    %v3965 = vpop.f32.mrb[0].mxu0
    %v3966 = vadd.f32 %v3614, %v3965
    %3967 = vdwg.mxu0
    %3968 = vmatprep.subr.bf16.mxu0 %v1464
    %3969 = vmatpush1.bf16.msra.mxu0 %v1463
    %3970 = vmatprep.subr.bf16.mxu0 %v1480
    %3971 = vmatpush1.bf16.msra.mxu0 %v1479
    %3972 = vmatprep.subr.bf16.mxu0 %v1496
    %3973 = vmatpush1.bf16.msra.mxu0 %v1495
    %3974 = vmatprep.subr.bf16.mxu0 %v1512
    %3975 = vmatpush1.bf16.msra.mxu0 %v1511
    %3976 = vmatprep.subr.bf16.mxu0 0
    %3977 = vmatpush1.bf16.msra.mxu0 0
    %3978 = vmatprep.subr.bf16.mxu0 0
    %3979 = vmatpush1.bf16.msra.mxu0 0
    %3980 = vmatprep.subr.bf16.mxu0 0
    %3981 = vmatpush1.bf16.msra.mxu0 0
    %3982 = vmatprep.subr.bf16.mxu0 0
    %3983 = vmatpush1.bf16.msra.mxu0 0
    %3984 = vmatprep.subr.bf16.mxu0 0
    %3985 = vmatpush1.bf16.msra.mxu0 0
    %3986 = vmatprep.subr.bf16.mxu0 0
    %3987 = vmatpush1.bf16.msra.mxu0 0
    %3988 = vmatprep.subr.bf16.mxu0 0
    %3989 = vmatpush1.bf16.msra.mxu0 0
    %3990 = vmatprep.subr.bf16.mxu0 0
    %3991 = vmatpush1.bf16.msra.mxu0 0
    %3992 = vmatprep.subr.bf16.mxu0 0
    %3993 = vmatpush1.bf16.msra.mxu0 0
    %3994 = vmatprep.subr.bf16.mxu0 0
    %3995 = vmatpush1.bf16.msra.mxu0 0
    %3996 = vmatprep.subr.bf16.mxu0 0
    %3997 = vmatpush1.bf16.msra.mxu0 0
    %3998 = vmatprep.subr.bf16.mxu0 0
    %3999 = vmatpush1.bf16.msra.mxu0 0
    %4000 = vmatprep.mubr.bf16.mxu0 0
    %4001 = vmatmul.mubr.bf16.gmra.mrb[0].mxu0 %v3794
    %v4002 = vpop.f32.mrb[0].mxu0
    %v4003 = vadd.f32 %v3651, %v4002
    %v4004 = vpop.f32.mrb[0].mxu0
    %v4005 = vadd.f32 %v3653, %v4004
    %v4006 = vpop.f32.mrb[0].mxu0
    %v4007 = vadd.f32 %v3655, %v4006
    %v4008 = vpop.f32.mrb[0].mxu0
    %v4009 = vadd.f32 %v3657, %v4008
    %4010 = vdwg.mxu0
    %4011 = vmatprep.subr.bf16.mxu0 %v1466
    %4012 = vmatpush1.bf16.msra.mxu0 %v1465
    %4013 = vmatprep.subr.bf16.mxu0 %v1482
    %4014 = vmatpush1.bf16.msra.mxu0 %v1481
    %4015 = vmatprep.subr.bf16.mxu0 %v1498
    %4016 = vmatpush1.bf16.msra.mxu0 %v1497
    %4017 = vmatprep.subr.bf16.mxu0 %v1514
    %4018 = vmatpush1.bf16.msra.mxu0 %v1513
    %4019 = vmatprep.subr.bf16.mxu0 0
    %4020 = vmatpush1.bf16.msra.mxu0 0
    %4021 = vmatprep.subr.bf16.mxu0 0
    %4022 = vmatpush1.bf16.msra.mxu0 0
    %4023 = vmatprep.subr.bf16.mxu0 0
    %4024 = vmatpush1.bf16.msra.mxu0 0
    %4025 = vmatprep.subr.bf16.mxu0 0
    %4026 = vmatpush1.bf16.msra.mxu0 0
    %4027 = vmatprep.subr.bf16.mxu0 0
    %4028 = vmatpush1.bf16.msra.mxu0 0
    %4029 = vmatprep.subr.bf16.mxu0 0
    %4030 = vmatpush1.bf16.msra.mxu0 0
    %4031 = vmatprep.subr.bf16.mxu0 0
    %4032 = vmatpush1.bf16.msra.mxu0 0
    %4033 = vmatprep.subr.bf16.mxu0 0
    %4034 = vmatpush1.bf16.msra.mxu0 0
    %4035 = vmatprep.subr.bf16.mxu0 0
    %4036 = vmatpush1.bf16.msra.mxu0 0
    %4037 = vmatprep.subr.bf16.mxu0 0
    %4038 = vmatpush1.bf16.msra.mxu0 0
    %4039 = vmatprep.subr.bf16.mxu0 0
    %4040 = vmatpush1.bf16.msra.mxu0 0
    %4041 = vmatprep.subr.bf16.mxu0 0
    %4042 = vmatpush1.bf16.msra.mxu0 0
    %4043 = vmatprep.mubr.bf16.mxu0 0
    %4044 = vmatmul.mubr.bf16.gmra.mrb[0].mxu0 %v3794
    %v4045 = vpop.f32.mrb[0].mxu0
    %v4046 = vadd.f32 %v3694, %v4045
    %v4047 = vpop.f32.mrb[0].mxu0
    %v4048 = vadd.f32 %v3696, %v4047
    %v4049 = vpop.f32.mrb[0].mxu0
    %v4050 = vadd.f32 %v3698, %v4049
    %v4051 = vpop.f32.mrb[0].mxu0
    %v4052 = vadd.f32 %v3700, %v4051
    %4053 = vdwg.mxu0
    %4054 = vmatprep.subr.bf16.mxu0 %v1468
    %4055 = vmatpush1.bf16.msra.mxu0 %v1467
    %4056 = vmatprep.subr.bf16.mxu0 %v1484
    %4057 = vmatpush1.bf16.msra.mxu0 %v1483
    %4058 = vmatprep.subr.bf16.mxu0 %v1500
    %4059 = vmatpush1.bf16.msra.mxu0 %v1499
    %4060 = vmatprep.subr.bf16.mxu0 %v1516
    %4061 = vmatpush1.bf16.msra.mxu0 %v1515
    %4062 = vmatprep.subr.bf16.mxu0 0
    %4063 = vmatpush1.bf16.msra.mxu0 0
    %4064 = vmatprep.subr.bf16.mxu0 0
    %4065 = vmatpush1.bf16.msra.mxu0 0
    %4066 = vmatprep.subr.bf16.mxu0 0
    %4067 = vmatpush1.bf16.msra.mxu0 0
    %4068 = vmatprep.subr.bf16.mxu0 0
    %4069 = vmatpush1.bf16.msra.mxu0 0
    %4070 = vmatprep.subr.bf16.mxu0 0
    %4071 = vmatpush1.bf16.msra.mxu0 0
    %4072 = vmatprep.subr.bf16.mxu0 0
    %4073 = vmatpush1.bf16.msra.mxu0 0
    %4074 = vmatprep.subr.bf16.mxu0 0
    %4075 = vmatpush1.bf16.msra.mxu0 0
    %4076 = vmatprep.subr.bf16.mxu0 0
    %4077 = vmatpush1.bf16.msra.mxu0 0
    %4078 = vmatprep.subr.bf16.mxu0 0
    %4079 = vmatpush1.bf16.msra.mxu0 0
    %4080 = vmatprep.subr.bf16.mxu0 0
    %4081 = vmatpush1.bf16.msra.mxu0 0
    %4082 = vmatprep.subr.bf16.mxu0 0
    %4083 = vmatpush1.bf16.msra.mxu0 0
    %4084 = vmatprep.subr.bf16.mxu0 0
    %4085 = vmatpush1.bf16.msra.mxu0 0
    %4086 = vmatprep.mubr.bf16.mxu0 0
    %4087 = vmatmul.mubr.bf16.gmra.mrb[0].mxu0 %v3794
    %v4088 = vpop.f32.mrb[0].mxu0
    %v4089 = vadd.f32 %v3737, %v4088
    %v4090 = vpop.f32.mrb[0].mxu0
    %v4091 = vadd.f32 %v3739, %v4090
    %v4092 = vpop.f32.mrb[0].mxu0
    %v4093 = vadd.f32 %v3741, %v4092
    %v4094 = vpop.f32.mrb[0].mxu0
    %v4095 = vadd.f32 %v3743, %v4094
    %4096 = vdwg.mxu0
    %4097 = vmatprep.subr.bf16.mxu0 %v1470
    %4098 = vmatpush1.bf16.msra.mxu0 %v1469
    %4099 = vmatprep.subr.bf16.mxu0 %v1486
    %4100 = vmatpush1.bf16.msra.mxu0 %v1485
    %4101 = vmatprep.subr.bf16.mxu0 %v1502
    %4102 = vmatpush1.bf16.msra.mxu0 %v1501
    %4103 = vmatprep.subr.bf16.mxu0 %v1518
    %4104 = vmatpush1.bf16.msra.mxu0 %v1517
    %4105 = vmatprep.subr.bf16.mxu0 0
    %4106 = vmatpush1.bf16.msra.mxu0 0
    %4107 = vmatprep.subr.bf16.mxu0 0
    %4108 = vmatpush1.bf16.msra.mxu0 0
    %4109 = vmatprep.subr.bf16.mxu0 0
    %4110 = vmatpush1.bf16.msra.mxu0 0
    %4111 = vmatprep.subr.bf16.mxu0 0
    %4112 = vmatpush1.bf16.msra.mxu0 0
    %4113 = vmatprep.subr.bf16.mxu0 0
    %4114 = vmatpush1.bf16.msra.mxu0 0
    %4115 = vmatprep.subr.bf16.mxu0 0
    %4116 = vmatpush1.bf16.msra.mxu0 0
    %4117 = vmatprep.subr.bf16.mxu0 0
    %4118 = vmatpush1.bf16.msra.mxu0 0
    %4119 = vmatprep.subr.bf16.mxu0 0
    %4120 = vmatpush1.bf16.msra.mxu0 0
    %4121 = vmatprep.subr.bf16.mxu0 0
    %4122 = vmatpush1.bf16.msra.mxu0 0
    %4123 = vmatprep.subr.bf16.mxu0 0
    %4124 = vmatpush1.bf16.msra.mxu0 0
    %4125 = vmatprep.subr.bf16.mxu0 0
    %4126 = vmatpush1.bf16.msra.mxu0 0
    %4127 = vmatprep.subr.bf16.mxu0 0
    %4128 = vmatpush1.bf16.msra.mxu0 0
    %4129 = vmatprep.mubr.bf16.mxu0 0
    %4130 = vmatmul.mubr.bf16.gmra.mrb[0].mxu0 %v3794
    %v4131 = vpop.f32.mrb[0].mxu0
    %v4132 = vadd.f32 %v3780, %v4131
    %v4133 = vpop.f32.mrb[0].mxu0
    %v4134 = vadd.f32 %v3782, %v4133
    %v4135 = vpop.f32.mrb[0].mxu0
    %v4136 = vadd.f32 %v3784, %v4135
    %v4137 = vpop.f32.mrb[0].mxu0
    %v4138 = vadd.f32 %v3786, %v4137
    %4139 = vdwg.mxu0
    %v4140 = vunpack.c.l.b16 %v3433
    %v4141 = vunpack.c.l.b16 %v3437
    %v4142 = vpack.c.b16 %v4141, %v4140
    %v4144 = vsel %vm910, %v4142, 0
    %4146 = vmatprep.subr.bf16.mxu0 %v2126
    %4147 = vmatpush1.bf16.msra.mxu0 %v2125
    %4148 = vmatprep.subr.bf16.mxu0 %v2142
    %4149 = vmatpush1.bf16.msra.mxu0 %v2141
    %4150 = vmatprep.subr.bf16.mxu0 %v2158
    %4151 = vmatpush1.bf16.msra.mxu0 %v2157
    %4152 = vmatprep.subr.bf16.mxu0 %v2174
    %4153 = vmatpush1.bf16.msra.mxu0 %v2173
    %4154 = vmatprep.subr.bf16.mxu0 0
    %4155 = vmatpush1.bf16.msra.mxu0 0
    %4156 = vmatprep.subr.bf16.mxu0 0
    %4157 = vmatpush1.bf16.msra.mxu0 0
    %4158 = vmatprep.subr.bf16.mxu0 0
    %4159 = vmatpush1.bf16.msra.mxu0 0
    %4160 = vmatprep.subr.bf16.mxu0 0
    %4161 = vmatpush1.bf16.msra.mxu0 0
    %4162 = vmatprep.subr.bf16.mxu0 0
    %4163 = vmatpush1.bf16.msra.mxu0 0
    %4164 = vmatprep.subr.bf16.mxu0 0
    %4165 = vmatpush1.bf16.msra.mxu0 0
    %4166 = vmatprep.subr.bf16.mxu0 0
    %4167 = vmatpush1.bf16.msra.mxu0 0
    %4168 = vmatprep.subr.bf16.mxu0 0
    %4169 = vmatpush1.bf16.msra.mxu0 0
    %4170 = vmatprep.subr.bf16.mxu0 0
    %4171 = vmatpush1.bf16.msra.mxu0 0
    %4172 = vmatprep.subr.bf16.mxu0 0
    %4173 = vmatpush1.bf16.msra.mxu0 0
    %4174 = vmatprep.subr.bf16.mxu0 0
    %4175 = vmatpush1.bf16.msra.mxu0 0
    %4176 = vmatprep.subr.bf16.mxu0 0
    %4177 = vmatpush1.bf16.msra.mxu0 0
    %4178 = vmatprep.mubr.bf16.mxu0 0
    %4179 = vmatmul.mubr.bf16.gmra.mrb[0].mxu0 %v4144
    %v4180 = vpop.f32.mrb[0].mxu0
    %v4181 = vadd.f32 0.0, %v4180
    %v4182 = vpop.f32.mrb[0].mxu0
    %v4183 = vadd.f32 0.0, %v4182
    %v4184 = vpop.f32.mrb[0].mxu0
    %v4185 = vadd.f32 0.0, %v4184
    %v4186 = vpop.f32.mrb[0].mxu0
    %v4187 = vadd.f32 0.0, %v4186
    %4188 = vdwg.mxu0
    %4189 = vmatprep.subr.bf16.mxu0 %v2128
    %4190 = vmatpush1.bf16.msra.mxu0 %v2127
    %4191 = vmatprep.subr.bf16.mxu0 %v2144
    %4192 = vmatpush1.bf16.msra.mxu0 %v2143
    %4193 = vmatprep.subr.bf16.mxu0 %v2160
    %4194 = vmatpush1.bf16.msra.mxu0 %v2159
    %4195 = vmatprep.subr.bf16.mxu0 %v2176
    %4196 = vmatpush1.bf16.msra.mxu0 %v2175
    %4197 = vmatprep.subr.bf16.mxu0 0
    %4198 = vmatpush1.bf16.msra.mxu0 0
    %4199 = vmatprep.subr.bf16.mxu0 0
    %4200 = vmatpush1.bf16.msra.mxu0 0
    %4201 = vmatprep.subr.bf16.mxu0 0
    %4202 = vmatpush1.bf16.msra.mxu0 0
    %4203 = vmatprep.subr.bf16.mxu0 0
    %4204 = vmatpush1.bf16.msra.mxu0 0
    %4205 = vmatprep.subr.bf16.mxu0 0
    %4206 = vmatpush1.bf16.msra.mxu0 0
    %4207 = vmatprep.subr.bf16.mxu0 0
    %4208 = vmatpush1.bf16.msra.mxu0 0
    %4209 = vmatprep.subr.bf16.mxu0 0
    %4210 = vmatpush1.bf16.msra.mxu0 0
    %4211 = vmatprep.subr.bf16.mxu0 0
    %4212 = vmatpush1.bf16.msra.mxu0 0
    %4213 = vmatprep.subr.bf16.mxu0 0
    %4214 = vmatpush1.bf16.msra.mxu0 0
    %4215 = vmatprep.subr.bf16.mxu0 0
    %4216 = vmatpush1.bf16.msra.mxu0 0
    %4217 = vmatprep.subr.bf16.mxu0 0
    %4218 = vmatpush1.bf16.msra.mxu0 0
    %4219 = vmatprep.subr.bf16.mxu0 0
    %4220 = vmatpush1.bf16.msra.mxu0 0
    %4221 = vmatprep.mubr.bf16.mxu0 0
    %4222 = vmatmul.mubr.bf16.gmra.mrb[0].mxu0 %v4144
    %v4223 = vpop.f32.mrb[0].mxu0
    %v4224 = vadd.f32 0.0, %v4223
    %v4225 = vpop.f32.mrb[0].mxu0
    %v4226 = vadd.f32 0.0, %v4225
    %v4227 = vpop.f32.mrb[0].mxu0
    %v4228 = vadd.f32 0.0, %v4227
    %v4229 = vpop.f32.mrb[0].mxu0
    %v4230 = vadd.f32 0.0, %v4229
    %4231 = vdwg.mxu0
    %4232 = vmatprep.subr.bf16.mxu0 %v2130
    %4233 = vmatpush1.bf16.msra.mxu0 %v2129
    %4234 = vmatprep.subr.bf16.mxu0 %v2146
    %4235 = vmatpush1.bf16.msra.mxu0 %v2145
    %4236 = vmatprep.subr.bf16.mxu0 %v2162
    %4237 = vmatpush1.bf16.msra.mxu0 %v2161
    %4238 = vmatprep.subr.bf16.mxu0 %v2178
    %4239 = vmatpush1.bf16.msra.mxu0 %v2177
    %4240 = vmatprep.subr.bf16.mxu0 0
    %4241 = vmatpush1.bf16.msra.mxu0 0
    %4242 = vmatprep.subr.bf16.mxu0 0
    %4243 = vmatpush1.bf16.msra.mxu0 0
    %4244 = vmatprep.subr.bf16.mxu0 0
    %4245 = vmatpush1.bf16.msra.mxu0 0
    %4246 = vmatprep.subr.bf16.mxu0 0
    %4247 = vmatpush1.bf16.msra.mxu0 0
    %4248 = vmatprep.subr.bf16.mxu0 0
    %4249 = vmatpush1.bf16.msra.mxu0 0
    %4250 = vmatprep.subr.bf16.mxu0 0
    %4251 = vmatpush1.bf16.msra.mxu0 0
    %4252 = vmatprep.subr.bf16.mxu0 0
    %4253 = vmatpush1.bf16.msra.mxu0 0
    %4254 = vmatprep.subr.bf16.mxu0 0
    %4255 = vmatpush1.bf16.msra.mxu0 0
    %4256 = vmatprep.subr.bf16.mxu0 0
    %4257 = vmatpush1.bf16.msra.mxu0 0
    %4258 = vmatprep.subr.bf16.mxu0 0
    %4259 = vmatpush1.bf16.msra.mxu0 0
    %4260 = vmatprep.subr.bf16.mxu0 0
    %4261 = vmatpush1.bf16.msra.mxu0 0
    %4262 = vmatprep.subr.bf16.mxu0 0
    %4263 = vmatpush1.bf16.msra.mxu0 0
    %4264 = vmatprep.mubr.bf16.mxu0 0
    %4265 = vmatmul.mubr.bf16.gmra.mrb[0].mxu0 %v4144
    %v4266 = vpop.f32.mrb[0].mxu0
    %v4267 = vadd.f32 0.0, %v4266
    %v4268 = vpop.f32.mrb[0].mxu0
    %v4269 = vadd.f32 0.0, %v4268
    %v4270 = vpop.f32.mrb[0].mxu0
    %v4271 = vadd.f32 0.0, %v4270
    %v4272 = vpop.f32.mrb[0].mxu0
    %v4273 = vadd.f32 0.0, %v4272
    %4274 = vdwg.mxu0
    %4275 = vmatprep.subr.bf16.mxu0 %v2132
    %4276 = vmatpush1.bf16.msra.mxu0 %v2131
    %4277 = vmatprep.subr.bf16.mxu0 %v2148
    %4278 = vmatpush1.bf16.msra.mxu0 %v2147
    %4279 = vmatprep.subr.bf16.mxu0 %v2164
    %4280 = vmatpush1.bf16.msra.mxu0 %v2163
    %4281 = vmatprep.subr.bf16.mxu0 %v2180
    %4282 = vmatpush1.bf16.msra.mxu0 %v2179
    %4283 = vmatprep.subr.bf16.mxu0 0
    %4284 = vmatpush1.bf16.msra.mxu0 0
    %4285 = vmatprep.subr.bf16.mxu0 0
    %4286 = vmatpush1.bf16.msra.mxu0 0
    %4287 = vmatprep.subr.bf16.mxu0 0
    %4288 = vmatpush1.bf16.msra.mxu0 0
    %4289 = vmatprep.subr.bf16.mxu0 0
    %4290 = vmatpush1.bf16.msra.mxu0 0
    %4291 = vmatprep.subr.bf16.mxu0 0
    %4292 = vmatpush1.bf16.msra.mxu0 0
    %4293 = vmatprep.subr.bf16.mxu0 0
    %4294 = vmatpush1.bf16.msra.mxu0 0
    %4295 = vmatprep.subr.bf16.mxu0 0
    %4296 = vmatpush1.bf16.msra.mxu0 0
    %4297 = vmatprep.subr.bf16.mxu0 0
    %4298 = vmatpush1.bf16.msra.mxu0 0
    %4299 = vmatprep.subr.bf16.mxu0 0
    %4300 = vmatpush1.bf16.msra.mxu0 0
    %4301 = vmatprep.subr.bf16.mxu0 0
    %4302 = vmatpush1.bf16.msra.mxu0 0
    %4303 = vmatprep.subr.bf16.mxu0 0
    %4304 = vmatpush1.bf16.msra.mxu0 0
    %4305 = vmatprep.subr.bf16.mxu0 0
    %4306 = vmatpush1.bf16.msra.mxu0 0
    %4307 = vmatprep.mubr.bf16.mxu0 0
    %4308 = vmatmul.mubr.bf16.gmra.mrb[0].mxu0 %v4144
    %v4309 = vpop.f32.mrb[0].mxu0
    %v4310 = vadd.f32 0.0, %v4309
    %v4311 = vpop.f32.mrb[0].mxu0
    %v4312 = vadd.f32 0.0, %v4311
    %v4313 = vpop.f32.mrb[0].mxu0
    %v4314 = vadd.f32 0.0, %v4313
    %v4315 = vpop.f32.mrb[0].mxu0
    %v4316 = vadd.f32 0.0, %v4315
    %4317 = vdwg.mxu0
    %4318 = vmatprep.subr.bf16.mxu0 %v2134
    %4319 = vmatpush1.bf16.msra.mxu0 %v2133
    %4320 = vmatprep.subr.bf16.mxu0 %v2150
    %4321 = vmatpush1.bf16.msra.mxu0 %v2149
    %4322 = vmatprep.subr.bf16.mxu0 %v2166
    %4323 = vmatpush1.bf16.msra.mxu0 %v2165
    %4324 = vmatprep.subr.bf16.mxu0 %v2182
    %4325 = vmatpush1.bf16.msra.mxu0 %v2181
    %4326 = vmatprep.subr.bf16.mxu0 0
    %4327 = vmatpush1.bf16.msra.mxu0 0
    %4328 = vmatprep.subr.bf16.mxu0 0
    %4329 = vmatpush1.bf16.msra.mxu0 0
    %4330 = vmatprep.subr.bf16.mxu0 0
    %4331 = vmatpush1.bf16.msra.mxu0 0
    %4332 = vmatprep.subr.bf16.mxu0 0
    %4333 = vmatpush1.bf16.msra.mxu0 0
    %4334 = vmatprep.subr.bf16.mxu0 0
    %4335 = vmatpush1.bf16.msra.mxu0 0
    %4336 = vmatprep.subr.bf16.mxu0 0
    %4337 = vmatpush1.bf16.msra.mxu0 0
    %4338 = vmatprep.subr.bf16.mxu0 0
    %4339 = vmatpush1.bf16.msra.mxu0 0
    %4340 = vmatprep.subr.bf16.mxu0 0
    %4341 = vmatpush1.bf16.msra.mxu0 0
    %4342 = vmatprep.subr.bf16.mxu0 0
    %4343 = vmatpush1.bf16.msra.mxu0 0
    %4344 = vmatprep.subr.bf16.mxu0 0
    %4345 = vmatpush1.bf16.msra.mxu0 0
    %4346 = vmatprep.subr.bf16.mxu0 0
    %4347 = vmatpush1.bf16.msra.mxu0 0
    %4348 = vmatprep.subr.bf16.mxu0 0
    %4349 = vmatpush1.bf16.msra.mxu0 0
    %4350 = vmatprep.mubr.bf16.mxu0 0
    %4351 = vmatmul.mubr.bf16.gmra.mrb[0].mxu0 %v4144
    %v4352 = vpop.f32.mrb[0].mxu0
    %v4353 = vadd.f32 0.0, %v4352
    %v4354 = vpop.f32.mrb[0].mxu0
    %v4355 = vadd.f32 0.0, %v4354
    %v4356 = vpop.f32.mrb[0].mxu0
    %v4357 = vadd.f32 0.0, %v4356
    %v4358 = vpop.f32.mrb[0].mxu0
    %v4359 = vadd.f32 0.0, %v4358
    %4360 = vdwg.mxu0
    %4361 = vmatprep.subr.bf16.mxu0 %v2136
    %4362 = vmatpush1.bf16.msra.mxu0 %v2135
    %4363 = vmatprep.subr.bf16.mxu0 %v2152
    %4364 = vmatpush1.bf16.msra.mxu0 %v2151
    %4365 = vmatprep.subr.bf16.mxu0 %v2168
    %4366 = vmatpush1.bf16.msra.mxu0 %v2167
    %4367 = vmatprep.subr.bf16.mxu0 %v2184
    %4368 = vmatpush1.bf16.msra.mxu0 %v2183
    %4369 = vmatprep.subr.bf16.mxu0 0
    %4370 = vmatpush1.bf16.msra.mxu0 0
    %4371 = vmatprep.subr.bf16.mxu0 0
    %4372 = vmatpush1.bf16.msra.mxu0 0
    %4373 = vmatprep.subr.bf16.mxu0 0
    %4374 = vmatpush1.bf16.msra.mxu0 0
    %4375 = vmatprep.subr.bf16.mxu0 0
    %4376 = vmatpush1.bf16.msra.mxu0 0
    %4377 = vmatprep.subr.bf16.mxu0 0
    %4378 = vmatpush1.bf16.msra.mxu0 0
    %4379 = vmatprep.subr.bf16.mxu0 0
    %4380 = vmatpush1.bf16.msra.mxu0 0
    %4381 = vmatprep.subr.bf16.mxu0 0
    %4382 = vmatpush1.bf16.msra.mxu0 0
    %4383 = vmatprep.subr.bf16.mxu0 0
    %4384 = vmatpush1.bf16.msra.mxu0 0
    %4385 = vmatprep.subr.bf16.mxu0 0
    %4386 = vmatpush1.bf16.msra.mxu0 0
    %4387 = vmatprep.subr.bf16.mxu0 0
    %4388 = vmatpush1.bf16.msra.mxu0 0
    %4389 = vmatprep.subr.bf16.mxu0 0
    %4390 = vmatpush1.bf16.msra.mxu0 0
    %4391 = vmatprep.subr.bf16.mxu0 0
    %4392 = vmatpush1.bf16.msra.mxu0 0
    %4393 = vmatprep.mubr.bf16.mxu0 0
    %4394 = vmatmul.mubr.bf16.gmra.mrb[0].mxu0 %v4144
    %v4395 = vpop.f32.mrb[0].mxu0
    %v4396 = vadd.f32 0.0, %v4395
    %v4397 = vpop.f32.mrb[0].mxu0
    %v4398 = vadd.f32 0.0, %v4397
    %v4399 = vpop.f32.mrb[0].mxu0
    %v4400 = vadd.f32 0.0, %v4399
    %v4401 = vpop.f32.mrb[0].mxu0
    %v4402 = vadd.f32 0.0, %v4401
    %4403 = vdwg.mxu0
    %4404 = vmatprep.subr.bf16.mxu0 %v2138
    %4405 = vmatpush1.bf16.msra.mxu0 %v2137
    %4406 = vmatprep.subr.bf16.mxu0 %v2154
    %4407 = vmatpush1.bf16.msra.mxu0 %v2153
    %4408 = vmatprep.subr.bf16.mxu0 %v2170
    %4409 = vmatpush1.bf16.msra.mxu0 %v2169
    %4410 = vmatprep.subr.bf16.mxu0 %v2186
    %4411 = vmatpush1.bf16.msra.mxu0 %v2185
    %4412 = vmatprep.subr.bf16.mxu0 0
    %4413 = vmatpush1.bf16.msra.mxu0 0
    %4414 = vmatprep.subr.bf16.mxu0 0
    %4415 = vmatpush1.bf16.msra.mxu0 0
    %4416 = vmatprep.subr.bf16.mxu0 0
    %4417 = vmatpush1.bf16.msra.mxu0 0
    %4418 = vmatprep.subr.bf16.mxu0 0
    %4419 = vmatpush1.bf16.msra.mxu0 0
    %4420 = vmatprep.subr.bf16.mxu0 0
    %4421 = vmatpush1.bf16.msra.mxu0 0
    %4422 = vmatprep.subr.bf16.mxu0 0
    %4423 = vmatpush1.bf16.msra.mxu0 0
    %4424 = vmatprep.subr.bf16.mxu0 0
    %4425 = vmatpush1.bf16.msra.mxu0 0
    %4426 = vmatprep.subr.bf16.mxu0 0
    %4427 = vmatpush1.bf16.msra.mxu0 0
    %4428 = vmatprep.subr.bf16.mxu0 0
    %4429 = vmatpush1.bf16.msra.mxu0 0
    %4430 = vmatprep.subr.bf16.mxu0 0
    %4431 = vmatpush1.bf16.msra.mxu0 0
    %4432 = vmatprep.subr.bf16.mxu0 0
    %4433 = vmatpush1.bf16.msra.mxu0 0
    %4434 = vmatprep.subr.bf16.mxu0 0
    %4435 = vmatpush1.bf16.msra.mxu0 0
    %4436 = vmatprep.mubr.bf16.mxu0 0
    %4437 = vmatmul.mubr.bf16.gmra.mrb[0].mxu0 %v4144
    %v4438 = vpop.f32.mrb[0].mxu0
    %v4439 = vadd.f32 0.0, %v4438
    %v4440 = vpop.f32.mrb[0].mxu0
    %v4441 = vadd.f32 0.0, %v4440
    %v4442 = vpop.f32.mrb[0].mxu0
    %v4443 = vadd.f32 0.0, %v4442
    %v4444 = vpop.f32.mrb[0].mxu0
    %v4445 = vadd.f32 0.0, %v4444
    %4446 = vdwg.mxu0
    %4447 = vmatprep.subr.bf16.mxu0 %v2140
    %4448 = vmatpush1.bf16.msra.mxu0 %v2139
    %4449 = vmatprep.subr.bf16.mxu0 %v2156
    %4450 = vmatpush1.bf16.msra.mxu0 %v2155
    %4451 = vmatprep.subr.bf16.mxu0 %v2172
    %4452 = vmatpush1.bf16.msra.mxu0 %v2171
    %4453 = vmatprep.subr.bf16.mxu0 %v2188
    %4454 = vmatpush1.bf16.msra.mxu0 %v2187
    %4455 = vmatprep.subr.bf16.mxu0 0
    %4456 = vmatpush1.bf16.msra.mxu0 0
    %4457 = vmatprep.subr.bf16.mxu0 0
    %4458 = vmatpush1.bf16.msra.mxu0 0
    %4459 = vmatprep.subr.bf16.mxu0 0
    %4460 = vmatpush1.bf16.msra.mxu0 0
    %4461 = vmatprep.subr.bf16.mxu0 0
    %4462 = vmatpush1.bf16.msra.mxu0 0
    %4463 = vmatprep.subr.bf16.mxu0 0
    %4464 = vmatpush1.bf16.msra.mxu0 0
    %4465 = vmatprep.subr.bf16.mxu0 0
    %4466 = vmatpush1.bf16.msra.mxu0 0
    %4467 = vmatprep.subr.bf16.mxu0 0
    %4468 = vmatpush1.bf16.msra.mxu0 0
    %4469 = vmatprep.subr.bf16.mxu0 0
    %4470 = vmatpush1.bf16.msra.mxu0 0
    %4471 = vmatprep.subr.bf16.mxu0 0
    %4472 = vmatpush1.bf16.msra.mxu0 0
    %4473 = vmatprep.subr.bf16.mxu0 0
    %4474 = vmatpush1.bf16.msra.mxu0 0
    %4475 = vmatprep.subr.bf16.mxu0 0
    %4476 = vmatpush1.bf16.msra.mxu0 0
    %4477 = vmatprep.subr.bf16.mxu0 0
    %4478 = vmatpush1.bf16.msra.mxu0 0
    %4479 = vmatprep.mubr.bf16.mxu0 0
    %4480 = vmatmul.mubr.bf16.gmra.mrb[0].mxu0 %v4144
    %v4481 = vpop.f32.mrb[0].mxu0
    %v4482 = vadd.f32 0.0, %v4481
    %v4483 = vpop.f32.mrb[0].mxu0
    %v4484 = vadd.f32 0.0, %v4483
    %v4485 = vpop.f32.mrb[0].mxu0
    %v4486 = vadd.f32 0.0, %v4485
    %v4487 = vpop.f32.mrb[0].mxu0
    %v4488 = vadd.f32 0.0, %v4487
    %4489 = vdwg.mxu0
    %v4490 = vadd.f32 %v3831, %v4181
    %v4491 = vadd.f32 %v3833, %v4183
    %v4492 = vadd.f32 %v3874, %v4224
    %v4493 = vadd.f32 %v3876, %v4226
    %v4494 = vadd.f32 %v3917, %v4267
    %v4495 = vadd.f32 %v3919, %v4269
    %v4496 = vadd.f32 %v3960, %v4310
    %v4497 = vadd.f32 %v3962, %v4312
    %v4498 = vadd.f32 %v4003, %v4353
    %v4499 = vadd.f32 %v4005, %v4355
    %v4500 = vadd.f32 %v4046, %v4396
    %v4501 = vadd.f32 %v4048, %v4398
    %v4502 = vadd.f32 %v4089, %v4439
    %v4503 = vadd.f32 %v4091, %v4441
    %v4504 = vadd.f32 %v4132, %v4482
    %v4505 = vadd.f32 %v4134, %v4484
    %v4506 = vadd.f32 %v3835, %v4185
    %v4507 = vadd.f32 %v3837, %v4187
    %v4508 = vadd.f32 %v3878, %v4228
    %v4509 = vadd.f32 %v3880, %v4230
    %v4510 = vadd.f32 %v3921, %v4271
    %v4511 = vadd.f32 %v3923, %v4273
    %v4512 = vadd.f32 %v3964, %v4314
    %v4513 = vadd.f32 %v3966, %v4316
    %v4514 = vadd.f32 %v4007, %v4357
    %v4515 = vadd.f32 %v4009, %v4359
    %v4516 = vadd.f32 %v4050, %v4400
    %v4517 = vadd.f32 %v4052, %v4402
    %v4518 = vadd.f32 %v4093, %v4443
    %v4519 = vadd.f32 %v4095, %v4445
    %v4520 = vadd.f32 %v4136, %v4486
    %v4521 = vadd.f32 %v4138, %v4488
    %v4522 = vadd.f32 %v4490, %v2637
    %v4523 = vadd.f32 %v4491, %v2641
    %v4524 = vadd.f32 %v4492, %v2645
    %v4525 = vadd.f32 %v4493, %v2649
    %v4526 = vadd.f32 %v4494, %v2653
    %v4527 = vadd.f32 %v4495, %v2657
    %v4528 = vadd.f32 %v4496, %v2661
    %v4529 = vadd.f32 %v4497, %v2665
    %v4530 = vadd.f32 %v4498, %v2669
    %v4531 = vadd.f32 %v4499, %v2673
    %v4532 = vadd.f32 %v4500, %v2677
    %v4533 = vadd.f32 %v4501, %v2681
    %v4534 = vadd.f32 %v4502, %v2685
    %v4535 = vadd.f32 %v4503, %v2689
    %v4536 = vadd.f32 %v4504, %v2693
    %v4537 = vadd.f32 %v4505, %v2697
    %v4538 = vadd.f32 %v4506, %v2637
    %v4539 = vadd.f32 %v4507, %v2641
    %v4540 = vadd.f32 %v4508, %v2645
    %v4541 = vadd.f32 %v4509, %v2649
    %v4542 = vadd.f32 %v4510, %v2653
    %v4543 = vadd.f32 %v4511, %v2657
    %v4544 = vadd.f32 %v4512, %v2661
    %v4545 = vadd.f32 %v4513, %v2665
    %v4546 = vadd.f32 %v4514, %v2669
    %v4547 = vadd.f32 %v4515, %v2673
    %v4548 = vadd.f32 %v4516, %v2677
    %v4549 = vadd.f32 %v4517, %v2681
    %v4550 = vadd.f32 %v4518, %v2685
    %v4551 = vadd.f32 %v4519, %v2689
    %v4552 = vadd.f32 %v4520, %v2693
    %v4553 = vadd.f32 %v4521, %v2697
    %v4554 = vmax.f32 %v4522, 0.0
    %v4555 = vmax.f32 %v4523, 0.0
    %v4556 = vmax.f32 %v4524, 0.0
    %v4557 = vmax.f32 %v4525, 0.0
    %v4558 = vmax.f32 %v4526, 0.0
    %v4559 = vmax.f32 %v4527, 0.0
    %v4560 = vmax.f32 %v4528, 0.0
    %v4561 = vmax.f32 %v4529, 0.0
    %v4562 = vmax.f32 %v4530, 0.0
    %v4563 = vmax.f32 %v4531, 0.0
    %v4564 = vmax.f32 %v4532, 0.0
    %v4565 = vmax.f32 %v4533, 0.0
    %v4566 = vmax.f32 %v4534, 0.0
    %v4567 = vmax.f32 %v4535, 0.0
    %v4568 = vmax.f32 %v4536, 0.0
    %v4569 = vmax.f32 %v4537, 0.0
    %v4570 = vmax.f32 %v4538, 0.0
    %v4571 = vmax.f32 %v4539, 0.0
    %v4572 = vmax.f32 %v4540, 0.0
    %v4573 = vmax.f32 %v4541, 0.0
    %v4574 = vmax.f32 %v4542, 0.0
    %v4575 = vmax.f32 %v4543, 0.0
    %v4576 = vmax.f32 %v4544, 0.0
    %v4577 = vmax.f32 %v4545, 0.0
    %v4578 = vmax.f32 %v4546, 0.0
    %v4579 = vmax.f32 %v4547, 0.0
    %v4580 = vmax.f32 %v4548, 0.0
    %v4581 = vmax.f32 %v4549, 0.0
    %v4582 = vmax.f32 %v4550, 0.0
    %v4583 = vmax.f32 %v4551, 0.0
    %v4584 = vmax.f32 %v4552, 0.0
    %v4585 = vmax.f32 %v4553, 0.0
    %4586 = vmatprep.subr.mxu0 0.0
    %4587 = vmatpush1.msra.mxu0 %v279
    %4588 = vmatprep.subr.mxu0 0.0
    %4589 = vmatpush1.msra.mxu0 %v280
    %4590 = vmatprep.subr.mxu0 0.0
    %4591 = vmatpush1.msra.mxu0 %v281
    %4592 = vmatprep.subr.mxu0 0.0
    %4593 = vmatpush1.msra.mxu0 %v282
    %4594 = vmatprep.subr.mxu0 0.0
    %4595 = vmatpush1.msra.mxu0 %v283
    %4596 = vmatprep.subr.mxu0 0.0
    %4597 = vmatpush1.msra.mxu0 %v284
    %4598 = vmatprep.subr.mxu0 0.0
    %4599 = vmatpush1.msra.mxu0 %v285
    %4600 = vmatprep.subr.mxu0 0.0
    %4601 = vmatpush1.msra.mxu0 %v286
    %4602 = vmatprep.subr.mxu0 0.0
    %4603 = vmatpush1.msra.mxu0 %v287
    %4604 = vmatprep.subr.mxu0 0.0
    %4605 = vmatpush1.msra.mxu0 %v288
    %4606 = vmatprep.subr.mxu0 0.0
    %4607 = vmatpush1.msra.mxu0 %v289
    %4608 = vmatprep.subr.mxu0 0.0
    %4609 = vmatpush1.msra.mxu0 %v290
    %4610 = vmatprep.subr.mxu0 0.0
    %4611 = vmatpush1.msra.mxu0 %v291
    %4612 = vmatprep.subr.mxu0 0.0
    %4613 = vmatpush1.msra.mxu0 %v292
    %4614 = vmatprep.subr.mxu0 0.0
    %4615 = vmatpush1.msra.mxu0 %v293
    %4616 = vmatprep.subr.mxu0 0.0
    %4617 = vmatpush1.msra.mxu0 %v294
    %4618 = vmatprep.subr.mxu0 0.0
    %4619 = vmatpush1.msra.mxu0 %v295
    %4620 = vmatprep.subr.mxu0 0.0
    %4621 = vmatpush1.msra.mxu0 %v296
    %4622 = vmatprep.subr.mxu0 0.0
    %4623 = vmatpush1.msra.mxu0 %v297
    %4624 = vmatprep.subr.mxu0 0.0
    %4625 = vmatpush1.msra.mxu0 %v298
    %4626 = vmatprep.subr.mxu0 0.0
    %4627 = vmatpush1.msra.mxu0 %v299
    %4628 = vmatprep.subr.mxu0 0.0
    %4629 = vmatpush1.msra.mxu0 %v300
    %4630 = vmatprep.subr.mxu0 0.0
    %4631 = vmatpush1.msra.mxu0 %v301
    %4632 = vmatprep.subr.mxu0 0.0
    %4633 = vmatpush1.msra.mxu0 %v302
    %4634 = vmatprep.subr.mxu0 0.0
    %4635 = vmatpush1.msra.mxu0 %v303
    %4636 = vmatprep.subr.mxu0 0.0
    %4637 = vmatpush1.msra.mxu0 %v304
    %4638 = vmatprep.subr.mxu0 0.0
    %4639 = vmatpush1.msra.mxu0 %v305
    %4640 = vmatprep.subr.mxu0 0.0
    %4641 = vmatpush1.msra.mxu0 %v306
    %4642 = vmatprep.subr.mxu0 0.0
    %4643 = vmatpush1.msra.mxu0 %v307
    %4644 = vmatprep.subr.mxu0 0.0
    %4645 = vmatpush1.msra.mxu0 %v308
    %4646 = vmatprep.subr.mxu0 0.0
    %4647 = vmatpush1.msra.mxu0 %v309
    %4648 = vmatprep.subr.mxu0 0.0
    %4649 = vmatpush1.msra.mxu0 %v310
    %4650 = vmatprep.mubr.f32.mxu0 %v4555
    %4651 = vmatmul.mubr.f32.gmra.mrb[0].mxu0 %v4554
    %v4652 = vpop.f32.mrb[0].mxu0
    %v4653 = vadd.f32 0.0, %v4652
    %v4654 = vpop.f32.mrb[0].mxu0
    %4655 = vmatprep.mubr.f32.mxu0 %v4571
    %4656 = vmatmul.mubr.f32.gmra.mrb[0].mxu0 %v4570
    %v4657 = vpop.f32.mrb[0].mxu0
    %v4658 = vadd.f32 0.0, %v4657
    %v4659 = vpop.f32.mrb[0].mxu0
    %4660 = vdwg.mxu0
    %4661 = vmatprep.subr.mxu0 0.0
    %4662 = vmatpush1.msra.mxu0 %v311
    %4663 = vmatprep.subr.mxu0 0.0
    %4664 = vmatpush1.msra.mxu0 %v312
    %4665 = vmatprep.subr.mxu0 0.0
    %4666 = vmatpush1.msra.mxu0 %v313
    %4667 = vmatprep.subr.mxu0 0.0
    %4668 = vmatpush1.msra.mxu0 %v314
    %4669 = vmatprep.subr.mxu0 0.0
    %4670 = vmatpush1.msra.mxu0 %v315
    %4671 = vmatprep.subr.mxu0 0.0
    %4672 = vmatpush1.msra.mxu0 %v316
    %4673 = vmatprep.subr.mxu0 0.0
    %4674 = vmatpush1.msra.mxu0 %v317
    %4675 = vmatprep.subr.mxu0 0.0
    %4676 = vmatpush1.msra.mxu0 %v318
    %4677 = vmatprep.subr.mxu0 0.0
    %4678 = vmatpush1.msra.mxu0 %v319
    %4679 = vmatprep.subr.mxu0 0.0
    %4680 = vmatpush1.msra.mxu0 %v320
    %4681 = vmatprep.subr.mxu0 0.0
    %4682 = vmatpush1.msra.mxu0 %v321
    %4683 = vmatprep.subr.mxu0 0.0
    %4684 = vmatpush1.msra.mxu0 %v322
    %4685 = vmatprep.subr.mxu0 0.0
    %4686 = vmatpush1.msra.mxu0 %v323
    %4687 = vmatprep.subr.mxu0 0.0
    %4688 = vmatpush1.msra.mxu0 %v324
    %4689 = vmatprep.subr.mxu0 0.0
    %4690 = vmatpush1.msra.mxu0 %v325
    %4691 = vmatprep.subr.mxu0 0.0
    %4692 = vmatpush1.msra.mxu0 %v326
    %4693 = vmatprep.subr.mxu0 0.0
    %4694 = vmatpush1.msra.mxu0 %v327
    %4695 = vmatprep.subr.mxu0 0.0
    %4696 = vmatpush1.msra.mxu0 %v328
    %4697 = vmatprep.subr.mxu0 0.0
    %4698 = vmatpush1.msra.mxu0 %v329
    %4699 = vmatprep.subr.mxu0 0.0
    %4700 = vmatpush1.msra.mxu0 %v330
    %4701 = vmatprep.subr.mxu0 0.0
    %4702 = vmatpush1.msra.mxu0 %v331
    %4703 = vmatprep.subr.mxu0 0.0
    %4704 = vmatpush1.msra.mxu0 %v332
    %4705 = vmatprep.subr.mxu0 0.0
    %4706 = vmatpush1.msra.mxu0 %v333
    %4707 = vmatprep.subr.mxu0 0.0
    %4708 = vmatpush1.msra.mxu0 %v334
    %4709 = vmatprep.subr.mxu0 0.0
    %4710 = vmatpush1.msra.mxu0 %v335
    %4711 = vmatprep.subr.mxu0 0.0
    %4712 = vmatpush1.msra.mxu0 %v336
    %4713 = vmatprep.subr.mxu0 0.0
    %4714 = vmatpush1.msra.mxu0 %v337
    %4715 = vmatprep.subr.mxu0 0.0
    %4716 = vmatpush1.msra.mxu0 %v338
    %4717 = vmatprep.subr.mxu0 0.0
    %4718 = vmatpush1.msra.mxu0 %v339
    %4719 = vmatprep.subr.mxu0 0.0
    %4720 = vmatpush1.msra.mxu0 %v340
    %4721 = vmatprep.subr.mxu0 0.0
    %4722 = vmatpush1.msra.mxu0 %v341
    %4723 = vmatprep.subr.mxu0 0.0
    %4724 = vmatpush1.msra.mxu0 %v342
    %4725 = vmatprep.mubr.f32.mxu0 %v4557
    %4726 = vmatmul.mubr.f32.gmra.mrb[0].mxu0 %v4556
    %v4727 = vpop.f32.mrb[0].mxu0
    %v4728 = vadd.f32 %v4653, %v4727
    %v4729 = vpop.f32.mrb[0].mxu0
    %4730 = vmatprep.mubr.f32.mxu0 %v4573
    %4731 = vmatmul.mubr.f32.gmra.mrb[0].mxu0 %v4572
    %v4732 = vpop.f32.mrb[0].mxu0
    %v4733 = vadd.f32 %v4658, %v4732
    %v4734 = vpop.f32.mrb[0].mxu0
    %4735 = vdwg.mxu0
    %4736 = vmatprep.subr.mxu0 0.0
    %4737 = vmatpush1.msra.mxu0 %v343
    %4738 = vmatprep.subr.mxu0 0.0
    %4739 = vmatpush1.msra.mxu0 %v344
    %4740 = vmatprep.subr.mxu0 0.0
    %4741 = vmatpush1.msra.mxu0 %v345
    %4742 = vmatprep.subr.mxu0 0.0
    %4743 = vmatpush1.msra.mxu0 %v346
    %4744 = vmatprep.subr.mxu0 0.0
    %4745 = vmatpush1.msra.mxu0 %v347
    %4746 = vmatprep.subr.mxu0 0.0
    %4747 = vmatpush1.msra.mxu0 %v348
    %4748 = vmatprep.subr.mxu0 0.0
    %4749 = vmatpush1.msra.mxu0 %v349
    %4750 = vmatprep.subr.mxu0 0.0
    %4751 = vmatpush1.msra.mxu0 %v350
    %4752 = vmatprep.subr.mxu0 0.0
    %4753 = vmatpush1.msra.mxu0 %v351
    %4754 = vmatprep.subr.mxu0 0.0
    %4755 = vmatpush1.msra.mxu0 %v352
    %4756 = vmatprep.subr.mxu0 0.0
    %4757 = vmatpush1.msra.mxu0 %v353
    %4758 = vmatprep.subr.mxu0 0.0
    %4759 = vmatpush1.msra.mxu0 %v354
    %4760 = vmatprep.subr.mxu0 0.0
    %4761 = vmatpush1.msra.mxu0 %v355
    %4762 = vmatprep.subr.mxu0 0.0
    %4763 = vmatpush1.msra.mxu0 %v356
    %4764 = vmatprep.subr.mxu0 0.0
    %4765 = vmatpush1.msra.mxu0 %v357
    %4766 = vmatprep.subr.mxu0 0.0
    %4767 = vmatpush1.msra.mxu0 %v358
    %4768 = vmatprep.subr.mxu0 0.0
    %4769 = vmatpush1.msra.mxu0 %v359
    %4770 = vmatprep.subr.mxu0 0.0
    %4771 = vmatpush1.msra.mxu0 %v360
    %4772 = vmatprep.subr.mxu0 0.0
    %4773 = vmatpush1.msra.mxu0 %v361
    %4774 = vmatprep.subr.mxu0 0.0
    %4775 = vmatpush1.msra.mxu0 %v362
    %4776 = vmatprep.subr.mxu0 0.0
    %4777 = vmatpush1.msra.mxu0 %v363
    %4778 = vmatprep.subr.mxu0 0.0
    %4779 = vmatpush1.msra.mxu0 %v364
    %4780 = vmatprep.subr.mxu0 0.0
    %4781 = vmatpush1.msra.mxu0 %v365
    %4782 = vmatprep.subr.mxu0 0.0
    %4783 = vmatpush1.msra.mxu0 %v366
    %4784 = vmatprep.subr.mxu0 0.0
    %4785 = vmatpush1.msra.mxu0 %v367
    %4786 = vmatprep.subr.mxu0 0.0
    %4787 = vmatpush1.msra.mxu0 %v368
    %4788 = vmatprep.subr.mxu0 0.0
    %4789 = vmatpush1.msra.mxu0 %v369
    %4790 = vmatprep.subr.mxu0 0.0
    %4791 = vmatpush1.msra.mxu0 %v370
    %4792 = vmatprep.subr.mxu0 0.0
    %4793 = vmatpush1.msra.mxu0 %v371
    %4794 = vmatprep.subr.mxu0 0.0
    %4795 = vmatpush1.msra.mxu0 %v372
    %4796 = vmatprep.subr.mxu0 0.0
    %4797 = vmatpush1.msra.mxu0 %v373
    %4798 = vmatprep.subr.mxu0 0.0
    %4799 = vmatpush1.msra.mxu0 %v374
    %4800 = vmatprep.mubr.f32.mxu0 %v4559
    %4801 = vmatmul.mubr.f32.gmra.mrb[0].mxu0 %v4558
    %v4802 = vpop.f32.mrb[0].mxu0
    %v4803 = vadd.f32 %v4728, %v4802
    %v4804 = vpop.f32.mrb[0].mxu0
    %4805 = vmatprep.mubr.f32.mxu0 %v4575
    %4806 = vmatmul.mubr.f32.gmra.mrb[0].mxu0 %v4574
    %v4807 = vpop.f32.mrb[0].mxu0
    %v4808 = vadd.f32 %v4733, %v4807
    %v4809 = vpop.f32.mrb[0].mxu0
    %4810 = vdwg.mxu0
    %4811 = vmatprep.subr.mxu0 0.0
    %4812 = vmatpush1.msra.mxu0 %v375
    %4813 = vmatprep.subr.mxu0 0.0
    %4814 = vmatpush1.msra.mxu0 %v376
    %4815 = vmatprep.subr.mxu0 0.0
    %4816 = vmatpush1.msra.mxu0 %v377
    %4817 = vmatprep.subr.mxu0 0.0
    %4818 = vmatpush1.msra.mxu0 %v378
    %4819 = vmatprep.subr.mxu0 0.0
    %4820 = vmatpush1.msra.mxu0 %v379
    %4821 = vmatprep.subr.mxu0 0.0
    %4822 = vmatpush1.msra.mxu0 %v380
    %4823 = vmatprep.subr.mxu0 0.0
    %4824 = vmatpush1.msra.mxu0 %v381
    %4825 = vmatprep.subr.mxu0 0.0
    %4826 = vmatpush1.msra.mxu0 %v382
    %4827 = vmatprep.subr.mxu0 0.0
    %4828 = vmatpush1.msra.mxu0 %v383
    %4829 = vmatprep.subr.mxu0 0.0
    %4830 = vmatpush1.msra.mxu0 %v384
    %4831 = vmatprep.subr.mxu0 0.0
    %4832 = vmatpush1.msra.mxu0 %v385
    %4833 = vmatprep.subr.mxu0 0.0
    %4834 = vmatpush1.msra.mxu0 %v386
    %4835 = vmatprep.subr.mxu0 0.0
    %4836 = vmatpush1.msra.mxu0 %v387
    %4837 = vmatprep.subr.mxu0 0.0
    %4838 = vmatpush1.msra.mxu0 %v388
    %4839 = vmatprep.subr.mxu0 0.0
    %4840 = vmatpush1.msra.mxu0 %v389
    %4841 = vmatprep.subr.mxu0 0.0
    %4842 = vmatpush1.msra.mxu0 %v390
    %4843 = vmatprep.subr.mxu0 0.0
    %4844 = vmatpush1.msra.mxu0 %v391
    %4845 = vmatprep.subr.mxu0 0.0
    %4846 = vmatpush1.msra.mxu0 %v392
    %4847 = vmatprep.subr.mxu0 0.0
    %4848 = vmatpush1.msra.mxu0 %v393
    %4849 = vmatprep.subr.mxu0 0.0
    %4850 = vmatpush1.msra.mxu0 %v394
    %4851 = vmatprep.subr.mxu0 0.0
    %4852 = vmatpush1.msra.mxu0 %v395
    %4853 = vmatprep.subr.mxu0 0.0
    %4854 = vmatpush1.msra.mxu0 %v396
    %4855 = vmatprep.subr.mxu0 0.0
    %4856 = vmatpush1.msra.mxu0 %v397
    %4857 = vmatprep.subr.mxu0 0.0
    %4858 = vmatpush1.msra.mxu0 %v398
    %4859 = vmatprep.subr.mxu0 0.0
    %4860 = vmatpush1.msra.mxu0 %v399
    %4861 = vmatprep.subr.mxu0 0.0
    %4862 = vmatpush1.msra.mxu0 %v400
    %4863 = vmatprep.subr.mxu0 0.0
    %4864 = vmatpush1.msra.mxu0 %v401
    %4865 = vmatprep.subr.mxu0 0.0
    %4866 = vmatpush1.msra.mxu0 %v402
    %4867 = vmatprep.subr.mxu0 0.0
    %4868 = vmatpush1.msra.mxu0 %v403
    %4869 = vmatprep.subr.mxu0 0.0
    %4870 = vmatpush1.msra.mxu0 %v404
    %4871 = vmatprep.subr.mxu0 0.0
    %4872 = vmatpush1.msra.mxu0 %v405
    %4873 = vmatprep.subr.mxu0 0.0
    %4874 = vmatpush1.msra.mxu0 %v406
    %4875 = vmatprep.mubr.f32.mxu0 %v4561
    %4876 = vmatmul.mubr.f32.gmra.mrb[0].mxu0 %v4560
    %v4877 = vpop.f32.mrb[0].mxu0
    %v4878 = vadd.f32 %v4803, %v4877
    %v4879 = vpop.f32.mrb[0].mxu0
    %4880 = vmatprep.mubr.f32.mxu0 %v4577
    %4881 = vmatmul.mubr.f32.gmra.mrb[0].mxu0 %v4576
    %v4882 = vpop.f32.mrb[0].mxu0
    %v4883 = vadd.f32 %v4808, %v4882
    %v4884 = vpop.f32.mrb[0].mxu0
    %4885 = vdwg.mxu0
    %4886 = vmatprep.subr.mxu0 0.0
    %4887 = vmatpush1.msra.mxu0 %v407
    %4888 = vmatprep.subr.mxu0 0.0
    %4889 = vmatpush1.msra.mxu0 %v408
    %4890 = vmatprep.subr.mxu0 0.0
    %4891 = vmatpush1.msra.mxu0 %v409
    %4892 = vmatprep.subr.mxu0 0.0
    %4893 = vmatpush1.msra.mxu0 %v410
    %4894 = vmatprep.subr.mxu0 0.0
    %4895 = vmatpush1.msra.mxu0 %v411
    %4896 = vmatprep.subr.mxu0 0.0
    %4897 = vmatpush1.msra.mxu0 %v412
    %4898 = vmatprep.subr.mxu0 0.0
    %4899 = vmatpush1.msra.mxu0 %v413
    %4900 = vmatprep.subr.mxu0 0.0
    %4901 = vmatpush1.msra.mxu0 %v414
    %4902 = vmatprep.subr.mxu0 0.0
    %4903 = vmatpush1.msra.mxu0 %v415
    %4904 = vmatprep.subr.mxu0 0.0
    %4905 = vmatpush1.msra.mxu0 %v416
    %4906 = vmatprep.subr.mxu0 0.0
    %4907 = vmatpush1.msra.mxu0 %v417
    %4908 = vmatprep.subr.mxu0 0.0
    %4909 = vmatpush1.msra.mxu0 %v418
    %4910 = vmatprep.subr.mxu0 0.0
    %4911 = vmatpush1.msra.mxu0 %v419
    %4912 = vmatprep.subr.mxu0 0.0
    %4913 = vmatpush1.msra.mxu0 %v420
    %4914 = vmatprep.subr.mxu0 0.0
    %4915 = vmatpush1.msra.mxu0 %v421
    %4916 = vmatprep.subr.mxu0 0.0
    %4917 = vmatpush1.msra.mxu0 %v422
    %4918 = vmatprep.subr.mxu0 0.0
    %4919 = vmatpush1.msra.mxu0 %v423
    %4920 = vmatprep.subr.mxu0 0.0
    %4921 = vmatpush1.msra.mxu0 %v424
    %4922 = vmatprep.subr.mxu0 0.0
    %4923 = vmatpush1.msra.mxu0 %v425
    %4924 = vmatprep.subr.mxu0 0.0
    %4925 = vmatpush1.msra.mxu0 %v426
    %4926 = vmatprep.subr.mxu0 0.0
    %4927 = vmatpush1.msra.mxu0 %v427
    %4928 = vmatprep.subr.mxu0 0.0
    %4929 = vmatpush1.msra.mxu0 %v428
    %4930 = vmatprep.subr.mxu0 0.0
    %4931 = vmatpush1.msra.mxu0 %v429
    %4932 = vmatprep.subr.mxu0 0.0
    %4933 = vmatpush1.msra.mxu0 %v430
    %4934 = vmatprep.subr.mxu0 0.0
    %4935 = vmatpush1.msra.mxu0 %v431
    %4936 = vmatprep.subr.mxu0 0.0
    %4937 = vmatpush1.msra.mxu0 %v432
    %4938 = vmatprep.subr.mxu0 0.0
    %4939 = vmatpush1.msra.mxu0 %v433
    %4940 = vmatprep.subr.mxu0 0.0
    %4941 = vmatpush1.msra.mxu0 %v434
    %4942 = vmatprep.subr.mxu0 0.0
    %4943 = vmatpush1.msra.mxu0 %v435
    %4944 = vmatprep.subr.mxu0 0.0
    %4945 = vmatpush1.msra.mxu0 %v436
    %4946 = vmatprep.subr.mxu0 0.0
    %4947 = vmatpush1.msra.mxu0 %v437
    %4948 = vmatprep.subr.mxu0 0.0
    %4949 = vmatpush1.msra.mxu0 %v438
    %4950 = vmatprep.mubr.f32.mxu0 %v4563
    %4951 = vmatmul.mubr.f32.gmra.mrb[0].mxu0 %v4562
    %v4952 = vpop.f32.mrb[0].mxu0
    %v4953 = vadd.f32 %v4878, %v4952
    %v4954 = vpop.f32.mrb[0].mxu0
    %4955 = vmatprep.mubr.f32.mxu0 %v4579
    %4956 = vmatmul.mubr.f32.gmra.mrb[0].mxu0 %v4578
    %v4957 = vpop.f32.mrb[0].mxu0
    %v4958 = vadd.f32 %v4883, %v4957
    %v4959 = vpop.f32.mrb[0].mxu0
    %4960 = vdwg.mxu0
    %4961 = vmatprep.subr.mxu0 0.0
    %4962 = vmatpush1.msra.mxu0 %v439
    %4963 = vmatprep.subr.mxu0 0.0
    %4964 = vmatpush1.msra.mxu0 %v440
    %4965 = vmatprep.subr.mxu0 0.0
    %4966 = vmatpush1.msra.mxu0 %v441
    %4967 = vmatprep.subr.mxu0 0.0
    %4968 = vmatpush1.msra.mxu0 %v442
    %4969 = vmatprep.subr.mxu0 0.0
    %4970 = vmatpush1.msra.mxu0 %v443
    %4971 = vmatprep.subr.mxu0 0.0
    %4972 = vmatpush1.msra.mxu0 %v444
    %4973 = vmatprep.subr.mxu0 0.0
    %4974 = vmatpush1.msra.mxu0 %v445
    %4975 = vmatprep.subr.mxu0 0.0
    %4976 = vmatpush1.msra.mxu0 %v446
    %4977 = vmatprep.subr.mxu0 0.0
    %4978 = vmatpush1.msra.mxu0 %v447
    %4979 = vmatprep.subr.mxu0 0.0
    %4980 = vmatpush1.msra.mxu0 %v448
    %4981 = vmatprep.subr.mxu0 0.0
    %4982 = vmatpush1.msra.mxu0 %v449
    %4983 = vmatprep.subr.mxu0 0.0
    %4984 = vmatpush1.msra.mxu0 %v450
    %4985 = vmatprep.subr.mxu0 0.0
    %4986 = vmatpush1.msra.mxu0 %v451
    %4987 = vmatprep.subr.mxu0 0.0
    %4988 = vmatpush1.msra.mxu0 %v452
    %4989 = vmatprep.subr.mxu0 0.0
    %4990 = vmatpush1.msra.mxu0 %v453
    %4991 = vmatprep.subr.mxu0 0.0
    %4992 = vmatpush1.msra.mxu0 %v454
    %4993 = vmatprep.subr.mxu0 0.0
    %4994 = vmatpush1.msra.mxu0 %v455
    %4995 = vmatprep.subr.mxu0 0.0
    %4996 = vmatpush1.msra.mxu0 %v456
    %4997 = vmatprep.subr.mxu0 0.0
    %4998 = vmatpush1.msra.mxu0 %v457
    %4999 = vmatprep.subr.mxu0 0.0
    %5000 = vmatpush1.msra.mxu0 %v458
    %5001 = vmatprep.subr.mxu0 0.0
    %5002 = vmatpush1.msra.mxu0 %v459
    %5003 = vmatprep.subr.mxu0 0.0
    %5004 = vmatpush1.msra.mxu0 %v460
    %5005 = vmatprep.subr.mxu0 0.0
    %5006 = vmatpush1.msra.mxu0 %v461
    %5007 = vmatprep.subr.mxu0 0.0
    %5008 = vmatpush1.msra.mxu0 %v462
    %5009 = vmatprep.subr.mxu0 0.0
    %5010 = vmatpush1.msra.mxu0 %v463
    %5011 = vmatprep.subr.mxu0 0.0
    %5012 = vmatpush1.msra.mxu0 %v464
    %5013 = vmatprep.subr.mxu0 0.0
    %5014 = vmatpush1.msra.mxu0 %v465
    %5015 = vmatprep.subr.mxu0 0.0
    %5016 = vmatpush1.msra.mxu0 %v466
    %5017 = vmatprep.subr.mxu0 0.0
    %5018 = vmatpush1.msra.mxu0 %v467
    %5019 = vmatprep.subr.mxu0 0.0
    %5020 = vmatpush1.msra.mxu0 %v468
    %5021 = vmatprep.subr.mxu0 0.0
    %5022 = vmatpush1.msra.mxu0 %v469
    %5023 = vmatprep.subr.mxu0 0.0
    %5024 = vmatpush1.msra.mxu0 %v470
    %5025 = vmatprep.mubr.f32.mxu0 %v4565
    %5026 = vmatmul.mubr.f32.gmra.mrb[0].mxu0 %v4564
    %v5027 = vpop.f32.mrb[0].mxu0
    %v5028 = vadd.f32 %v4953, %v5027
    %v5029 = vpop.f32.mrb[0].mxu0
    %5030 = vmatprep.mubr.f32.mxu0 %v4581
    %5031 = vmatmul.mubr.f32.gmra.mrb[0].mxu0 %v4580
    %v5032 = vpop.f32.mrb[0].mxu0
    %v5033 = vadd.f32 %v4958, %v5032
    %v5034 = vpop.f32.mrb[0].mxu0
    %5035 = vdwg.mxu0
    %5036 = vmatprep.subr.mxu0 0.0
    %5037 = vmatpush1.msra.mxu0 %v471
    %5038 = vmatprep.subr.mxu0 0.0
    %5039 = vmatpush1.msra.mxu0 %v472
    %5040 = vmatprep.subr.mxu0 0.0
    %5041 = vmatpush1.msra.mxu0 %v473
    %5042 = vmatprep.subr.mxu0 0.0
    %5043 = vmatpush1.msra.mxu0 %v474
    %5044 = vmatprep.subr.mxu0 0.0
    %5045 = vmatpush1.msra.mxu0 %v475
    %5046 = vmatprep.subr.mxu0 0.0
    %5047 = vmatpush1.msra.mxu0 %v476
    %5048 = vmatprep.subr.mxu0 0.0
    %5049 = vmatpush1.msra.mxu0 %v477
    %5050 = vmatprep.subr.mxu0 0.0
    %5051 = vmatpush1.msra.mxu0 %v478
    %5052 = vmatprep.subr.mxu0 0.0
    %5053 = vmatpush1.msra.mxu0 %v479
    %5054 = vmatprep.subr.mxu0 0.0
    %5055 = vmatpush1.msra.mxu0 %v480
    %5056 = vmatprep.subr.mxu0 0.0
    %5057 = vmatpush1.msra.mxu0 %v481
    %5058 = vmatprep.subr.mxu0 0.0
    %5059 = vmatpush1.msra.mxu0 %v482
    %5060 = vmatprep.subr.mxu0 0.0
    %5061 = vmatpush1.msra.mxu0 %v483
    %5062 = vmatprep.subr.mxu0 0.0
    %5063 = vmatpush1.msra.mxu0 %v484
    %5064 = vmatprep.subr.mxu0 0.0
    %5065 = vmatpush1.msra.mxu0 %v485
    %5066 = vmatprep.subr.mxu0 0.0
    %5067 = vmatpush1.msra.mxu0 %v486
    %5068 = vmatprep.subr.mxu0 0.0
    %5069 = vmatpush1.msra.mxu0 %v487
    %5070 = vmatprep.subr.mxu0 0.0
    %5071 = vmatpush1.msra.mxu0 %v488
    %5072 = vmatprep.subr.mxu0 0.0
    %5073 = vmatpush1.msra.mxu0 %v489
    %5074 = vmatprep.subr.mxu0 0.0
    %5075 = vmatpush1.msra.mxu0 %v490
    %5076 = vmatprep.subr.mxu0 0.0
    %5077 = vmatpush1.msra.mxu0 %v491
    %5078 = vmatprep.subr.mxu0 0.0
    %5079 = vmatpush1.msra.mxu0 %v492
    %5080 = vmatprep.subr.mxu0 0.0
    %5081 = vmatpush1.msra.mxu0 %v493
    %5082 = vmatprep.subr.mxu0 0.0
    %5083 = vmatpush1.msra.mxu0 %v494
    %5084 = vmatprep.subr.mxu0 0.0
    %5085 = vmatpush1.msra.mxu0 %v495
    %5086 = vmatprep.subr.mxu0 0.0
    %5087 = vmatpush1.msra.mxu0 %v496
    %5088 = vmatprep.subr.mxu0 0.0
    %5089 = vmatpush1.msra.mxu0 %v497
    %5090 = vmatprep.subr.mxu0 0.0
    %5091 = vmatpush1.msra.mxu0 %v498
    %5092 = vmatprep.subr.mxu0 0.0
    %5093 = vmatpush1.msra.mxu0 %v499
    %5094 = vmatprep.subr.mxu0 0.0
    %5095 = vmatpush1.msra.mxu0 %v500
    %5096 = vmatprep.subr.mxu0 0.0
    %5097 = vmatpush1.msra.mxu0 %v501
    %5098 = vmatprep.subr.mxu0 0.0
    %5099 = vmatpush1.msra.mxu0 %v502
    %5100 = vmatprep.mubr.f32.mxu0 %v4567
    %5101 = vmatmul.mubr.f32.gmra.mrb[0].mxu0 %v4566
    %v5102 = vpop.f32.mrb[0].mxu0
    %v5103 = vadd.f32 %v5028, %v5102
    %v5104 = vpop.f32.mrb[0].mxu0
    %5105 = vmatprep.mubr.f32.mxu0 %v4583
    %5106 = vmatmul.mubr.f32.gmra.mrb[0].mxu0 %v4582
    %v5107 = vpop.f32.mrb[0].mxu0
    %v5108 = vadd.f32 %v5033, %v5107
    %v5109 = vpop.f32.mrb[0].mxu0
    %5110 = vdwg.mxu0
    %5111 = vmatprep.subr.mxu0 0.0
    %5112 = vmatpush1.msra.mxu0 %v503
    %5113 = vmatprep.subr.mxu0 0.0
    %5114 = vmatpush1.msra.mxu0 %v504
    %5115 = vmatprep.subr.mxu0 0.0
    %5116 = vmatpush1.msra.mxu0 %v505
    %5117 = vmatprep.subr.mxu0 0.0
    %5118 = vmatpush1.msra.mxu0 %v506
    %5119 = vmatprep.subr.mxu0 0.0
    %5120 = vmatpush1.msra.mxu0 %v507
    %5121 = vmatprep.subr.mxu0 0.0
    %5122 = vmatpush1.msra.mxu0 %v508
    %5123 = vmatprep.subr.mxu0 0.0
    %5124 = vmatpush1.msra.mxu0 %v509
    %5125 = vmatprep.subr.mxu0 0.0
    %5126 = vmatpush1.msra.mxu0 %v510
    %5127 = vmatprep.subr.mxu0 0.0
    %5128 = vmatpush1.msra.mxu0 %v511
    %5129 = vmatprep.subr.mxu0 0.0
    %5130 = vmatpush1.msra.mxu0 %v512
    %5131 = vmatprep.subr.mxu0 0.0
    %5132 = vmatpush1.msra.mxu0 %v513
    %5133 = vmatprep.subr.mxu0 0.0
    %5134 = vmatpush1.msra.mxu0 %v514
    %5135 = vmatprep.subr.mxu0 0.0
    %5136 = vmatpush1.msra.mxu0 %v515
    %5137 = vmatprep.subr.mxu0 0.0
    %5138 = vmatpush1.msra.mxu0 %v516
    %5139 = vmatprep.subr.mxu0 0.0
    %5140 = vmatpush1.msra.mxu0 %v517
    %5141 = vmatprep.subr.mxu0 0.0
    %5142 = vmatpush1.msra.mxu0 %v518
    %5143 = vmatprep.subr.mxu0 0.0
    %5144 = vmatpush1.msra.mxu0 %v519
    %5145 = vmatprep.subr.mxu0 0.0
    %5146 = vmatpush1.msra.mxu0 %v520
    %5147 = vmatprep.subr.mxu0 0.0
    %5148 = vmatpush1.msra.mxu0 %v521
    %5149 = vmatprep.subr.mxu0 0.0
    %5150 = vmatpush1.msra.mxu0 %v522
    %5151 = vmatprep.subr.mxu0 0.0
    %5152 = vmatpush1.msra.mxu0 %v523
    %5153 = vmatprep.subr.mxu0 0.0
    %5154 = vmatpush1.msra.mxu0 %v524
    %5155 = vmatprep.subr.mxu0 0.0
    %5156 = vmatpush1.msra.mxu0 %v525
    %5157 = vmatprep.subr.mxu0 0.0
    %5158 = vmatpush1.msra.mxu0 %v526
    %5159 = vmatprep.subr.mxu0 0.0
    %5160 = vmatpush1.msra.mxu0 %v527
    %5161 = vmatprep.subr.mxu0 0.0
    %5162 = vmatpush1.msra.mxu0 %v528
    %5163 = vmatprep.subr.mxu0 0.0
    %5164 = vmatpush1.msra.mxu0 %v529
    %5165 = vmatprep.subr.mxu0 0.0
    %5166 = vmatpush1.msra.mxu0 %v530
    %5167 = vmatprep.subr.mxu0 0.0
    %5168 = vmatpush1.msra.mxu0 %v531
    %5169 = vmatprep.subr.mxu0 0.0
    %5170 = vmatpush1.msra.mxu0 %v532
    %5171 = vmatprep.subr.mxu0 0.0
    %5172 = vmatpush1.msra.mxu0 %v533
    %5173 = vmatprep.subr.mxu0 0.0
    %5174 = vmatpush1.msra.mxu0 %v534
    %5175 = vmatprep.mubr.f32.mxu0 %v4569
    %5176 = vmatmul.mubr.f32.gmra.mrb[0].mxu0 %v4568
    %v5177 = vpop.f32.mrb[0].mxu0
    %v5178 = vadd.f32 %v5103, %v5177
    %v5179 = vpop.f32.mrb[0].mxu0
    %5180 = vmatprep.mubr.f32.mxu0 %v4585
    %5181 = vmatmul.mubr.f32.gmra.mrb[0].mxu0 %v4584
    %v5182 = vpop.f32.mrb[0].mxu0
    %v5183 = vadd.f32 %v5108, %v5182
    %v5184 = vpop.f32.mrb[0].mxu0
    %5185 = vdwg.mxu0
    %v5186 = vrot.slane %v5178, 4
    %v5187 = vadd.f32 %v5178, %v5186
    %v5188 = vrot.slane %v5187, 2
    %v5189 = vadd.f32 %v5187, %v5188
    %v5190 = vrot.slane %v5189, 1
    %v5191 = vadd.f32 %v5189, %v5190
    %v5192 = vrot.slane %v5183, 4
    %v5193 = vadd.f32 %v5183, %v5192
    %v5194 = vrot.slane %v5193, 2
    %v5195 = vadd.f32 %v5193, %v5194
    %v5196 = vrot.slane %v5195, 1
    %v5197 = vadd.f32 %v5195, %v5196
    %v5198 = vadd.f32 %v3390, %v5191
    %v5199 = vadd.f32 %v3391, %v5197
    %v5200 = vmul.f32 %v5198, 0.00390625
    %v5201 = vmul.f32 %v5199, 0.00390625
    %v5202 = vpack.c.bf16 %v5200, %v5200
    %v5203 = vpack.c.bf16 %v5201, %v5201
    %v5204 = vld [vmem:[%s6] sm:$0xf]
    %v5205 = vld [vmem:[%s6 + $0x4] sm:$0xf]
    %v5206 = vld [vmem:[%s6 + $0x8] sm:$0xf]
    %v5207 = vld [vmem:[%s6 + $0xc] sm:$0xf]
    %v5208 = vld [vmem:[%s6 + $0x10] sm:$0xf]
    %v5209 = vld [vmem:[%s6 + $0x14] sm:$0xf]
    %v5210 = vld [vmem:[%s6 + $0x18] sm:$0xf]
    %v5211 = vld [vmem:[%s6 + $0x1c] sm:$0xf]
    %v5212 = vld [vmem:[%s6 + $0x20] sm:$0xf]
    %v5213 = vld [vmem:[%s6 + $0x24] sm:$0xf]
    %v5214 = vld [vmem:[%s6 + $0x28] sm:$0xf]
    %v5215 = vld [vmem:[%s6 + $0x2c] sm:$0xf]
    %v5216 = vld [vmem:[%s6 + $0x30] sm:$0xf]
    %v5217 = vld [vmem:[%s6 + $0x34] sm:$0xf]
    %v5218 = vld [vmem:[%s6 + $0x38] sm:$0xf]
    %v5219 = vld [vmem:[%s6 + $0x3c] sm:$0xf]
    %v5220 = vld [vmem:[%s7] sm:$0x1]
    %v5222 = vlaneseq
    %v5223 = vshrl.u32 %v5222, 7
    %v5224 = vsub.s32 0, %v5223
    %v5225 = vrot.slane %v5220, %v5224
    %v5229 = vunpack.c.l.b16 %v5202
    %v5230 = vunpack.c.l.b16 %v5203
    %vm5231 = vcmask 1041409
    %v5232 = vsel %vm5231, %v5230, %v5229
    %v5233 = vpack.c.b16 %v5232, %v5232
    %v5251 = vunpack.c.l.b16 %v5204
    %v5252 = vunpack.c.l.b16 %v5205
    %v5253 = vunpack.c.l.b16 %v5206
    %v5254 = vunpack.c.l.b16 %v5207
    %v5255 = vunpack.c.l.b16 %v5208
    %v5256 = vunpack.c.l.b16 %v5209
    %v5257 = vunpack.c.l.b16 %v5210
    %v5258 = vunpack.c.l.b16 %v5211
    %v5259 = vunpack.c.l.b16 %v5212
    %v5260 = vunpack.c.l.b16 %v5213
    %v5261 = vunpack.c.l.b16 %v5214
    %v5262 = vunpack.c.l.b16 %v5215
    %v5263 = vunpack.c.l.b16 %v5216
    %v5264 = vunpack.c.l.b16 %v5217
    %v5265 = vunpack.c.l.b16 %v5218
    %v5266 = vunpack.c.l.b16 %v5219
    %v5267 = vpack.c.b16 %v5252, %v5251
    %v5268 = vpack.c.b16 %v5254, %v5253
    %v5269 = vpack.c.b16 %v5256, %v5255
    %v5270 = vpack.c.b16 %v5258, %v5257
    %v5271 = vpack.c.b16 %v5260, %v5259
    %v5272 = vpack.c.b16 %v5262, %v5261
    %v5273 = vpack.c.b16 %v5264, %v5263
    %v5274 = vpack.c.b16 %v5266, %v5265
    %5283 = vmatprep.subr.bf16.mxu0 0
    %5284 = vmatpush1.bf16.msra.mxu0 %v5267
    %5285 = vmatprep.subr.bf16.mxu0 0
    %5286 = vmatpush1.bf16.msra.mxu0 %v5268
    %5287 = vmatprep.subr.bf16.mxu0 0
    %5288 = vmatpush1.bf16.msra.mxu0 %v5269
    %5289 = vmatprep.subr.bf16.mxu0 0
    %5290 = vmatpush1.bf16.msra.mxu0 %v5270
    %5291 = vmatprep.subr.bf16.mxu0 0
    %5292 = vmatpush1.bf16.msra.mxu0 %v5271
    %5293 = vmatprep.subr.bf16.mxu0 0
    %5294 = vmatpush1.bf16.msra.mxu0 %v5272
    %5295 = vmatprep.subr.bf16.mxu0 0
    %5296 = vmatpush1.bf16.msra.mxu0 %v5273
    %5297 = vmatprep.subr.bf16.mxu0 0
    %5298 = vmatpush1.bf16.msra.mxu0 %v5274
    %5299 = vmatprep.subr.bf16.mxu0 0
    %5300 = vmatpush1.bf16.msra.mxu0 0
    %5301 = vmatprep.subr.bf16.mxu0 0
    %5302 = vmatpush1.bf16.msra.mxu0 0
    %5303 = vmatprep.subr.bf16.mxu0 0
    %5304 = vmatpush1.bf16.msra.mxu0 0
    %5305 = vmatprep.subr.bf16.mxu0 0
    %5306 = vmatpush1.bf16.msra.mxu0 0
    %5307 = vmatprep.subr.bf16.mxu0 0
    %5308 = vmatpush1.bf16.msra.mxu0 0
    %5309 = vmatprep.subr.bf16.mxu0 0
    %5310 = vmatpush1.bf16.msra.mxu0 0
    %5311 = vmatprep.subr.bf16.mxu0 0
    %5312 = vmatpush1.bf16.msra.mxu0 0
    %5313 = vmatprep.subr.bf16.mxu0 0
    %5314 = vmatpush1.bf16.msra.mxu0 0
    %5315 = vmatprep.mubr.bf16.mxu0 0
    %5316 = vmatmul.mubr.bf16.gmra.mrb[0].mxu0 %v5233
    %v5317 = vpop.f32.mrb[0].mxu0
    %v5318 = vadd.f32 %v5225, %v5317
    %v5319 = vpop.f32.mrb[0].mxu0
    %v5320 = vpop.f32.mrb[0].mxu0
    %v5321 = vpop.f32.mrb[0].mxu0
    %5322 = vdwg.mxu0
    %5323 = vst [vmem:[%s8] sm:$0x3] %v5318
    // Predicated region
    $region50: #{cifar_classifier_forward.1} parent=1 // pred_check
      _
    $region51: #{cifar_classifier_forward.1} parent=1 // pred_check_branch
      %5325 = sbr.rel (0) target = $region53
    $region52: #{cifar_classifier_forward.1} parent=1 // pred_region
      _
    $region53: #{cifar_classifier_forward.1} parent=1 // pred_fallthru
      _
    // Predicated region
    $region54: #{cifar_classifier_forward.1} parent=1 // pred_check
      _
    $region55: #{cifar_classifier_forward.1} parent=1 // pred_check_branch
      %5327 = sbr.rel (0) target = $region57
    $region56: #{cifar_classifier_forward.1} parent=1 // pred_region
      _
    $region57: #{cifar_classifier_forward.1} parent=1 // pred_fallthru
      _
    %5328 = vsyncpa [#allocation3], 1
    %5329 = vsyncpa [#allocation5], 1
    %5330 = vsyncpa [#allocation8], 1

</llo_original>
